<compile_context>
chip_gen: v5e
topology: v5e:2x2
jax: 0.10.0
libtpu: 0.0.40
codegen_flags: <defaults>
</compile_context>

<pallas_src>
import functools

import jax
import jax.numpy as jnp
from jax import lax
from jax.experimental import pallas as pl
from jax.experimental.pallas import tpu as pltpu

EPS = 1e-5          # nn.BatchNorm2d default eps
LANES = 128         # TPU lane width


# --------------------------------------------------------------------------- #
# Pallas kernels
# --------------------------------------------------------------------------- #

def _write_stats(st_ref, y_f32):
    """Per-channel partial [sum; sum-of-squares] of this block's rows (f32)."""
    s = jnp.sum(y_f32, axis=0, keepdims=True)              # (1, C)
    ss = jnp.sum(y_f32 * y_f32, axis=0, keepdims=True)     # (1, C)
    st_ref[...] = jnp.concatenate([s, ss], axis=0).reshape(st_ref.shape)


def conv1_kernel(x_ref, w_ref, y_ref, st_ref):
    """Stage 1 (per image): NCHW read, in-kernel transpose, 1x1 conv + BN1 stats."""
    x_hwc = jnp.transpose(x_ref[0], (1, 0))                # (HW, Cin) f32, XLU
    y = jnp.dot(x_hwc.astype(jnp.bfloat16), w_ref[...],
                preferred_element_type=jnp.float32)        # (HW, Cmid) f32
    y_ref[0] = y.astype(jnp.bfloat16)
    _write_stats(st_ref, y)


def conv2_kernel(y1_ref, sc_ref, sh_ref, w_ref, y2_ref, st_ref,
                 hpad_ref, col_ref, *, H, W):
    """Stage 2 (per image): BN1+ReLU folded in, 3x3/pad=1 conv as ONE matmul
    over an in-VMEM bf16 im2col slab (K = 9*C, MXU accumulates), + BN2 stats."""
    C = y1_ref.shape[2]
    HW = H * W

    # BN1 + ReLU in f32 on the bf16-stored y1.
    h = jnp.maximum(y1_ref[0].astype(jnp.float32) * sc_ref[...] + sh_ref[...],
                    0.0)                                    # (HW, C) f32

    # Spatially padded copy: zero only the 1-wide halo each step, interior is
    # fully overwritten (no full-buffer zero fill on the vst slot).
    zrow = jnp.zeros((1, W + 2, C), jnp.float32)
    zcol = jnp.zeros((H + 2, 1, C), jnp.float32)
    hpad_ref[0:1, :, :] = zrow
    hpad_ref[H + 1:H + 2, :, :] = zrow
    hpad_ref[:, 0:1, :] = zcol
    hpad_ref[:, W + 1:W + 2, :] = zcol
    hpad_ref[1:H + 1, 1:W + 1, :] = h.reshape(H, W, C)

    # im2col slab: 9 shifted taps concatenated along K (lane-aligned bf16 writes,
    # cast fused into the copy).
    for t in range(9):
        dy, dx = divmod(t, 3)
        patch = hpad_ref[dy:dy + H, dx:dx + W, :]           # (H, W, C) f32
        col_ref[:, t * C:(t + 1) * C] = (
            patch.reshape(HW, C).astype(jnp.bfloat16))

    # One MXU matmul with K = 9*C; accumulation stays inside the MXU.
    y = jnp.dot(col_ref[...], w_ref[...], preferred_element_type=jnp.float32)
    y2_ref[0] = y.astype(jnp.bfloat16)
    _write_stats(st_ref, y)


def conv3_kernel(y2_ref, sc_ref, sh_ref, w_ref, y3_ref, st_ref):
    """Stage 3 (M-tiled): BN2+ReLU folded in, 1x1 expansion conv + BN3 stats."""
    h = jnp.maximum(y2_ref[...].astype(jnp.float32) * sc_ref[...] + sh_ref[...],
                    0.0)
    y = jnp.dot(h.astype(jnp.bfloat16), w_ref[...],
                preferred_element_type=jnp.float32)
    y3_ref[...] = y.astype(jnp.bfloat16)
    _write_stats(st_ref, y)


def finish_kernel(y3_ref, sc_ref, sh_ref, xres_ref, o_ref):
    """Stage 4 (per image): out = relu(BN3(y3) + identity), written directly NCHW."""
    z = y3_ref[0].astype(jnp.float32) * sc_ref[...] + sh_ref[...]   # (HW, C) f32
    z_chw = jnp.transpose(z, (1, 0))                                # (C, HW), XLU
    o_ref[0] = jnp.maximum(z_chw + xres_ref[0], 0.0)


# --------------------------------------------------------------------------- #
# Compiler params / pallas_call wrappers
# --------------------------------------------------------------------------- #

@functools.lru_cache(maxsize=None)
def _vmem_limit_bytes():
    cap = 64 * 1024 * 1024
    try:
        cap = int(getattr(pltpu.get_tpu_info(), "vmem_capacity_bytes", cap) or cap)
    except Exception:
        pass
    # ~3/4 of physical VMEM: ~48 MiB on v7x (64 MiB), capped at 96 MiB on v5e/v6e.
    return min((cap * 3) // 4, 96 * 1024 * 1024)


def _cparams():
    return pltpu.CompilerParams(
        dimension_semantics=("parallel",),
        vmem_limit_bytes=_vmem_limit_bytes())


def _conv1_call(x_p, w1):
    n, cin_p, hw = x_p.shape
    cmid_p = w1.shape[1]
    return pl.pallas_call(
        conv1_kernel,
        out_shape=(jax.ShapeDtypeStruct((n, hw, cmid_p), jnp.bfloat16),
                   jax.ShapeDtypeStruct((n, 2, cmid_p), jnp.float32)),
        grid=(n,),
        in_specs=[pl.BlockSpec((1, cin_p, hw), lambda i: (i, 0, 0)),
                  pl.BlockSpec((cin_p, cmid_p), lambda i: (0, 0))],
        out_specs=(pl.BlockSpec((1, hw, cmid_p), lambda i: (i, 0, 0)),
                   pl.BlockSpec((1, 2, cmid_p), lambda i: (i, 0, 0))),
        compiler_params=_cparams(),
    )(x_p, w1)


def _conv2_call(y1, sc1, sh1, w2flat, h, w):
    n, hw, c = y1.shape
    cout = w2flat.shape[1]
    return pl.pallas_call(
        functools.partial(conv2_kernel, H=h, W=w),
        out_shape=(jax.ShapeDtypeStruct((n, hw, cout), jnp.bfloat16),
                   jax.ShapeDtypeStruct((n, 2, cout), jnp.float32)),
        grid=(n,),
        in_specs=[pl.BlockSpec((1, hw, c), lambda i: (i, 0, 0)),
                  pl.BlockSpec((1, c), lambda i: (0, 0)),
                  pl.BlockSpec((1, c), lambda i: (0, 0)),
                  pl.BlockSpec((9 * c, cout), lambda i: (0, 0))],
        out_specs=(pl.BlockSpec((1, hw, cout), lambda i: (i, 0, 0)),
                   pl.BlockSpec((1, 2, cout), lambda i: (i, 0, 0))),
        scratch_shapes=[pltpu.VMEM((h + 2, w + 2, c), jnp.float32),
                        pltpu.VMEM((hw, 9 * c), jnp.bfloat16)],
        compiler_params=_cparams(),
    )(y1, sc1, sh1, w2flat)


def _conv3_call(y2_flat, sc2, sh2, w3, tm):
    m, cmid_p = y2_flat.shape
    cexp_p = w3.shape[1]
    nt = m // tm
    return pl.pallas_call(
        conv3_kernel,
        out_shape=(jax.ShapeDtypeStruct((m, cexp_p), jnp.bfloat16),
                   jax.ShapeDtypeStruct((nt, 2, cexp_p), jnp.float32)),
        grid=(nt,),
        in_specs=[pl.BlockSpec((tm, cmid_p), lambda i: (i, 0)),
                  pl.BlockSpec((1, cmid_p), lambda i: (0, 0)),
                  pl.BlockSpec((1, cmid_p), lambda i: (0, 0)),
                  pl.BlockSpec((cmid_p, cexp_p), lambda i: (0, 0))],
        out_specs=(pl.BlockSpec((tm, cexp_p), lambda i: (i, 0)),
                   pl.BlockSpec((1, 2, cexp_p), lambda i: (i, 0, 0))),
        compiler_params=_cparams(),
    )(y2_flat, sc2, sh2, w3)


def _finish_call(y3_img, sc3, sh3, x_p):
    n, hw, cexp_p = y3_img.shape
    return pl.pallas_call(
        finish_kernel,
        out_shape=jax.ShapeDtypeStruct((n, cexp_p, hw), jnp.float32),
        grid=(n,),
        in_specs=[pl.BlockSpec((1, hw, cexp_p), lambda i: (i, 0, 0)),
                  pl.BlockSpec((1, cexp_p), lambda i: (0, 0)),
                  pl.BlockSpec((1, cexp_p), lambda i: (0, 0)),
                  pl.BlockSpec((1, cexp_p, hw), lambda i: (i, 0, 0))],
        out_specs=pl.BlockSpec((1, cexp_p, hw), lambda i: (i, 0, 0)),
        compiler_params=_cparams(),
    )(y3_img, sc3, sh3, x_p)


# --------------------------------------------------------------------------- #
# JAX glue: layout prep, BN scale/shift fold
# --------------------------------------------------------------------------- #

def _round_up(x, mult):
    return (x + mult - 1) // mult * mult


def _pick_m_tile(m):
    # Largest lane/sublane-friendly divisor <= 1024 that still yields >= 2 grid
    # steps (pipelining); otherwise fall back to a single block.
    for t in (1024, 512, 256, 128, 64, 32, 16, 8):
        if m % t == 0 and m // t >= 2:
            return t
    return m


def _pad_last(a, target):
    pad = [(0, 0)] * a.ndim
    pad[-1] = (0, target - a.shape[-1])
    return jnp.pad(a, pad)


def _scale_shift(partial_stats, gamma_p, beta_p, m, c_real):
    """Reduce per-block partial stats; fold BN(batch stats)+affine into y*scale+shift.
    Padded channels are explicitly masked to scale = shift = 0."""
    tot = jnp.sum(partial_stats, axis=0)                # (2, C)
    mean = tot[0] / m
    var = jnp.maximum(tot[1] / m - mean * mean, 0.0)    # biased batch variance
    inv = lax.rsqrt(var + EPS)
    valid = jnp.arange(gamma_p.shape[0]) < c_real
    scale = jnp.where(valid, gamma_p * inv, 0.0)
    shift = jnp.where(valid, beta_p - mean * scale, 0.0)
    return scale[None, :].astype(jnp.float32), shift[None, :].astype(jnp.float32)


def resnet_block50_forward(x_nchw, params, stride=1):
    """Forward pass of ResNetBlock50 (training-mode BN, identity_downsample=None)."""
    assert stride == 1, "Pallas path covers identity_downsample=None (stride must be 1)"
    n, cin, h, w = x_nchw.shape
    cmid = params["w1"].shape[0]
    cexp = params["w3"].shape[0]
    assert cin == cexp, "identity residual requires in_channels == 4*out_channels"

    cin_p = _round_up(cin, LANES)
    cmid_p = _round_up(cmid, LANES)
    cexp_p = cin_p
    hw = h * w
    m = n * hw
    tm = _pick_m_tile(m)

    # Pad channels of the NCHW input once (no-op when cin is already a multiple
    # of 128 as in real ResNet-50 blocks); (N, C, H, W) -> (N, C, HW) is a view.
    # Used by stage 1 (matmul operand) and stage 4 (f32 residual).
    x_p = jnp.pad(x_nchw.astype(jnp.float32),
                  ((0, 0), (0, cin_p - cin), (0, 0), (0, 0))).reshape(n, cin_p, hw)

    # Weights: matmul layout, zero-padded channels, bf16 for the MXU.
    w1 = jnp.transpose(params["w1"][:, :, 0, 0], (1, 0))                   # (cin, cmid)
    w1 = jnp.pad(w1, ((0, cin_p - cin), (0, cmid_p - cmid))).astype(jnp.bfloat16)
    w2 = jnp.transpose(params["w2"], (2, 3, 1, 0)).reshape(9, cmid, cmid)  # (9, ci, co)
    w2 = jnp.pad(w2, ((0, 0), (0, cmid_p - cmid), (0, cmid_p - cmid)))
    w2 = w2.reshape(9 * cmid_p, cmid_p).astype(jnp.bfloat16)               # K = 9*Cmid
    w3 = jnp.transpose(params["w3"][:, :, 0, 0], (1, 0))                   # (cmid, cexp)
    w3 = jnp.pad(w3, ((0, cmid_p - cmid), (0, cexp_p - cexp))).astype(jnp.bfloat16)

    g1, b1 = _pad_last(params["g1"], cmid_p), _pad_last(params["b1"], cmid_p)
    g2, b2 = _pad_last(params["g2"], cmid_p), _pad_last(params["b2"], cmid_p)
    g3, b3 = _pad_last(params["g3"], cexp_p), _pad_last(params["b3"], cexp_p)

    # stage 1: 1x1 conv (NCHW read, layout change folded in) + BN1 partial stats
    y1, st1 = _conv1_call(x_p, w1)                                  # (n, hw, cmid_p) bf16
    sc1, sh1 = _scale_shift(st1, g1, b1, m, cmid)

    # stage 2: BN1+ReLU folded, 3x3 conv as one im2col MXU matmul + BN2 stats
    y2, st2 = _conv2_call(y1, sc1, sh1, w2, h, w)                   # (n, hw, cmid_p) bf16
    sc2, sh2 = _scale_shift(st2, g2, b2, m, cmid)

    # stage 3: BN2+ReLU folded, 1x1 expansion conv + BN3 stats
    y3, st3 = _conv3_call(y2.reshape(m, cmid_p), sc2, sh2, w3, tm)  # (m, cexp_p) bf16
    sc3, sh3 = _scale_shift(st3, g3, b3, m, cexp)

    # stage 4: BN3 + residual add + ReLU, written directly as NCHW
    out = _finish_call(y3.reshape(n, hw, cexp_p), sc3, sh3, x_p)    # (n, cexp_p, hw) f32

    out = out.reshape(n, cexp_p, h, w)[:, :cexp]
    return out


# --------------------------------------------------------------------------- #
# Pure-JAX reference (bf16 conv operands, f32 accumulation/BN, like the kernel)
# --------------------------------------------------------------------------- #

def reference_forward(x, p, stride=1):
    def conv(x, w, s, pad):
        return lax.conv_general_dilated(
            x.astype(jnp.bfloat16), w.astype(jnp.bfloat16), (s, s),
            [(pad, pad), (pad, pad)],
            dimension_numbers=("NCHW", "OIHW", "NCHW"),
            preferred_element_type=jnp.float32)

    def bn(y, g, b):
        mean = jnp.mean(y, axis=(0, 2, 3), keepdims=True)
        var = jnp.mean((y - mean) ** 2, axis=(0, 2, 3), keepdims=True)
        return ((y - mean) * lax.rsqrt(var + EPS) * g.reshape(1, -1, 1, 1)
                + b.reshape(1, -1, 1, 1))

    x = x.astype(jnp.float32)
    h = jax.nn.relu(bn(conv(x, p["w1"], 1, 0), p["g1"], p["b1"]))
    h = jax.nn.relu(bn(conv(h, p["w2"], stride, 1), p["g2"], p["b2"]))
    h = bn(conv(h, p["w3"], 1, 0), p["g3"], p["b3"])
    return jax.nn.relu(h + x)


# --------------------------------------------------------------------------- #
# main
# --------------------------------------------------------------------------- #

if __name__ == "__main__":
    key = jax.random.PRNGKey(0)
    N, H, W = 2, 16, 16
    out_channels = 4
    expansion = 4
    in_channels = out_channels * expansion    # 16 -> identity residual is valid
    stride = 1                                # identity_downsample=None case

    ks = jax.random.split(key, 10)
    params = {
        "w1": 0.1 * jax.random.normal(ks[0], (out_channels, in_channels, 1, 1), jnp.float32),
        "w2": 0.1 * jax.random.normal(ks[1], (out_channels, out_channels, 3, 3), jnp.float32),
        "w3": 0.1 * jax.random.normal(ks[2], (out_channels * expansion, out_channels, 1, 1), jnp.float32),
        "g1": 1.0 + 0.1 * jax.random.normal(ks[3], (out_channels,), jnp.float32),
        "b1": 0.05 * jax.random.normal(ks[4], (out_channels,), jnp.float32),
        "g2": 1.0 + 0.1 * jax.random.normal(ks[5], (out_channels,), jnp.float32),
        "b2": 0.05 * jax.random.normal(ks[6], (out_channels,), jnp.float32),
        "g3": 1.0 + 0.1 * jax.random.normal(ks[7], (out_channels * expansion,), jnp.float32),
        "b3": 0.05 * jax.random.normal(ks[8], (out_channels * expansion,), jnp.float32),
    }
    x = jax.random.normal(ks[9], (N, in_channels, H, W), jnp.float32)

    fwd = jax.jit(resnet_block50_forward, static_argnums=(2,))
    out = jax.block_until_ready(fwd(x, params, stride))
    ref = jax.block_until_ready(reference_forward(x, params, stride))

    assert out.shape == (N, in_channels, H, W), out.shape
    err = float(jnp.max(jnp.abs(out - ref)))
    # Both paths use bf16 MXU operands; additionally the kernel stores the
    # pre-BN intermediates (y1, y2, y3) in bf16 between stages (perf), so the
    # comparison against the f32-intermediate reference uses a relaxed tolerance.
    assert jnp.allclose(out, ref, atol=5e-2, rtol=5e-2), f"max abs err {err}"
    print("KERNEL_OK")
</pallas_src>

<mosaic_0001>
module attributes {stable_mosaic.version = 11 : i64} {
  func.func @conv1_kernel(%arg0: i32, %arg1: memref<1x128x256xf32, #tpu.memory_space<vmem>>, %arg2: memref<128x128xbf16, #tpu.memory_space<vmem>>, %arg3: memref<1x256x128xbf16, #tpu.memory_space<vmem>>, %arg4: memref<1x2x128xf32, #tpu.memory_space<vmem>>) attributes {dimension_semantics = [#tpu.dimension_semantics<parallel>], iteration_bounds = array<i64: 2>, scalar_prefetch = 0 : i64, scratch_operands = 0 : i64, tpu.core_type = #tpu.core_type<tc>, window_params = [{transform_indices = @transform_0, window_bounds = array<i64: 1, 128, 256>}, {pipeline_mode = #tpu.pipeline_mode<synchronous>, transform_indices = @transform_1, window_bounds = array<i64: 128, 128>}, {transform_indices = @transform_2, window_bounds = array<i64: 1, 256, 128>}, {transform_indices = @transform_3, window_bounds = array<i64: 1, 2, 128>}]} {
    %c0 = arith.constant 0 : index
    %c0_0 = arith.constant 0 : index
    %c0_1 = arith.constant 0 : index
    %0 = vector.load %arg1[%c0, %c0_0, %c0_1] : memref<1x128x256xf32, #tpu.memory_space<vmem>>, vector<1x128x256xf32>
    %1 = vector.shape_cast %0 : vector<1x128x256xf32> to vector<128x256xf32>
    %2 = tpu.transpose %1, [1, 0] : vector<128x256xf32> -> vector<256x128xf32>
    %3 = arith.truncf %2 : vector<256x128xf32> to vector<256x128xbf16>
    %c0_2 = arith.constant 0 : index
    %c0_3 = arith.constant 0 : index
    %4 = vector.load %arg2[%c0_2, %c0_3] : memref<128x128xbf16, #tpu.memory_space<vmem>>, vector<128x128xbf16>
    %cst = arith.constant dense<0.000000e+00> : vector<256x128xf32>
    %5 = tpu.matmul %3, %4, %cst {dimension_numbers = #tpu.dot_dimension_numbers<[1], [0], [0], [1], [0, 0, 1, 1], [], []>} : vector<256x128xbf16>, vector<128x128xbf16>, vector<256x128xf32> -> vector<256x128xf32>
    %6 = arith.truncf %5 : vector<256x128xf32> to vector<256x128xbf16>
    %c0_4 = arith.constant 0 : index
    %c0_5 = arith.constant 0 : index
    %c0_6 = arith.constant 0 : index
    %7 = vector.load %arg3[%c0_4, %c0_5, %c0_6] : memref<1x256x128xbf16, #tpu.memory_space<vmem>>, vector<1x256x128xbf16>
    %8 = vector.shape_cast %7 : vector<1x256x128xbf16> to vector<256x128xbf16>
    %9 = vector.shape_cast %6 : vector<256x128xbf16> to vector<1x256x128xbf16>
    tpu.vector_store %arg3[%c0_4, %c0_5, %c0_6], %9 {strides = array<i32>} : memref<1x256x128xbf16, #tpu.memory_space<vmem>>, vector<1x256x128xbf16>,
    %cst_7 = arith.constant dense<0.000000e+00> : vector<128xf32>
    %10 = vector.multi_reduction <add>, %5, %cst_7 [0] : vector<256x128xf32> to vector<128xf32>
    %11 = vector.shape_cast %10 : vector<128xf32> to vector<1x128xf32>
    %12 = arith.mulf %5, %5 : vector<256x128xf32>
    %cst_8 = arith.constant dense<0.000000e+00> : vector<128xf32>
    %13 = vector.multi_reduction <add>, %12, %cst_8 [0] : vector<256x128xf32> to vector<128xf32>
    %14 = vector.shape_cast %13 : vector<128xf32> to vector<1x128xf32>
    %15 = tpu.concatenate %11, %14 in 0 : vector<1x128xf32>, vector<1x128xf32> -> vector<2x128xf32>
    %16 = vector.shape_cast %15 : vector<2x128xf32> to vector<1x2x128xf32>
    %c0_9 = arith.constant 0 : index
    %c0_10 = arith.constant 0 : index
    %c0_11 = arith.constant 0 : index
    %17 = vector.load %arg4[%c0_9, %c0_10, %c0_11] : memref<1x2x128xf32, #tpu.memory_space<vmem>>, vector<1x2x128xf32>
    tpu.vector_store %arg4[%c0_9, %c0_10, %c0_11], %16 {strides = array<i32>} : memref<1x2x128xf32, #tpu.memory_space<vmem>>, vector<1x2x128xf32>,
    return
  }
  func.func @transform_0(%arg0: i32) -> (i32, i32, i32) {
    %c0_i32 = arith.constant 0 : i32
    %c0_i32_0 = arith.constant 0 : i32
    %c0_i32_1 = arith.constant 0 : i32
    return %arg0, %c0_i32, %c0_i32_0 : i32, i32, i32
  }
  func.func @transform_1(%arg0: i32) -> (i32, i32) {
    %c0_i32 = arith.constant 0 : i32
    %c0_i32_0 = arith.constant 0 : i32
    %c0_i32_1 = arith.constant 0 : i32
    return %c0_i32, %c0_i32_0 : i32, i32
  }
  func.func @transform_2(%arg0: i32) -> (i32, i32, i32) {
    %c0_i32 = arith.constant 0 : i32
    %c0_i32_0 = arith.constant 0 : i32
    %c0_i32_1 = arith.constant 0 : i32
    return %arg0, %c0_i32, %c0_i32_0 : i32, i32, i32
  }
  func.func @transform_3(%arg0: i32) -> (i32, i32, i32) {
    %c0_i32 = arith.constant 0 : i32
    %c0_i32_0 = arith.constant 0 : i32
    %c0_i32_1 = arith.constant 0 : i32
    return %arg0, %c0_i32, %c0_i32_0 : i32, i32, i32
  }
}

module attributes {stable_mosaic.version = 11 : i64} {
  func.func @conv2_kernel(%arg0: i32, %arg1: memref<1x256x128xbf16, #tpu.memory_space<vmem>>, %arg2: memref<1x128xf32, #tpu.memory_space<vmem>>, %arg3: memref<1x128xf32, #tpu.memory_space<vmem>>, %arg4: memref<1152x128xbf16, #tpu.memory_space<vmem>>, %arg5: memref<1x256x128xbf16, #tpu.memory_space<vmem>>, %arg6: memref<1x2x128xf32, #tpu.memory_space<vmem>>, %arg7: memref<18x18x128xf32, #tpu.memory_space<vmem>>, %arg8: memref<256x1152xbf16, #tpu.memory_space<vmem>>) attributes {dimension_semantics = [#tpu.dimension_semantics<parallel>], iteration_bounds = array<i64: 2>, scalar_prefetch = 0 : i64, scratch_operands = 2 : i64, tpu.core_type = #tpu.core_type<tc>, window_params = [{transform_indices = @transform_0, window_bounds = array<i64: 1, 256, 128>}, {pipeline_mode = #tpu.pipeline_mode<synchronous>, transform_indices = @transform_1, window_bounds = array<i64: 1, 128>}, {pipeline_mode = #tpu.pipeline_mode<synchronous>, transform_indices = @transform_2, window_bounds = array<i64: 1, 128>}, {pipeline_mode = #tpu.pipeline_mode<synchronous>, transform_indices = @transform_3, window_bounds = array<i64: 1152, 128>}, {transform_indices = @transform_4, window_bounds = array<i64: 1, 256, 128>}, {transform_indices = @transform_5, window_bounds = array<i64: 1, 2, 128>}]} {
    %c0 = arith.constant 0 : index
    %c0_0 = arith.constant 0 : index
    %c0_1 = arith.constant 0 : index
    %0 = vector.load %arg1[%c0, %c0_0, %c0_1] : memref<1x256x128xbf16, #tpu.memory_space<vmem>>, vector<1x256x128xbf16>
    %1 = vector.shape_cast %0 : vector<1x256x128xbf16> to vector<256x128xbf16>
    %2 = arith.extf %1 : vector<256x128xbf16> to vector<256x128xf32>
    %c0_2 = arith.constant 0 : index
    %c0_3 = arith.constant 0 : index
    %3 = vector.load %arg2[%c0_2, %c0_3] : memref<1x128xf32, #tpu.memory_space<vmem>>, vector<1x128xf32>
    %4 = vector.broadcast %3 : vector<1x128xf32> to vector<256x128xf32>
    %5 = arith.mulf %2, %4 : vector<256x128xf32>
    %c0_4 = arith.constant 0 : index
    %c0_5 = arith.constant 0 : index
    %6 = vector.load %arg3[%c0_4, %c0_5] : memref<1x128xf32, #tpu.memory_space<vmem>>, vector<1x128xf32>
    %7 = vector.broadcast %6 : vector<1x128xf32> to vector<256x128xf32>
    %8 = arith.addf %5, %7 : vector<256x128xf32>
    %cst = arith.constant 0.000000e+00 : f32
    %9 = vector.broadcast %cst : f32 to vector<256x128xf32>
    %10 = arith.maximumf %8, %9 : vector<256x128xf32>
    %cst_6 = arith.constant 0.000000e+00 : f32
    %11 = vector.broadcast %cst_6 : f32 to vector<1x18x128xf32>
    %cst_7 = arith.constant 0.000000e+00 : f32
    %12 = vector.broadcast %cst_7 : f32 to vector<18x1x128xf32>
    %c0_8 = arith.constant 0 : index
    %c0_9 = arith.constant 0 : index
    %c0_10 = arith.constant 0 : index
    %13 = vector.load %arg7[%c0_8, %c0_9, %c0_10] : memref<18x18x128xf32, #tpu.memory_space<vmem>>, vector<1x18x128xf32>
    tpu.vector_store %arg7[%c0_8, %c0_9, %c0_10], %11 {strides = array<i32>} : memref<18x18x128xf32, #tpu.memory_space<vmem>>, vector<1x18x128xf32>,
    %c17 = arith.constant 17 : index
    %c0_11 = arith.constant 0 : index
    %c0_12 = arith.constant 0 : index
    %14 = vector.load %arg7[%c17, %c0_11, %c0_12] : memref<18x18x128xf32, #tpu.memory_space<vmem>>, vector<1x18x128xf32>
    tpu.vector_store %arg7[%c17, %c0_11, %c0_12], %11 {strides = array<i32>} : memref<18x18x128xf32, #tpu.memory_space<vmem>>, vector<1x18x128xf32>,
    %c0_13 = arith.constant 0 : index
    %c0_14 = arith.constant 0 : index
    %c0_15 = arith.constant 0 : index
    %15 = vector.load %arg7[%c0_13, %c0_14, %c0_15] : memref<18x18x128xf32, #tpu.memory_space<vmem>>, vector<18x1x128xf32>
    tpu.vector_store %arg7[%c0_13, %c0_14, %c0_15], %12 {strides = array<i32>} : memref<18x18x128xf32, #tpu.memory_space<vmem>>, vector<18x1x128xf32>,
    %c0_16 = arith.constant 0 : index
    %c17_17 = arith.constant 17 : index
    %c0_18 = arith.constant 0 : index
    %16 = vector.load %arg7[%c0_16, %c17_17, %c0_18] : memref<18x18x128xf32, #tpu.memory_space<vmem>>, vector<18x1x128xf32>
    tpu.vector_store %arg7[%c0_16, %c17_17, %c0_18], %12 {strides = array<i32>} : memref<18x18x128xf32, #tpu.memory_space<vmem>>, vector<18x1x128xf32>,
    %17 = vector.shape_cast %10 : vector<256x128xf32> to vector<16x16x128xf32>
    %c1 = arith.constant 1 : index
    %c1_19 = arith.constant 1 : index
    %c0_20 = arith.constant 0 : index
    %18 = vector.load %arg7[%c1, %c1_19, %c0_20] : memref<18x18x128xf32, #tpu.memory_space<vmem>>, vector<16x16x128xf32>
    tpu.vector_store %arg7[%c1, %c1_19, %c0_20], %17 {strides = array<i32>} : memref<18x18x128xf32, #tpu.memory_space<vmem>>, vector<16x16x128xf32>,
    %c0_21 = arith.constant 0 : index
    %c0_22 = arith.constant 0 : index
    %c0_23 = arith.constant 0 : index
    %19 = vector.load %arg7[%c0_21, %c0_22, %c0_23] : memref<18x18x128xf32, #tpu.memory_space<vmem>>, vector<16x16x128xf32>
    %20 = vector.shape_cast %19 : vector<16x16x128xf32> to vector<256x128xf32>
    %21 = arith.truncf %20 : vector<256x128xf32> to vector<256x128xbf16>
    %c0_24 = arith.constant 0 : index
    %c0_25 = arith.constant 0 : index
    %22 = vector.load %arg8[%c0_24, %c0_25] : memref<256x1152xbf16, #tpu.memory_space<vmem>>, vector<256x128xbf16>
    tpu.vector_store %arg8[%c0_24, %c0_25], %21 {strides = array<i32>} : memref<256x1152xbf16, #tpu.memory_space<vmem>>, vector<256x128xbf16>,
    %c0_26 = arith.constant 0 : index
    %c1_27 = arith.constant 1 : index
    %c0_28 = arith.constant 0 : index
    %23 = vector.load %arg7[%c0_26, %c1_27, %c0_28] : memref<18x18x128xf32, #tpu.memory_space<vmem>>, vector<16x16x128xf32>
    %24 = vector.shape_cast %23 : vector<16x16x128xf32> to vector<256x128xf32>
    %25 = arith.truncf %24 : vector<256x128xf32> to vector<256x128xbf16>
    %c0_29 = arith.constant 0 : index
    %c128 = arith.constant 128 : index
    %26 = vector.load %arg8[%c0_29, %c128] : memref<256x1152xbf16, #tpu.memory_space<vmem>>, vector<256x128xbf16>
    tpu.vector_store %arg8[%c0_29, %c128], %25 {strides = array<i32>} : memref<256x1152xbf16, #tpu.memory_space<vmem>>, vector<256x128xbf16>,
    %c0_30 = arith.constant 0 : index
    %c2 = arith.constant 2 : index
    %c0_31 = arith.constant 0 : index
    %27 = vector.load %arg7[%c0_30, %c2, %c0_31] : memref<18x18x128xf32, #tpu.memory_space<vmem>>, vector<16x16x128xf32>
    %28 = vector.shape_cast %27 : vector<16x16x128xf32> to vector<256x128xf32>
    %29 = arith.truncf %28 : vector<256x128xf32> to vector<256x128xbf16>
    %c0_32 = arith.constant 0 : index
    %c256 = arith.constant 256 : index
    %30 = vector.load %arg8[%c0_32, %c256] : memref<256x1152xbf16, #tpu.memory_space<vmem>>, vector<256x128xbf16>
    tpu.vector_store %arg8[%c0_32, %c256], %29 {strides = array<i32>} : memref<256x1152xbf16, #tpu.memory_space<vmem>>, vector<256x128xbf16>,
    %c1_33 = arith.constant 1 : index
    %c0_34 = arith.constant 0 : index
    %c0_35 = arith.constant 0 : index
    %31 = vector.load %arg7[%c1_33, %c0_34, %c0_35] : memref<18x18x128xf32, #tpu.memory_space<vmem>>, vector<16x16x128xf32>
    %32 = vector.shape_cast %31 : vector<16x16x128xf32> to vector<256x128xf32>
    %33 = arith.truncf %32 : vector<256x128xf32> to vector<256x128xbf16>
    %c0_36 = arith.constant 0 : index
    %c384 = arith.constant 384 : index
    %34 = vector.load %arg8[%c0_36, %c384] : memref<256x1152xbf16, #tpu.memory_space<vmem>>, vector<256x128xbf16>
    tpu.vector_store %arg8[%c0_36, %c384], %33 {strides = array<i32>} : memref<256x1152xbf16, #tpu.memory_space<vmem>>, vector<256x128xbf16>,
    %c1_37 = arith.constant 1 : index
    %c1_38 = arith.constant 1 : index
    %c0_39 = arith.constant 0 : index
    %35 = vector.load %arg7[%c1_37, %c1_38, %c0_39] : memref<18x18x128xf32, #tpu.memory_space<vmem>>, vector<16x16x128xf32>
    %36 = vector.shape_cast %35 : vector<16x16x128xf32> to vector<256x128xf32>
    %37 = arith.truncf %36 : vector<256x128xf32> to vector<256x128xbf16>
    %c0_40 = arith.constant 0 : index
    %c512 = arith.constant 512 : index
    %38 = vector.load %arg8[%c0_40, %c512] : memref<256x1152xbf16, #tpu.memory_space<vmem>>, vector<256x128xbf16>
    tpu.vector_store %arg8[%c0_40, %c512], %37 {strides = array<i32>} : memref<256x1152xbf16, #tpu.memory_space<vmem>>, vector<256x128xbf16>,
    %c1_41 = arith.constant 1 : index
    %c2_42 = arith.constant 2 : index
    %c0_43 = arith.constant 0 : index
    %39 = vector.load %arg7[%c1_41, %c2_42, %c0_43] : memref<18x18x128xf32, #tpu.memory_space<vmem>>, vector<16x16x128xf32>
    %40 = vector.shape_cast %39 : vector<16x16x128xf32> to vector<256x128xf32>
    %41 = arith.truncf %40 : vector<256x128xf32> to vector<256x128xbf16>
    %c0_44 = arith.constant 0 : index
    %c640 = arith.constant 640 : index
    %42 = vector.load %arg8[%c0_44, %c640] : memref<256x1152xbf16, #tpu.memory_space<vmem>>, vector<256x128xbf16>
    tpu.vector_store %arg8[%c0_44, %c640], %41 {strides = array<i32>} : memref<256x1152xbf16, #tpu.memory_space<vmem>>, vector<256x128xbf16>,
    %c2_45 = arith.constant 2 : index
    %c0_46 = arith.constant 0 : index
    %c0_47 = arith.constant 0 : index
    %43 = vector.load %arg7[%c2_45, %c0_46, %c0_47] : memref<18x18x128xf32, #tpu.memory_space<vmem>>, vector<16x16x128xf32>
    %44 = vector.shape_cast %43 : vector<16x16x128xf32> to vector<256x128xf32>
    %45 = arith.truncf %44 : vector<256x128xf32> to vector<256x128xbf16>
    %c0_48 = arith.constant 0 : index
    %c768 = arith.constant 768 : index
    %46 = vector.load %arg8[%c0_48, %c768] : memref<256x1152xbf16, #tpu.memory_space<vmem>>, vector<256x128xbf16>
    tpu.vector_store %arg8[%c0_48, %c768], %45 {strides = array<i32>} : memref<256x1152xbf16, #tpu.memory_space<vmem>>, vector<256x128xbf16>,
    %c2_49 = arith.constant 2 : index
    %c1_50 = arith.constant 1 : index
    %c0_51 = arith.constant 0 : index
    %47 = vector.load %arg7[%c2_49, %c1_50, %c0_51] : memref<18x18x128xf32, #tpu.memory_space<vmem>>, vector<16x16x128xf32>
    %48 = vector.shape_cast %47 : vector<16x16x128xf32> to vector<256x128xf32>
    %49 = arith.truncf %48 : vector<256x128xf32> to vector<256x128xbf16>
    %c0_52 = arith.constant 0 : index
    %c896 = arith.constant 896 : index
    %50 = vector.load %arg8[%c0_52, %c896] : memref<256x1152xbf16, #tpu.memory_space<vmem>>, vector<256x128xbf16>
    tpu.vector_store %arg8[%c0_52, %c896], %49 {strides = array<i32>} : memref<256x1152xbf16, #tpu.memory_space<vmem>>, vector<256x128xbf16>,
    %c2_53 = arith.constant 2 : index
    %c2_54 = arith.constant 2 : index
    %c0_55 = arith.constant 0 : index
    %51 = vector.load %arg7[%c2_53, %c2_54, %c0_55] : memref<18x18x128xf32, #tpu.memory_space<vmem>>, vector<16x16x128xf32>
    %52 = vector.shape_cast %51 : vector<16x16x128xf32> to vector<256x128xf32>
    %53 = arith.truncf %52 : vector<256x128xf32> to vector<256x128xbf16>
    %c0_56 = arith.constant 0 : index
    %c1024 = arith.constant 1024 : index
    %54 = vector.load %arg8[%c0_56, %c1024] : memref<256x1152xbf16, #tpu.memory_space<vmem>>, vector<256x128xbf16>
    tpu.vector_store %arg8[%c0_56, %c1024], %53 {strides = array<i32>} : memref<256x1152xbf16, #tpu.memory_space<vmem>>, vector<256x128xbf16>,
    %c0_57 = arith.constant 0 : index
    %c0_58 = arith.constant 0 : index
    %55 = vector.load %arg8[%c0_57, %c0_58] : memref<256x1152xbf16, #tpu.memory_space<vmem>>, vector<256x1152xbf16>
    %c0_59 = arith.constant 0 : index
    %c0_60 = arith.constant 0 : index
    %56 = vector.load %arg4[%c0_59, %c0_60] : memref<1152x128xbf16, #tpu.memory_space<vmem>>, vector<1152x128xbf16>
    %cst_61 = arith.constant dense<0.000000e+00> : vector<256x128xf32>
    %57 = tpu.matmul %55, %56, %cst_61 {dimension_numbers = #tpu.dot_dimension_numbers<[1], [0], [0], [1], [0, 0, 1, 1], [], []>} : vector<256x1152xbf16>, vector<1152x128xbf16>, vector<256x128xf32> -> vector<256x128xf32>
    %58 = arith.truncf %57 : vector<256x128xf32> to vector<256x128xbf16>
    %c0_62 = arith.constant 0 : index
    %c0_63 = arith.constant 0 : index
    %c0_64 = arith.constant 0 : index
    %59 = vector.load %arg5[%c0_62, %c0_63, %c0_64] : memref<1x256x128xbf16, #tpu.memory_space<vmem>>, vector<1x256x128xbf16>
    %60 = vector.shape_cast %59 : vector<1x256x128xbf16> to vector<256x128xbf16>
    %61 = vector.shape_cast %58 : vector<256x128xbf16> to vector<1x256x128xbf16>
    tpu.vector_store %arg5[%c0_62, %c0_63, %c0_64], %61 {strides = array<i32>} : memref<1x256x128xbf16, #tpu.memory_space<vmem>>, vector<1x256x128xbf16>,
    %cst_65 = arith.constant dense<0.000000e+00> : vector<128xf32>
    %62 = vector.multi_reduction <add>, %57, %cst_65 [0] : vector<256x128xf32> to vector<128xf32>
    %63 = vector.shape_cast %62 : vector<128xf32> to vector<1x128xf32>
    %64 = arith.mulf %57, %57 : vector<256x128xf32>
    %cst_66 = arith.constant dense<0.000000e+00> : vector<128xf32>
    %65 = vector.multi_reduction <add>, %64, %cst_66 [0] : vector<256x128xf32> to vector<128xf32>
    %66 = vector.shape_cast %65 : vector<128xf32> to vector<1x128xf32>
    %67 = tpu.concatenate %63, %66 in 0 : vector<1x128xf32>, vector<1x128xf32> -> vector<2x128xf32>
    %68 = vector.shape_cast %67 : vector<2x128xf32> to vector<1x2x128xf32>
    %c0_67 = arith.constant 0 : index
    %c0_68 = arith.constant 0 : index
    %c0_69 = arith.constant 0 : index
    %69 = vector.load %arg6[%c0_67, %c0_68, %c0_69] : memref<1x2x128xf32, #tpu.memory_space<vmem>>, vector<1x2x128xf32>
    tpu.vector_store %arg6[%c0_67, %c0_68, %c0_69], %68 {strides = array<i32>} : memref<1x2x128xf32, #tpu.memory_space<vmem>>, vector<1x2x128xf32>,
    return
  }
  func.func @transform_0(%arg0: i32) -> (i32, i32, i32) {
    %c0_i32 = arith.constant 0 : i32
    %c0_i32_0 = arith.constant 0 : i32
    %c0_i32_1 = arith.constant 0 : i32
    return %arg0, %c0_i32, %c0_i32_0 : i32, i32, i32
  }
  func.func @transform_1(%arg0: i32) -> (i32, i32) {
    %c0_i32 = arith.constant 0 : i32
    %c0_i32_0 = arith.constant 0 : i32
    %c0_i32_1 = arith.constant 0 : i32
    return %c0_i32, %c0_i32_0 : i32, i32
  }
  func.func @transform_2(%arg0: i32) -> (i32, i32) {
    %c0_i32 = arith.constant 0 : i32
    %c0_i32_0 = arith.constant 0 : i32
    %c0_i32_1 = arith.constant 0 : i32
    return %c0_i32, %c0_i32_0 : i32, i32
  }
  func.func @transform_3(%arg0: i32) -> (i32, i32) {
    %c0_i32 = arith.constant 0 : i32
    %c0_i32_0 = arith.constant 0 : i32
    %c0_i32_1 = arith.constant 0 : i32
    return %c0_i32, %c0_i32_0 : i32, i32
  }
  func.func @transform_4(%arg0: i32) -> (i32, i32, i32) {
    %c0_i32 = arith.constant 0 : i32
    %c0_i32_0 = arith.constant 0 : i32
    %c0_i32_1 = arith.constant 0 : i32
    return %arg0, %c0_i32, %c0_i32_0 : i32, i32, i32
  }
  func.func @transform_5(%arg0: i32) -> (i32, i32, i32) {
    %c0_i32 = arith.constant 0 : i32
    %c0_i32_0 = arith.constant 0 : i32
    %c0_i32_1 = arith.constant 0 : i32
    return %arg0, %c0_i32, %c0_i32_0 : i32, i32, i32
  }
}

module attributes {stable_mosaic.version = 11 : i64} {
  func.func @conv3_kernel(%arg0: i32, %arg1: memref<256x128xbf16, #tpu.memory_space<vmem>>, %arg2: memref<1x128xf32, #tpu.memory_space<vmem>>, %arg3: memref<1x128xf32, #tpu.memory_space<vmem>>, %arg4: memref<128x128xbf16, #tpu.memory_space<vmem>>, %arg5: memref<256x128xbf16, #tpu.memory_space<vmem>>, %arg6: memref<1x2x128xf32, #tpu.memory_space<vmem>>) attributes {dimension_semantics = [#tpu.dimension_semantics<parallel>], iteration_bounds = array<i64: 2>, scalar_prefetch = 0 : i64, scratch_operands = 0 : i64, tpu.core_type = #tpu.core_type<tc>, window_params = [{transform_indices = @transform_0, window_bounds = array<i64: 256, 128>}, {pipeline_mode = #tpu.pipeline_mode<synchronous>, transform_indices = @transform_1, window_bounds = array<i64: 1, 128>}, {pipeline_mode = #tpu.pipeline_mode<synchronous>, transform_indices = @transform_2, window_bounds = array<i64: 1, 128>}, {pipeline_mode = #tpu.pipeline_mode<synchronous>, transform_indices = @transform_3, window_bounds = array<i64: 128, 128>}, {transform_indices = @transform_4, window_bounds = array<i64: 256, 128>}, {transform_indices = @transform_5, window_bounds = array<i64: 1, 2, 128>}]} {
    %c0 = arith.constant 0 : index
    %c0_0 = arith.constant 0 : index
    %0 = vector.load %arg1[%c0, %c0_0] : memref<256x128xbf16, #tpu.memory_space<vmem>>, vector<256x128xbf16>
    %1 = arith.extf %0 : vector<256x128xbf16> to vector<256x128xf32>
    %c0_1 = arith.constant 0 : index
    %c0_2 = arith.constant 0 : index
    %2 = vector.load %arg2[%c0_1, %c0_2] : memref<1x128xf32, #tpu.memory_space<vmem>>, vector<1x128xf32>
    %3 = vector.broadcast %2 : vector<1x128xf32> to vector<256x128xf32>
    %4 = arith.mulf %1, %3 : vector<256x128xf32>
    %c0_3 = arith.constant 0 : index
    %c0_4 = arith.constant 0 : index
    %5 = vector.load %arg3[%c0_3, %c0_4] : memref<1x128xf32, #tpu.memory_space<vmem>>, vector<1x128xf32>
    %6 = vector.broadcast %5 : vector<1x128xf32> to vector<256x128xf32>
    %7 = arith.addf %4, %6 : vector<256x128xf32>
    %cst = arith.constant 0.000000e+00 : f32
    %8 = vector.broadcast %cst : f32 to vector<256x128xf32>
    %9 = arith.maximumf %7, %8 : vector<256x128xf32>
    %10 = arith.truncf %9 : vector<256x128xf32> to vector<256x128xbf16>
    %c0_5 = arith.constant 0 : index
    %c0_6 = arith.constant 0 : index
    %11 = vector.load %arg4[%c0_5, %c0_6] : memref<128x128xbf16, #tpu.memory_space<vmem>>, vector<128x128xbf16>
    %cst_7 = arith.constant dense<0.000000e+00> : vector<256x128xf32>
    %12 = tpu.matmul %10, %11, %cst_7 {dimension_numbers = #tpu.dot_dimension_numbers<[1], [0], [0], [1], [0, 0, 1, 1], [], []>} : vector<256x128xbf16>, vector<128x128xbf16>, vector<256x128xf32> -> vector<256x128xf32>
    %13 = arith.truncf %12 : vector<256x128xf32> to vector<256x128xbf16>
    %c0_8 = arith.constant 0 : index
    %c0_9 = arith.constant 0 : index
    %14 = vector.load %arg5[%c0_8, %c0_9] : memref<256x128xbf16, #tpu.memory_space<vmem>>, vector<256x128xbf16>
    tpu.vector_store %arg5[%c0_8, %c0_9], %13 {strides = array<i32>} : memref<256x128xbf16, #tpu.memory_space<vmem>>, vector<256x128xbf16>,
    %cst_10 = arith.constant dense<0.000000e+00> : vector<128xf32>
    %15 = vector.multi_reduction <add>, %12, %cst_10 [0] : vector<256x128xf32> to vector<128xf32>
    %16 = vector.shape_cast %15 : vector<128xf32> to vector<1x128xf32>
    %17 = arith.mulf %12, %12 : vector<256x128xf32>
    %cst_11 = arith.constant dense<0.000000e+00> : vector<128xf32>
    %18 = vector.multi_reduction <add>, %17, %cst_11 [0] : vector<256x128xf32> to vector<128xf32>
    %19 = vector.shape_cast %18 : vector<128xf32> to vector<1x128xf32>
    %20 = tpu.concatenate %16, %19 in 0 : vector<1x128xf32>, vector<1x128xf32> -> vector<2x128xf32>
    %21 = vector.shape_cast %20 : vector<2x128xf32> to vector<1x2x128xf32>
    %c0_12 = arith.constant 0 : index
    %c0_13 = arith.constant 0 : index
    %c0_14 = arith.constant 0 : index
    %22 = vector.load %arg6[%c0_12, %c0_13, %c0_14] : memref<1x2x128xf32, #tpu.memory_space<vmem>>, vector<1x2x128xf32>
    tpu.vector_store %arg6[%c0_12, %c0_13, %c0_14], %21 {strides = array<i32>} : memref<1x2x128xf32, #tpu.memory_space<vmem>>, vector<1x2x128xf32>,
    return
  }
  func.func @transform_0(%arg0: i32) -> (i32, i32) {
    %c0_i32 = arith.constant 0 : i32
    %c0_i32_0 = arith.constant 0 : i32
    return %arg0, %c0_i32 : i32, i32
  }
  func.func @transform_1(%arg0: i32) -> (i32, i32) {
    %c0_i32 = arith.constant 0 : i32
    %c0_i32_0 = arith.constant 0 : i32
    %c0_i32_1 = arith.constant 0 : i32
    return %c0_i32, %c0_i32_0 : i32, i32
  }
  func.func @transform_2(%arg0: i32) -> (i32, i32) {
    %c0_i32 = arith.constant 0 : i32
    %c0_i32_0 = arith.constant 0 : i32
    %c0_i32_1 = arith.constant 0 : i32
    return %c0_i32, %c0_i32_0 : i32, i32
  }
  func.func @transform_3(%arg0: i32) -> (i32, i32) {
    %c0_i32 = arith.constant 0 : i32
    %c0_i32_0 = arith.constant 0 : i32
    %c0_i32_1 = arith.constant 0 : i32
    return %c0_i32, %c0_i32_0 : i32, i32
  }
  func.func @transform_4(%arg0: i32) -> (i32, i32) {
    %c0_i32 = arith.constant 0 : i32
    %c0_i32_0 = arith.constant 0 : i32
    return %arg0, %c0_i32 : i32, i32
  }
  func.func @transform_5(%arg0: i32) -> (i32, i32, i32) {
    %c0_i32 = arith.constant 0 : i32
    %c0_i32_0 = arith.constant 0 : i32
    %c0_i32_1 = arith.constant 0 : i32
    return %arg0, %c0_i32, %c0_i32_0 : i32, i32, i32
  }
}

module attributes {stable_mosaic.version = 11 : i64} {
  func.func @finish_kernel(%arg0: i32, %arg1: memref<1x256x128xbf16, #tpu.memory_space<vmem>>, %arg2: memref<1x128xf32, #tpu.memory_space<vmem>>, %arg3: memref<1x128xf32, #tpu.memory_space<vmem>>, %arg4: memref<1x128x256xf32, #tpu.memory_space<vmem>>, %arg5: memref<1x128x256xf32, #tpu.memory_space<vmem>>) attributes {dimension_semantics = [#tpu.dimension_semantics<parallel>], iteration_bounds = array<i64: 2>, scalar_prefetch = 0 : i64, scratch_operands = 0 : i64, tpu.core_type = #tpu.core_type<tc>, window_params = [{transform_indices = @transform_0, window_bounds = array<i64: 1, 256, 128>}, {pipeline_mode = #tpu.pipeline_mode<synchronous>, transform_indices = @transform_1, window_bounds = array<i64: 1, 128>}, {pipeline_mode = #tpu.pipeline_mode<synchronous>, transform_indices = @transform_2, window_bounds = array<i64: 1, 128>}, {transform_indices = @transform_3, window_bounds = array<i64: 1, 128, 256>}, {transform_indices = @transform_4, window_bounds = array<i64: 1, 128, 256>}]} {
    %c0 = arith.constant 0 : index
    %c0_0 = arith.constant 0 : index
    %c0_1 = arith.constant 0 : index
    %0 = vector.load %arg1[%c0, %c0_0, %c0_1] : memref<1x256x128xbf16, #tpu.memory_space<vmem>>, vector<1x256x128xbf16>
    %1 = vector.shape_cast %0 : vector<1x256x128xbf16> to vector<256x128xbf16>
    %2 = arith.extf %1 : vector<256x128xbf16> to vector<256x128xf32>
    %c0_2 = arith.constant 0 : index
    %c0_3 = arith.constant 0 : index
    %3 = vector.load %arg2[%c0_2, %c0_3] : memref<1x128xf32, #tpu.memory_space<vmem>>, vector<1x128xf32>
    %4 = vector.broadcast %3 : vector<1x128xf32> to vector<256x128xf32>
    %5 = arith.mulf %2, %4 : vector<256x128xf32>
    %c0_4 = arith.constant 0 : index
    %c0_5 = arith.constant 0 : index
    %6 = vector.load %arg3[%c0_4, %c0_5] : memref<1x128xf32, #tpu.memory_space<vmem>>, vector<1x128xf32>
    %7 = vector.broadcast %6 : vector<1x128xf32> to vector<256x128xf32>
    %8 = arith.addf %5, %7 : vector<256x128xf32>
    %9 = tpu.transpose %8, [1, 0] : vector<256x128xf32> -> vector<128x256xf32>
    %c0_6 = arith.constant 0 : index
    %c0_7 = arith.constant 0 : index
    %c0_8 = arith.constant 0 : index
    %10 = vector.load %arg4[%c0_6, %c0_7, %c0_8] : memref<1x128x256xf32, #tpu.memory_space<vmem>>, vector<1x128x256xf32>
    %11 = vector.shape_cast %10 : vector<1x128x256xf32> to vector<128x256xf32>
    %12 = arith.addf %9, %11 : vector<128x256xf32>
    %cst = arith.constant 0.000000e+00 : f32
    %13 = vector.broadcast %cst : f32 to vector<128x256xf32>
    %14 = arith.maximumf %12, %13 : vector<128x256xf32>
    %c0_9 = arith.constant 0 : index
    %c0_10 = arith.constant 0 : index
    %c0_11 = arith.constant 0 : index
    %15 = vector.load %arg5[%c0_9, %c0_10, %c0_11] : memref<1x128x256xf32, #tpu.memory_space<vmem>>, vector<1x128x256xf32>
    %16 = vector.shape_cast %15 : vector<1x128x256xf32> to vector<128x256xf32>
    %17 = vector.shape_cast %14 : vector<128x256xf32> to vector<1x128x256xf32>
    tpu.vector_store %arg5[%c0_9, %c0_10, %c0_11], %17 {strides = array<i32>} : memref<1x128x256xf32, #tpu.memory_space<vmem>>, vector<1x128x256xf32>,
    return
  }
  func.func @transform_0(%arg0: i32) -> (i32, i32, i32) {
    %c0_i32 = arith.constant 0 : i32
    %c0_i32_0 = arith.constant 0 : i32
    %c0_i32_1 = arith.constant 0 : i32
    return %arg0, %c0_i32, %c0_i32_0 : i32, i32, i32
  }
  func.func @transform_1(%arg0: i32) -> (i32, i32) {
    %c0_i32 = arith.constant 0 : i32
    %c0_i32_0 = arith.constant 0 : i32
    %c0_i32_1 = arith.constant 0 : i32
    return %c0_i32, %c0_i32_0 : i32, i32
  }
  func.func @transform_2(%arg0: i32) -> (i32, i32) {
    %c0_i32 = arith.constant 0 : i32
    %c0_i32_0 = arith.constant 0 : i32
    %c0_i32_1 = arith.constant 0 : i32
    return %c0_i32, %c0_i32_0 : i32, i32
  }
  func.func @transform_3(%arg0: i32) -> (i32, i32, i32) {
    %c0_i32 = arith.constant 0 : i32
    %c0_i32_0 = arith.constant 0 : i32
    %c0_i32_1 = arith.constant 0 : i32
    return %arg0, %c0_i32, %c0_i32_0 : i32, i32, i32
  }
  func.func @transform_4(%arg0: i32) -> (i32, i32, i32) {
    %c0_i32 = arith.constant 0 : i32
    %c0_i32_0 = arith.constant 0 : i32
    %c0_i32_1 = arith.constant 0 : i32
    return %arg0, %c0_i32, %c0_i32_0 : i32, i32, i32
  }
}

</mosaic_0001>

<llo_original>
// kernel: resnet_block50_forward.6
$region0: #{resnet_block50_forward.6}
  #allocation0 [shape = 'u32[]', space=smem, size = 0x4, offset = 0x4, fixed_abs, tag = 'smem constant byte address 0x4 - core index']
  #allocation1 [shape = 'u32[72,128]{1,0:T(1,128)}', space=vmem, size = 0x9000, scoped, tag = 'internal scratch']
  %s0 = inlined_call_operand.vmem [shape: bf16[512,128], index: 0, kind: input, shape index: {}]
  %s1 = inlined_call_operand.vmem [shape: f32[1,128], index: 1, kind: input, shape index: {}]
  %s2 = inlined_call_operand.vmem [shape: f32[1,128], index: 2, kind: input, shape index: {}]
  %s3 = inlined_call_operand.vmem [shape: bf16[128,128], index: 3, kind: input, shape index: {}]
  %s4 = inlined_call_operand.vmem [shape: bf16[512,128], index: 4, kind: output, shape index: {0}]
  %s5 = inlined_call_operand.vmem [shape: f32[2,2,128], index: 5, kind: output, shape index: {1}]
  %6 = xla_tuple %s4, %s5
  %s7 = sld [smem:[#allocation0]]
  $region57: #{resnet_block50_forward.6} parent=0
    _
  %s9 = ssub.s32 1, %s7
  %s10 = scalar_select 0, %s9, %s7
  loop: start=0, step=1, limit=4
  $region2: #{resnet_block50_forward.6} parent=0 // loop_pre_header
    _
  $region3: #{resnet_block50_forward.6} parent=0 // loop_header
    %s12 = sphi 0, %s16
    %p13 = scmp.ge.s32.totalorder %s12, 4
    %s22 = sphi 0, %s24
    %s25 = sphi 0, %s22
    %s26 = sphi 0, %s25
    %s42 = sphi 0, %s26
    %s46 = sphi 0, %s46
    %s48 = sphi 0, %s46
    %s49 = sphi 0, %s48
    %s63 = sphi 0, %s49
    %s67 = sphi 0, %s67
    %s69 = sphi 0, %s67
    %s70 = sphi 0, %s69
    %s84 = sphi 0, %s70
    %s88 = sphi 0, %s88
    %s90 = sphi 0, %s88
    %s91 = sphi 0, %s90
    %s105 = sphi 0, %s91
    %s111 = sphi 0, %s113
    %s114 = sphi 0, %s111
    %s115 = sphi 0, %s114
    %s131 = sphi 0, %s115
    %s137 = sphi 0, %s139
    %s140 = sphi 0, %s137
    %s141 = sphi 0, %s140
    %s157 = sphi 0, %s141
  $region4: #{resnet_block50_forward.6} parent=0 // loop_header_branch
    %15 = sbr.rel (%p13) target = $region8
  $region5: #{resnet_block50_forward.6} parent=0 // loop_body
    %s17 = ssub.s32 %s12, 1
    %s18 = ssub.s32 %s12, 2
    %s19 = sadd.s32 %s12, 1
    %s20 = ssub.s32 %s12, %s19
    %p21 = scmp.eq.s32.totalorder %s20, 0
    %s23 = sadd.s32 %s22, 1
    %s24 = scalar_select %p21, %s22, %s23
    %p27 = pneg %p21
    %p28 = scmp.eq.s32.totalorder %s12, 1
    %p29 = por %p27, %p28
    %p30 = scmp.ne.s32.totalorder %s22, %s25
    %p31 = scmp.eq.s32.totalorder %s12, 0
    %p32 = por %p30, %p31
    %p33 = scmp.ne.s32.totalorder %s22, %s25
    %p34 = scmp.eq.s32.totalorder %s17, 1
    %p35 = por %p33, %p34
    %p36 = scmp.ne.s32.totalorder %s25, %s26
    %p37 = scmp.eq.s32.totalorder %s17, 0
    %p38 = por %p36, %p37
    %p39 = scmp.ne.s32.totalorder %s25, %s26
    %p40 = scmp.eq.s32.totalorder %s18, 1
    %p41 = por %p39, %p40
    %p43 = scmp.ne.s32.totalorder %s26, %s42
    %p44 = scmp.eq.s32.totalorder %s18, 0
    %p45 = por %p43, %p44
    %s47 = sadd.s32 %s46, 1
    %p50 = scmp.eq.s32.totalorder %s12, 1
    %p51 = scmp.ne.s32.totalorder %s46, %s48
    %p52 = scmp.eq.s32.totalorder %s12, 0
    %p53 = por %p51, %p52
    %p54 = scmp.ne.s32.totalorder %s46, %s48
    %p55 = scmp.eq.s32.totalorder %s17, 1
    %p56 = por %p54, %p55
    %p57 = scmp.ne.s32.totalorder %s48, %s49
    %p58 = scmp.eq.s32.totalorder %s17, 0
    %p59 = por %p57, %p58
    %p60 = scmp.ne.s32.totalorder %s48, %s49
    %p61 = scmp.eq.s32.totalorder %s18, 1
    %p62 = por %p60, %p61
    %p64 = scmp.ne.s32.totalorder %s49, %s63
    %p65 = scmp.eq.s32.totalorder %s18, 0
    %p66 = por %p64, %p65
    %s68 = sadd.s32 %s67, 1
    %p71 = scmp.eq.s32.totalorder %s12, 1
    %p72 = scmp.ne.s32.totalorder %s67, %s69
    %p73 = scmp.eq.s32.totalorder %s12, 0
    %p74 = por %p72, %p73
    %p75 = scmp.ne.s32.totalorder %s67, %s69
    %p76 = scmp.eq.s32.totalorder %s17, 1
    %p77 = por %p75, %p76
    %p78 = scmp.ne.s32.totalorder %s69, %s70
    %p79 = scmp.eq.s32.totalorder %s17, 0
    %p80 = por %p78, %p79
    %p81 = scmp.ne.s32.totalorder %s69, %s70
    %p82 = scmp.eq.s32.totalorder %s18, 1
    %p83 = por %p81, %p82
    %p85 = scmp.ne.s32.totalorder %s70, %s84
    %p86 = scmp.eq.s32.totalorder %s18, 0
    %p87 = por %p85, %p86
    %s89 = sadd.s32 %s88, 1
    %p92 = scmp.eq.s32.totalorder %s12, 1
    %p93 = scmp.ne.s32.totalorder %s88, %s90
    %p94 = scmp.eq.s32.totalorder %s12, 0
    %p95 = por %p93, %p94
    %p96 = scmp.ne.s32.totalorder %s88, %s90
    %p97 = scmp.eq.s32.totalorder %s17, 1
    %p98 = por %p96, %p97
    %p99 = scmp.ne.s32.totalorder %s90, %s91
    %p100 = scmp.eq.s32.totalorder %s17, 0
    %p101 = por %p99, %p100
    %p102 = scmp.ne.s32.totalorder %s90, %s91
    %p103 = scmp.eq.s32.totalorder %s18, 1
    %p104 = por %p102, %p103
    %p106 = scmp.ne.s32.totalorder %s91, %s105
    %p107 = scmp.eq.s32.totalorder %s18, 0
    %p108 = por %p106, %p107
    %s109 = ssub.s32 %s12, %s19
    %p110 = scmp.eq.s32.totalorder %s109, 0
    %s112 = sadd.s32 %s111, 1
    %s113 = scalar_select %p110, %s111, %s112
    %p116 = pneg %p110
    %p117 = scmp.eq.s32.totalorder %s12, 1
    %p118 = por %p116, %p117
    %p119 = scmp.ne.s32.totalorder %s111, %s114
    %p120 = scmp.eq.s32.totalorder %s12, 0
    %p121 = por %p119, %p120
    %p122 = scmp.ne.s32.totalorder %s111, %s114
    %p123 = scmp.eq.s32.totalorder %s17, 1
    %p124 = por %p122, %p123
    %p125 = scmp.ne.s32.totalorder %s114, %s115
    %p126 = scmp.eq.s32.totalorder %s17, 0
    %p127 = por %p125, %p126
    %p128 = scmp.ne.s32.totalorder %s114, %s115
    %p129 = scmp.eq.s32.totalorder %s18, 1
    %p130 = por %p128, %p129
    %p132 = scmp.ne.s32.totalorder %s115, %s131
    %p133 = scmp.eq.s32.totalorder %s18, 0
    %p134 = por %p132, %p133
    %s135 = ssub.s32 %s12, %s19
    %p136 = scmp.eq.s32.totalorder %s135, 0
    %s138 = sadd.s32 %s137, 1
    %s139 = scalar_select %p136, %s137, %s138
    %p142 = pneg %p136
    %p143 = scmp.eq.s32.totalorder %s12, 1
    %p144 = por %p142, %p143
    %p145 = scmp.ne.s32.totalorder %s137, %s140
    %p146 = scmp.eq.s32.totalorder %s12, 0
    %p147 = por %p145, %p146
    %p148 = scmp.ne.s32.totalorder %s137, %s140
    %p149 = scmp.eq.s32.totalorder %s17, 1
    %p150 = por %p148, %p149
    %p151 = scmp.ne.s32.totalorder %s140, %s141
    %p152 = scmp.eq.s32.totalorder %s17, 0
    %p153 = por %p151, %p152
    %p154 = scmp.ne.s32.totalorder %s140, %s141
    %p155 = scmp.eq.s32.totalorder %s18, 1
    %p156 = por %p154, %p155
    %p158 = scmp.ne.s32.totalorder %s141, %s157
    %p159 = scmp.eq.s32.totalorder %s18, 0
    %p160 = por %p158, %p159
    %p161 = scmp.le.s32.totalorder 1, %s12
    %p162 = scmp.lt.s32.totalorder %s12, 3
    %p163 = pnand %p161, %p162
    %p164 = pneg %p163
    // Predicated region
    $region9: #{resnet_block50_forward.6} parent=5 // pred_check
      _
    $region10: #{resnet_block50_forward.6} parent=5 // pred_check_branch
      %166 = sbr.rel (%p163) target = $region12
    $region11: #{resnet_block50_forward.6} parent=5 // pred_region
      %s167 = ssub.s32 %s12, 1
      // Predicated region
      $region13: #{resnet_block50_forward.6} parent=11 // pred_check
        %p168 = pneg %p59
      $region14: #{resnet_block50_forward.6} parent=11 // pred_check_branch
        %170 = sbr.rel (%p168) target = $region16
      $region15: #{resnet_block50_forward.6} parent=11 // pred_region
        _
      $region16: #{resnet_block50_forward.6} parent=11 // pred_fallthru
        _
      // Predicated region
      $region17: #{resnet_block50_forward.6} parent=11 // pred_check
        %p171 = pneg %p80
      $region18: #{resnet_block50_forward.6} parent=11 // pred_check_branch
        %173 = sbr.rel (%p171) target = $region20
      $region19: #{resnet_block50_forward.6} parent=11 // pred_region
        _
      $region20: #{resnet_block50_forward.6} parent=11 // pred_fallthru
        _
      // Predicated region
      $region21: #{resnet_block50_forward.6} parent=11 // pred_check
        %p174 = pneg %p101
      $region22: #{resnet_block50_forward.6} parent=11 // pred_check_branch
        %176 = sbr.rel (%p174) target = $region24
      $region23: #{resnet_block50_forward.6} parent=11 // pred_region
        _
      $region24: #{resnet_block50_forward.6} parent=11 // pred_fallthru
        _
    $region12: #{resnet_block50_forward.6} parent=5 // pred_fallthru
      _
    %p177 = scmp.lt.s32.totalorder %s12, 2
    // Predicated region
    $region25: #{resnet_block50_forward.6} parent=5 // pred_check
      %p178 = pneg %p177
    $region26: #{resnet_block50_forward.6} parent=5 // pred_check_branch
      %180 = sbr.rel (%p178) target = $region28
    $region27: #{resnet_block50_forward.6} parent=5 // pred_region
      // Predicated region
      $region29: #{resnet_block50_forward.6} parent=27 // pred_check
        %p181 = pneg %p32
      $region30: #{resnet_block50_forward.6} parent=27 // pred_check_branch
        %183 = sbr.rel (%p181) target = $region32
      $region31: #{resnet_block50_forward.6} parent=27 // pred_region
        %s184 = smul.u32 32, %s12
        %p185 = scmp.lt.s32.totalorder %s184, 63
        %s186 = scalar_select %p185, %s184, 63
        %s187 = smul.addr %s186, 4
        %s188 = scalar_lea.vmem %s0, %s187
        %s189 = smul.u32 32, %s12
      $region32: #{resnet_block50_forward.6} parent=27 // pred_fallthru
        _
    $region28: #{resnet_block50_forward.6} parent=5 // pred_fallthru
      _
    %p190 = scmp.le.s32.totalorder 1, %s12
    %p191 = scmp.lt.s32.totalorder %s12, 3
    %p192 = pnand %p190, %p191
    %p193 = pneg %p192
    // Predicated region
    $region33: #{resnet_block50_forward.6} parent=5 // pred_check
      _
    $region34: #{resnet_block50_forward.6} parent=5 // pred_check_branch
      %195 = sbr.rel (%p192) target = $region36
    $region35: #{resnet_block50_forward.6} parent=5 // pred_region
      %s196 = ssub.s32 %s12, 1
      %s197 = smul.u32 32, %s17
      %p198 = scmp.lt.s32.totalorder %s197, 63
      %s199 = scalar_select %p198, %s197, 63
      %s200 = smul.addr %s199, 4
      %s201 = scalar_lea.vmem %s0, %s200
      %p202 = pneg %p38
      %p203 = pneg %p35
      %p204 = pneg %p59
      %p205 = pneg %p56
      %p206 = pneg %p80
      %p207 = pneg %p77
      %p208 = pneg %p101
      %p209 = pneg %p98
      %p210 = pneg %p127
      %p211 = pneg %p124
      %s212 = smul.u32 32, %s17
      %p213 = scmp.lt.s32.totalorder %s212, 63
      %s214 = scalar_select %p213, %s212, 63
      %s215 = smul.addr %s214, 4
      %s216 = scalar_lea.vmem %s4, %s215
      %p217 = pneg %p153
      %p218 = pneg %p150
      %p219 = scmp.lt.s32.totalorder %s17, 1
      %s220 = scalar_select %p219, %s17, 1
      %s221 = smul.addr %s220, 2
      %s222 = scalar_lea.vmem %s5, %s221
      %s223 = smul.u32 32, %s17
      %p224 = scmp.lt.s32.totalorder %s223, 63
      %s225 = scalar_select %p224, %s223, 63
      %s226 = smul.addr %s225, 4
      %s227 = scalar_lea.vmem %s0, %s226
      %s228 = smul.u32 32, %s17
      %s229 = smul.u32 32, %s17
      %p230 = scmp.lt.s32.totalorder %s229, 63
      %s231 = scalar_select %p230, %s229, 63
      %s232 = smul.addr %s231, 4
      %s233 = scalar_lea.vmem %s4, %s232
      %s234 = smul.u32 32, %s17
      %p235 = scmp.lt.s32.totalorder %s17, 1
      %s236 = scalar_select %p235, %s17, 1
      %s237 = smul.addr %s236, 2
      %s238 = scalar_lea.vmem %s5, %s237
      %v239 = vld [vmem:[%s227] sm:$0xf]
      %v240 = vld [vmem:[%s227 + $0x4] sm:$0xf]
      %v241 = vld [vmem:[%s227 + $0x8] sm:$0xf]
      %v242 = vld [vmem:[%s227 + $0xc] sm:$0xf]
      %v243 = vld [vmem:[%s227 + $0x10] sm:$0xf]
      %v244 = vld [vmem:[%s227 + $0x14] sm:$0xf]
      %v245 = vld [vmem:[%s227 + $0x18] sm:$0xf]
      %v246 = vld [vmem:[%s227 + $0x1c] sm:$0xf]
      %v247 = vld [vmem:[%s227 + $0x20] sm:$0xf]
      %v248 = vld [vmem:[%s227 + $0x24] sm:$0xf]
      %v249 = vld [vmem:[%s227 + $0x28] sm:$0xf]
      %v250 = vld [vmem:[%s227 + $0x2c] sm:$0xf]
      %v251 = vld [vmem:[%s227 + $0x30] sm:$0xf]
      %v252 = vld [vmem:[%s227 + $0x34] sm:$0xf]
      %v253 = vld [vmem:[%s227 + $0x38] sm:$0xf]
      %v254 = vld [vmem:[%s227 + $0x3c] sm:$0xf]
      %v255 = vld [vmem:[%s227 + $0x40] sm:$0xf]
      %v256 = vld [vmem:[%s227 + $0x44] sm:$0xf]
      %v257 = vld [vmem:[%s227 + $0x48] sm:$0xf]
      %v258 = vld [vmem:[%s227 + $0x4c] sm:$0xf]
      %v259 = vld [vmem:[%s227 + $0x50] sm:$0xf]
      %v260 = vld [vmem:[%s227 + $0x54] sm:$0xf]
      %v261 = vld [vmem:[%s227 + $0x58] sm:$0xf]
      %v262 = vld [vmem:[%s227 + $0x5c] sm:$0xf]
      %v263 = vld [vmem:[%s227 + $0x60] sm:$0xf]
      %v264 = vld [vmem:[%s227 + $0x64] sm:$0xf]
      %v265 = vld [vmem:[%s227 + $0x68] sm:$0xf]
      %v266 = vld [vmem:[%s227 + $0x6c] sm:$0xf]
      %v267 = vld [vmem:[%s227 + $0x70] sm:$0xf]
      %v268 = vld [vmem:[%s227 + $0x74] sm:$0xf]
      %v269 = vld [vmem:[%s227 + $0x78] sm:$0xf]
      %v270 = vld [vmem:[%s227 + $0x7c] sm:$0xf]
      %v271 = vunpack.c.l.bf16 %v239
      %v272 = vunpack.c.l.bf16 %v240
      %v273 = vunpack.c.l.bf16 %v241
      %v274 = vunpack.c.l.bf16 %v242
      %v275 = vunpack.c.l.bf16 %v243
      %v276 = vunpack.c.l.bf16 %v244
      %v277 = vunpack.c.l.bf16 %v245
      %v278 = vunpack.c.l.bf16 %v246
      %v279 = vunpack.c.l.bf16 %v247
      %v280 = vunpack.c.l.bf16 %v248
      %v281 = vunpack.c.l.bf16 %v249
      %v282 = vunpack.c.l.bf16 %v250
      %v283 = vunpack.c.l.bf16 %v251
      %v284 = vunpack.c.l.bf16 %v252
      %v285 = vunpack.c.l.bf16 %v253
      %v286 = vunpack.c.l.bf16 %v254
      %v287 = vunpack.c.l.bf16 %v255
      %v288 = vunpack.c.l.bf16 %v256
      %v289 = vunpack.c.l.bf16 %v257
      %v290 = vunpack.c.l.bf16 %v258
      %v291 = vunpack.c.l.bf16 %v259
      %v292 = vunpack.c.l.bf16 %v260
      %v293 = vunpack.c.l.bf16 %v261
      %v294 = vunpack.c.l.bf16 %v262
      %v295 = vunpack.c.l.bf16 %v263
      %v296 = vunpack.c.l.bf16 %v264
      %v297 = vunpack.c.l.bf16 %v265
      %v298 = vunpack.c.l.bf16 %v266
      %v299 = vunpack.c.l.bf16 %v267
      %v300 = vunpack.c.l.bf16 %v268
      %v301 = vunpack.c.l.bf16 %v269
      %v302 = vunpack.c.l.bf16 %v270
      %v303 = vld [vmem:[%s1] sm:$0x1]
      %v305 = vperm.slane %v303, 0
      %v307 = vmul.f32 %v271, %v305
      %v308 = vmul.f32 %v272, %v305
      %v309 = vmul.f32 %v273, %v305
      %v310 = vmul.f32 %v274, %v305
      %v311 = vmul.f32 %v275, %v305
      %v312 = vmul.f32 %v276, %v305
      %v313 = vmul.f32 %v277, %v305
      %v314 = vmul.f32 %v278, %v305
      %v315 = vmul.f32 %v279, %v305
      %v316 = vmul.f32 %v280, %v305
      %v317 = vmul.f32 %v281, %v305
      %v318 = vmul.f32 %v282, %v305
      %v319 = vmul.f32 %v283, %v305
      %v320 = vmul.f32 %v284, %v305
      %v321 = vmul.f32 %v285, %v305
      %v322 = vmul.f32 %v286, %v305
      %v323 = vmul.f32 %v287, %v305
      %v324 = vmul.f32 %v288, %v305
      %v325 = vmul.f32 %v289, %v305
      %v326 = vmul.f32 %v290, %v305
      %v327 = vmul.f32 %v291, %v305
      %v328 = vmul.f32 %v292, %v305
      %v329 = vmul.f32 %v293, %v305
      %v330 = vmul.f32 %v294, %v305
      %v331 = vmul.f32 %v295, %v305
      %v332 = vmul.f32 %v296, %v305
      %v333 = vmul.f32 %v297, %v305
      %v334 = vmul.f32 %v298, %v305
      %v335 = vmul.f32 %v299, %v305
      %v336 = vmul.f32 %v300, %v305
      %v337 = vmul.f32 %v301, %v305
      %v338 = vmul.f32 %v302, %v305
      %v339 = vld [vmem:[%s2] sm:$0x1]
      %v341 = vperm.slane %v339, 0
      %v343 = vadd.f32 %v307, %v341
      %v344 = vadd.f32 %v308, %v341
      %v345 = vadd.f32 %v309, %v341
      %v346 = vadd.f32 %v310, %v341
      %v347 = vadd.f32 %v311, %v341
      %v348 = vadd.f32 %v312, %v341
      %v349 = vadd.f32 %v313, %v341
      %v350 = vadd.f32 %v314, %v341
      %v351 = vadd.f32 %v315, %v341
      %v352 = vadd.f32 %v316, %v341
      %v353 = vadd.f32 %v317, %v341
      %v354 = vadd.f32 %v318, %v341
      %v355 = vadd.f32 %v319, %v341
      %v356 = vadd.f32 %v320, %v341
      %v357 = vadd.f32 %v321, %v341
      %v358 = vadd.f32 %v322, %v341
      %v359 = vadd.f32 %v323, %v341
      %v360 = vadd.f32 %v324, %v341
      %v361 = vadd.f32 %v325, %v341
      %v362 = vadd.f32 %v326, %v341
      %v363 = vadd.f32 %v327, %v341
      %v364 = vadd.f32 %v328, %v341
      %v365 = vadd.f32 %v329, %v341
      %v366 = vadd.f32 %v330, %v341
      %v367 = vadd.f32 %v331, %v341
      %v368 = vadd.f32 %v332, %v341
      %v369 = vadd.f32 %v333, %v341
      %v370 = vadd.f32 %v334, %v341
      %v371 = vadd.f32 %v335, %v341
      %v372 = vadd.f32 %v336, %v341
      %v373 = vadd.f32 %v337, %v341
      %v374 = vadd.f32 %v338, %v341
      %v375 = vmax.f32 %v343, 0.0
      %v376 = vmax.f32 %v344, 0.0
      %v377 = vmax.f32 %v345, 0.0
      %v378 = vmax.f32 %v346, 0.0
      %v379 = vmax.f32 %v347, 0.0
      %v380 = vmax.f32 %v348, 0.0
      %v381 = vmax.f32 %v349, 0.0
      %v382 = vmax.f32 %v350, 0.0
      %v383 = vmax.f32 %v351, 0.0
      %v384 = vmax.f32 %v352, 0.0
      %v385 = vmax.f32 %v353, 0.0
      %v386 = vmax.f32 %v354, 0.0
      %v387 = vmax.f32 %v355, 0.0
      %v388 = vmax.f32 %v356, 0.0
      %v389 = vmax.f32 %v357, 0.0
      %v390 = vmax.f32 %v358, 0.0
      %v391 = vmax.f32 %v359, 0.0
      %v392 = vmax.f32 %v360, 0.0
      %v393 = vmax.f32 %v361, 0.0
      %v394 = vmax.f32 %v362, 0.0
      %v395 = vmax.f32 %v363, 0.0
      %v396 = vmax.f32 %v364, 0.0
      %v397 = vmax.f32 %v365, 0.0
      %v398 = vmax.f32 %v366, 0.0
      %v399 = vmax.f32 %v367, 0.0
      %v400 = vmax.f32 %v368, 0.0
      %v401 = vmax.f32 %v369, 0.0
      %v402 = vmax.f32 %v370, 0.0
      %v403 = vmax.f32 %v371, 0.0
      %v404 = vmax.f32 %v372, 0.0
      %v405 = vmax.f32 %v373, 0.0
      %v406 = vmax.f32 %v374, 0.0
      %v407 = vpack.c.bf16 %v376, %v375
      %v408 = vpack.c.bf16 %v378, %v377
      %v409 = vpack.c.bf16 %v380, %v379
      %v410 = vpack.c.bf16 %v382, %v381
      %v411 = vpack.c.bf16 %v384, %v383
      %v412 = vpack.c.bf16 %v386, %v385
      %v413 = vpack.c.bf16 %v388, %v387
      %v414 = vpack.c.bf16 %v390, %v389
      %v415 = vpack.c.bf16 %v392, %v391
      %v416 = vpack.c.bf16 %v394, %v393
      %v417 = vpack.c.bf16 %v396, %v395
      %v418 = vpack.c.bf16 %v398, %v397
      %v419 = vpack.c.bf16 %v400, %v399
      %v420 = vpack.c.bf16 %v402, %v401
      %v421 = vpack.c.bf16 %v404, %v403
      %v422 = vpack.c.bf16 %v406, %v405
      %v423 = vld [vmem:[%s3] sm:$0xf]
      %v424 = vld [vmem:[%s3 + $0x4] sm:$0xf]
      %v425 = vld [vmem:[%s3 + $0x8] sm:$0xf]
      %v426 = vld [vmem:[%s3 + $0xc] sm:$0xf]
      %v427 = vld [vmem:[%s3 + $0x10] sm:$0xf]
      %v428 = vld [vmem:[%s3 + $0x14] sm:$0xf]
      %v429 = vld [vmem:[%s3 + $0x18] sm:$0xf]
      %v430 = vld [vmem:[%s3 + $0x1c] sm:$0xf]
      %v431 = vld [vmem:[%s3 + $0x20] sm:$0xf]
      %v432 = vld [vmem:[%s3 + $0x24] sm:$0xf]
      %v433 = vld [vmem:[%s3 + $0x28] sm:$0xf]
      %v434 = vld [vmem:[%s3 + $0x2c] sm:$0xf]
      %v435 = vld [vmem:[%s3 + $0x30] sm:$0xf]
      %v436 = vld [vmem:[%s3 + $0x34] sm:$0xf]
      %v437 = vld [vmem:[%s3 + $0x38] sm:$0xf]
      %v438 = vld [vmem:[%s3 + $0x3c] sm:$0xf]
      %v455 = vunpack.c.l.b16 %v423
      %v456 = vunpack.c.l.b16 %v424
      %v457 = vunpack.c.l.b16 %v425
      %v458 = vunpack.c.l.b16 %v426
      %v459 = vunpack.c.l.b16 %v427
      %v460 = vunpack.c.l.b16 %v428
      %v461 = vunpack.c.l.b16 %v429
      %v462 = vunpack.c.l.b16 %v430
      %v463 = vunpack.c.l.b16 %v431
      %v464 = vunpack.c.l.b16 %v432
      %v465 = vunpack.c.l.b16 %v433
      %v466 = vunpack.c.l.b16 %v434
      %v467 = vunpack.c.l.b16 %v435
      %v468 = vunpack.c.l.b16 %v436
      %v469 = vunpack.c.l.b16 %v437
      %v470 = vunpack.c.l.b16 %v438
      %v471 = vpack.c.b16 %v456, %v455
      %v472 = vpack.c.b16 %v458, %v457
      %v473 = vpack.c.b16 %v460, %v459
      %v474 = vpack.c.b16 %v462, %v461
      %v475 = vpack.c.b16 %v464, %v463
      %v476 = vpack.c.b16 %v466, %v465
      %v477 = vpack.c.b16 %v468, %v467
      %v478 = vpack.c.b16 %v470, %v469
      %487 = vmatpush.bf16.msra.mxu0 %v478
      %488 = vmatpush.bf16.msra.mxu0 %v477
      %489 = vmatpush.bf16.msra.mxu0 %v476
      %490 = vmatpush.bf16.msra.mxu0 %v475
      %491 = vmatpush.bf16.msra.mxu0 %v474
      %492 = vmatpush.bf16.msra.mxu0 %v473
      %493 = vmatpush.bf16.msra.mxu0 %v472
      %494 = vmatpush.bf16.msra.mxu0 %v471
      %495 = vmatmul.bf16.gmra.mxu0 %v407
      %v496 = vpop.f32.mrf.mxu0
      %v497 = vadd.f32 0.0, %v496
      %v498 = vpop.f32.mrf.mxu0
      %v499 = vadd.f32 0.0, %v498
      %500 = vmatmul.bf16.gmra.mxu0 %v408
      %v501 = vpop.f32.mrf.mxu0
      %v502 = vadd.f32 0.0, %v501
      %v503 = vpop.f32.mrf.mxu0
      %v504 = vadd.f32 0.0, %v503
      %505 = vmatmul.bf16.gmra.mxu0 %v409
      %v506 = vpop.f32.mrf.mxu0
      %v507 = vadd.f32 0.0, %v506
      %v508 = vpop.f32.mrf.mxu0
      %v509 = vadd.f32 0.0, %v508
      %510 = vmatmul.bf16.gmra.mxu0 %v410
      %v511 = vpop.f32.mrf.mxu0
      %v512 = vadd.f32 0.0, %v511
      %v513 = vpop.f32.mrf.mxu0
      %v514 = vadd.f32 0.0, %v513
      %515 = vmatmul.bf16.gmra.mxu0 %v411
      %v516 = vpop.f32.mrf.mxu0
      %v517 = vadd.f32 0.0, %v516
      %v518 = vpop.f32.mrf.mxu0
      %v519 = vadd.f32 0.0, %v518
      %520 = vmatmul.bf16.gmra.mxu0 %v412
      %v521 = vpop.f32.mrf.mxu0
      %v522 = vadd.f32 0.0, %v521
      %v523 = vpop.f32.mrf.mxu0
      %v524 = vadd.f32 0.0, %v523
      %525 = vmatmul.bf16.gmra.mxu0 %v413
      %v526 = vpop.f32.mrf.mxu0
      %v527 = vadd.f32 0.0, %v526
      %v528 = vpop.f32.mrf.mxu0
      %v529 = vadd.f32 0.0, %v528
      %530 = vmatmul.bf16.gmra.mxu0 %v414
      %v531 = vpop.f32.mrf.mxu0
      %v532 = vadd.f32 0.0, %v531
      %v533 = vpop.f32.mrf.mxu0
      %v534 = vadd.f32 0.0, %v533
      %535 = vmatmul.bf16.gmra.mxu0 %v415
      %v536 = vpop.f32.mrf.mxu0
      %v537 = vadd.f32 0.0, %v536
      %v538 = vpop.f32.mrf.mxu0
      %v539 = vadd.f32 0.0, %v538
      %540 = vmatmul.bf16.gmra.mxu0 %v416
      %v541 = vpop.f32.mrf.mxu0
      %v542 = vadd.f32 0.0, %v541
      %v543 = vpop.f32.mrf.mxu0
      %v544 = vadd.f32 0.0, %v543
      %545 = vmatmul.bf16.gmra.mxu0 %v417
      %v546 = vpop.f32.mrf.mxu0
      %v547 = vadd.f32 0.0, %v546
      %v548 = vpop.f32.mrf.mxu0
      %v549 = vadd.f32 0.0, %v548
      %550 = vmatmul.bf16.gmra.mxu0 %v418
      %v551 = vpop.f32.mrf.mxu0
      %v552 = vadd.f32 0.0, %v551
      %v553 = vpop.f32.mrf.mxu0
      %v554 = vadd.f32 0.0, %v553
      %555 = vmatmul.bf16.gmra.mxu0 %v419
      %v556 = vpop.f32.mrf.mxu0
      %v557 = vadd.f32 0.0, %v556
      %v558 = vpop.f32.mrf.mxu0
      %v559 = vadd.f32 0.0, %v558
      %560 = vmatmul.bf16.gmra.mxu0 %v420
      %v561 = vpop.f32.mrf.mxu0
      %v562 = vadd.f32 0.0, %v561
      %v563 = vpop.f32.mrf.mxu0
      %v564 = vadd.f32 0.0, %v563
      %565 = vmatmul.bf16.gmra.mxu0 %v421
      %v566 = vpop.f32.mrf.mxu0
      %v567 = vadd.f32 0.0, %v566
      %v568 = vpop.f32.mrf.mxu0
      %v569 = vadd.f32 0.0, %v568
      %570 = vmatmul.bf16.gmra.mxu0 %v422
      %v571 = vpop.f32.mrf.mxu0
      %v572 = vadd.f32 0.0, %v571
      %v573 = vpop.f32.mrf.mxu0
      %v574 = vadd.f32 0.0, %v573
      %575 = vdwg.mxu0
      %v576 = vpack.c.bf16 %v497, %v497
      %v577 = vpack.c.bf16 %v499, %v499
      %v578 = vpack.c.bf16 %v502, %v502
      %v579 = vpack.c.bf16 %v504, %v504
      %v580 = vpack.c.bf16 %v507, %v507
      %v581 = vpack.c.bf16 %v509, %v509
      %v582 = vpack.c.bf16 %v512, %v512
      %v583 = vpack.c.bf16 %v514, %v514
      %v584 = vpack.c.bf16 %v517, %v517
      %v585 = vpack.c.bf16 %v519, %v519
      %v586 = vpack.c.bf16 %v522, %v522
      %v587 = vpack.c.bf16 %v524, %v524
      %v588 = vpack.c.bf16 %v527, %v527
      %v589 = vpack.c.bf16 %v529, %v529
      %v590 = vpack.c.bf16 %v532, %v532
      %v591 = vpack.c.bf16 %v534, %v534
      %v592 = vpack.c.bf16 %v537, %v537
      %v593 = vpack.c.bf16 %v539, %v539
      %v594 = vpack.c.bf16 %v542, %v542
      %v595 = vpack.c.bf16 %v544, %v544
      %v596 = vpack.c.bf16 %v547, %v547
      %v597 = vpack.c.bf16 %v549, %v549
      %v598 = vpack.c.bf16 %v552, %v552
      %v599 = vpack.c.bf16 %v554, %v554
      %v600 = vpack.c.bf16 %v557, %v557
      %v601 = vpack.c.bf16 %v559, %v559
      %v602 = vpack.c.bf16 %v562, %v562
      %v603 = vpack.c.bf16 %v564, %v564
      %v604 = vpack.c.bf16 %v567, %v567
      %v605 = vpack.c.bf16 %v569, %v569
      %v606 = vpack.c.bf16 %v572, %v572
      %v607 = vpack.c.bf16 %v574, %v574
      %608 = vst [vmem:[%s233] sm:$0xf] %v576
      %609 = vst [vmem:[%s233 + $0x4] sm:$0xf] %v577
      %610 = vst [vmem:[%s233 + $0x8] sm:$0xf] %v578
      %611 = vst [vmem:[%s233 + $0xc] sm:$0xf] %v579
      %612 = vst [vmem:[%s233 + $0x10] sm:$0xf] %v580
      %613 = vst [vmem:[%s233 + $0x14] sm:$0xf] %v581
      %614 = vst [vmem:[%s233 + $0x18] sm:$0xf] %v582
      %615 = vst [vmem:[%s233 + $0x1c] sm:$0xf] %v583
      %616 = vst [vmem:[%s233 + $0x20] sm:$0xf] %v584
      %617 = vst [vmem:[%s233 + $0x24] sm:$0xf] %v585
      %618 = vst [vmem:[%s233 + $0x28] sm:$0xf] %v586
      %619 = vst [vmem:[%s233 + $0x2c] sm:$0xf] %v587
      %620 = vst [vmem:[%s233 + $0x30] sm:$0xf] %v588
      %621 = vst [vmem:[%s233 + $0x34] sm:$0xf] %v589
      %622 = vst [vmem:[%s233 + $0x38] sm:$0xf] %v590
      %623 = vst [vmem:[%s233 + $0x3c] sm:$0xf] %v591
      %624 = vst [vmem:[%s233 + $0x40] sm:$0xf] %v592
      %625 = vst [vmem:[%s233 + $0x44] sm:$0xf] %v593
      %626 = vst [vmem:[%s233 + $0x48] sm:$0xf] %v594
      %627 = vst [vmem:[%s233 + $0x4c] sm:$0xf] %v595
      %628 = vst [vmem:[%s233 + $0x50] sm:$0xf] %v596
      %629 = vst [vmem:[%s233 + $0x54] sm:$0xf] %v597
      %630 = vst [vmem:[%s233 + $0x58] sm:$0xf] %v598
      %631 = vst [vmem:[%s233 + $0x5c] sm:$0xf] %v599
      %632 = vst [vmem:[%s233 + $0x60] sm:$0xf] %v600
      %633 = vst [vmem:[%s233 + $0x64] sm:$0xf] %v601
      %634 = vst [vmem:[%s233 + $0x68] sm:$0xf] %v602
      %635 = vst [vmem:[%s233 + $0x6c] sm:$0xf] %v603
      %636 = vst [vmem:[%s233 + $0x70] sm:$0xf] %v604
      %637 = vst [vmem:[%s233 + $0x74] sm:$0xf] %v605
      %638 = vst [vmem:[%s233 + $0x78] sm:$0xf] %v606
      %639 = vst [vmem:[%s233 + $0x7c] sm:$0xf] %v607
      %v640 = vadd.f32 %v497, %v499
      %v641 = vadd.f32 %v640, %v502
      %v642 = vadd.f32 %v641, %v504
      %v643 = vadd.f32 %v642, %v507
      %v644 = vadd.f32 %v643, %v509
      %v645 = vadd.f32 %v644, %v512
      %v646 = vadd.f32 %v645, %v514
      %v647 = vadd.f32 %v646, %v517
      %v648 = vadd.f32 %v647, %v519
      %v649 = vadd.f32 %v648, %v522
      %v650 = vadd.f32 %v649, %v524
      %v651 = vadd.f32 %v650, %v527
      %v652 = vadd.f32 %v651, %v529
      %v653 = vadd.f32 %v652, %v532
      %v654 = vadd.f32 %v653, %v534
      %v655 = vadd.f32 %v654, %v537
      %v656 = vadd.f32 %v655, %v539
      %v657 = vadd.f32 %v656, %v542
      %v658 = vadd.f32 %v657, %v544
      %v659 = vadd.f32 %v658, %v547
      %v660 = vadd.f32 %v659, %v549
      %v661 = vadd.f32 %v660, %v552
      %v662 = vadd.f32 %v661, %v554
      %v663 = vadd.f32 %v662, %v557
      %v664 = vadd.f32 %v663, %v559
      %v665 = vadd.f32 %v664, %v562
      %v666 = vadd.f32 %v665, %v564
      %v667 = vadd.f32 %v666, %v567
      %v668 = vadd.f32 %v667, %v569
      %v669 = vadd.f32 %v668, %v572
      %v670 = vadd.f32 %v669, %v574
      %v671 = vrot.slane %v670, 4
      %v672 = vadd.f32 %v670, %v671
      %v673 = vrot.slane %v672, 2
      %v674 = vadd.f32 %v672, %v673
      %v675 = vrot.slane %v674, 1
      %v676 = vadd.f32 %v674, %v675
      %v677 = vmul.f32 %v497, %v497
      %v678 = vmul.f32 %v499, %v499
      %v679 = vmul.f32 %v502, %v502
      %v680 = vmul.f32 %v504, %v504
      %v681 = vmul.f32 %v507, %v507
      %v682 = vmul.f32 %v509, %v509
      %v683 = vmul.f32 %v512, %v512
      %v684 = vmul.f32 %v514, %v514
      %v685 = vmul.f32 %v517, %v517
      %v686 = vmul.f32 %v519, %v519
      %v687 = vmul.f32 %v522, %v522
      %v688 = vmul.f32 %v524, %v524
      %v689 = vmul.f32 %v527, %v527
      %v690 = vmul.f32 %v529, %v529
      %v691 = vmul.f32 %v532, %v532
      %v692 = vmul.f32 %v534, %v534
      %v693 = vmul.f32 %v537, %v537
      %v694 = vmul.f32 %v539, %v539
      %v695 = vmul.f32 %v542, %v542
      %v696 = vmul.f32 %v544, %v544
      %v697 = vmul.f32 %v547, %v547
      %v698 = vmul.f32 %v549, %v549
      %v699 = vmul.f32 %v552, %v552
      %v700 = vmul.f32 %v554, %v554
      %v701 = vmul.f32 %v557, %v557
      %v702 = vmul.f32 %v559, %v559
      %v703 = vmul.f32 %v562, %v562
      %v704 = vmul.f32 %v564, %v564
      %v705 = vmul.f32 %v567, %v567
      %v706 = vmul.f32 %v569, %v569
      %v707 = vmul.f32 %v572, %v572
      %v708 = vmul.f32 %v574, %v574
      %v709 = vadd.f32 %v677, %v678
      %v710 = vadd.f32 %v709, %v679
      %v711 = vadd.f32 %v710, %v680
      %v712 = vadd.f32 %v711, %v681
      %v713 = vadd.f32 %v712, %v682
      %v714 = vadd.f32 %v713, %v683
      %v715 = vadd.f32 %v714, %v684
      %v716 = vadd.f32 %v715, %v685
      %v717 = vadd.f32 %v716, %v686
      %v718 = vadd.f32 %v717, %v687
      %v719 = vadd.f32 %v718, %v688
      %v720 = vadd.f32 %v719, %v689
      %v721 = vadd.f32 %v720, %v690
      %v722 = vadd.f32 %v721, %v691
      %v723 = vadd.f32 %v722, %v692
      %v724 = vadd.f32 %v723, %v693
      %v725 = vadd.f32 %v724, %v694
      %v726 = vadd.f32 %v725, %v695
      %v727 = vadd.f32 %v726, %v696
      %v728 = vadd.f32 %v727, %v697
      %v729 = vadd.f32 %v728, %v698
      %v730 = vadd.f32 %v729, %v699
      %v731 = vadd.f32 %v730, %v700
      %v732 = vadd.f32 %v731, %v701
      %v733 = vadd.f32 %v732, %v702
      %v734 = vadd.f32 %v733, %v703
      %v735 = vadd.f32 %v734, %v704
      %v736 = vadd.f32 %v735, %v705
      %v737 = vadd.f32 %v736, %v706
      %v738 = vadd.f32 %v737, %v707
      %v739 = vadd.f32 %v738, %v708
      %v740 = vrot.slane %v739, 4
      %v741 = vadd.f32 %v739, %v740
      %v742 = vrot.slane %v741, 2
      %v743 = vadd.f32 %v741, %v742
      %v744 = vrot.slane %v743, 1
      %v745 = vadd.f32 %v743, %v744
      %vm746 = vcmask 1040384
      %v747 = vsel %vm746, %v676, %v745
      %748 = vst [vmem:[%s238] sm:$0x3] %v747
      %s749 = smul.u32 32, %s17
      %p750 = scmp.lt.s32.totalorder %s749, 63
      %s751 = scalar_select %p750, %s749, 63
      %s752 = smul.addr %s751, 4
      %s753 = scalar_lea.vmem %s4, %s752
      %p754 = scmp.lt.s32.totalorder %s17, 1
      %s755 = scalar_select %p754, %s17, 1
      %s756 = smul.addr %s755, 2
      %s757 = scalar_lea.vmem %s5, %s756
      // Predicated region
      $region37: #{resnet_block50_forward.6} parent=35 // pred_check
        %p758 = pneg %p124
      $region38: #{resnet_block50_forward.6} parent=35 // pred_check_branch
        %760 = sbr.rel (%p758) target = $region40
      $region39: #{resnet_block50_forward.6} parent=35 // pred_region
        %s761 = smul.u32 32, %s17
      $region40: #{resnet_block50_forward.6} parent=35 // pred_fallthru
        _
      // Predicated region
      $region41: #{resnet_block50_forward.6} parent=35 // pred_check
        %p762 = pneg %p150
      $region42: #{resnet_block50_forward.6} parent=35 // pred_check_branch
        %764 = sbr.rel (%p762) target = $region44
      $region43: #{resnet_block50_forward.6} parent=35 // pred_region
        _
      $region44: #{resnet_block50_forward.6} parent=35 // pred_fallthru
        _
    $region36: #{resnet_block50_forward.6} parent=5 // pred_fallthru
      _
    %p765 = scmp.le.s32.totalorder 2, %s12
    // Predicated region
    $region45: #{resnet_block50_forward.6} parent=5 // pred_check
      %p766 = pneg %p765
    $region46: #{resnet_block50_forward.6} parent=5 // pred_check_branch
      %768 = sbr.rel (%p766) target = $region48
    $region47: #{resnet_block50_forward.6} parent=5 // pred_region
      %s769 = ssub.s32 %s12, 2
      // Predicated region
      $region49: #{resnet_block50_forward.6} parent=47 // pred_check
        %p770 = pneg %p130
      $region50: #{resnet_block50_forward.6} parent=47 // pred_check_branch
        %772 = sbr.rel (%p770) target = $region52
      $region51: #{resnet_block50_forward.6} parent=47 // pred_region
        %s773 = smul.u32 32, %s18
        %p774 = scmp.lt.s32.totalorder %s773, 63
        %s775 = scalar_select %p774, %s773, 63
        %s776 = smul.addr %s775, 4
        %s777 = scalar_lea.vmem %s4, %s776
      $region52: #{resnet_block50_forward.6} parent=47 // pred_fallthru
        _
      // Predicated region
      $region53: #{resnet_block50_forward.6} parent=47 // pred_check
        %p778 = pneg %p156
      $region54: #{resnet_block50_forward.6} parent=47 // pred_check_branch
        %780 = sbr.rel (%p778) target = $region56
      $region55: #{resnet_block50_forward.6} parent=47 // pred_region
        %p781 = scmp.lt.s32.totalorder %s18, 1
        %s782 = scalar_select %p781, %s18, 1
        %s783 = smul.addr %s782, 2
        %s784 = scalar_lea.vmem %s5, %s783
      $region56: #{resnet_block50_forward.6} parent=47 // pred_fallthru
        _
    $region48: #{resnet_block50_forward.6} parent=5 // pred_fallthru
      _
  $region6: #{resnet_block50_forward.6} parent=0 // loop_footer
    %s16 = sadd.s32 1, %s12
  $region7: #{resnet_block50_forward.6} parent=0 // loop_footer_branch
    %11 = sbr.rel target = $region3
  $region8: #{resnet_block50_forward.6} parent=0 // loop_exit
    _

// kernel: resnet_block50_forward.4
$region0: #{resnet_block50_forward.4}
  #allocation0 [shape = 'u32[]', space=smem, size = 0x4, offset = 0x4, fixed_abs, tag = 'smem constant byte address 0x4 - core index']
  #allocation1 [shape = 'u32[72,128]{1,0:T(1,128)}', space=vmem, size = 0x9000, scoped, tag = 'internal scratch']
  %s0 = inlined_call_operand.vmem [shape: f32[2,128,256], index: 0, kind: input, shape index: {}]
  %s1 = inlined_call_operand.vmem [shape: bf16[128,128], index: 1, kind: input, shape index: {}]
  %s2 = inlined_call_operand.vmem [shape: bf16[2,256,128], index: 2, kind: output, shape index: {0}]
  %s3 = inlined_call_operand.vmem [shape: f32[2,2,128], index: 3, kind: output, shape index: {1}]
  %4 = xla_tuple %s2, %s3
  %s5 = sld [smem:[#allocation0]]
  $region49: #{resnet_block50_forward.4} parent=0
    _
  %s7 = ssub.s32 1, %s5
  %s8 = scalar_select 0, %s7, %s5
  loop: start=0, step=1, limit=4
  $region2: #{resnet_block50_forward.4} parent=0 // loop_pre_header
    _
  $region3: #{resnet_block50_forward.4} parent=0 // loop_header
    %s10 = sphi 0, %s14
    %p11 = scmp.ge.s32.totalorder %s10, 4
    %s20 = sphi 0, %s22
    %s23 = sphi 0, %s20
    %s24 = sphi 0, %s23
    %s40 = sphi 0, %s24
    %s44 = sphi 0, %s44
    %s46 = sphi 0, %s44
    %s47 = sphi 0, %s46
    %s61 = sphi 0, %s47
    %s67 = sphi 0, %s69
    %s70 = sphi 0, %s67
    %s71 = sphi 0, %s70
    %s87 = sphi 0, %s71
    %s93 = sphi 0, %s95
    %s96 = sphi 0, %s93
    %s97 = sphi 0, %s96
    %s113 = sphi 0, %s97
  $region4: #{resnet_block50_forward.4} parent=0 // loop_header_branch
    %13 = sbr.rel (%p11) target = $region8
  $region5: #{resnet_block50_forward.4} parent=0 // loop_body
    %s15 = ssub.s32 %s10, 1
    %s16 = ssub.s32 %s10, 2
    %s17 = sadd.s32 %s10, 1
    %s18 = ssub.s32 %s10, %s17
    %p19 = scmp.eq.s32.totalorder %s18, 0
    %s21 = sadd.s32 %s20, 1
    %s22 = scalar_select %p19, %s20, %s21
    %p25 = pneg %p19
    %p26 = scmp.eq.s32.totalorder %s10, 1
    %p27 = por %p25, %p26
    %p28 = scmp.ne.s32.totalorder %s20, %s23
    %p29 = scmp.eq.s32.totalorder %s10, 0
    %p30 = por %p28, %p29
    %p31 = scmp.ne.s32.totalorder %s20, %s23
    %p32 = scmp.eq.s32.totalorder %s15, 1
    %p33 = por %p31, %p32
    %p34 = scmp.ne.s32.totalorder %s23, %s24
    %p35 = scmp.eq.s32.totalorder %s15, 0
    %p36 = por %p34, %p35
    %p37 = scmp.ne.s32.totalorder %s23, %s24
    %p38 = scmp.eq.s32.totalorder %s16, 1
    %p39 = por %p37, %p38
    %p41 = scmp.ne.s32.totalorder %s24, %s40
    %p42 = scmp.eq.s32.totalorder %s16, 0
    %p43 = por %p41, %p42
    %s45 = sadd.s32 %s44, 1
    %p48 = scmp.eq.s32.totalorder %s10, 1
    %p49 = scmp.ne.s32.totalorder %s44, %s46
    %p50 = scmp.eq.s32.totalorder %s10, 0
    %p51 = por %p49, %p50
    %p52 = scmp.ne.s32.totalorder %s44, %s46
    %p53 = scmp.eq.s32.totalorder %s15, 1
    %p54 = por %p52, %p53
    %p55 = scmp.ne.s32.totalorder %s46, %s47
    %p56 = scmp.eq.s32.totalorder %s15, 0
    %p57 = por %p55, %p56
    %p58 = scmp.ne.s32.totalorder %s46, %s47
    %p59 = scmp.eq.s32.totalorder %s16, 1
    %p60 = por %p58, %p59
    %p62 = scmp.ne.s32.totalorder %s47, %s61
    %p63 = scmp.eq.s32.totalorder %s16, 0
    %p64 = por %p62, %p63
    %s65 = ssub.s32 %s10, %s17
    %p66 = scmp.eq.s32.totalorder %s65, 0
    %s68 = sadd.s32 %s67, 1
    %s69 = scalar_select %p66, %s67, %s68
    %p72 = pneg %p66
    %p73 = scmp.eq.s32.totalorder %s10, 1
    %p74 = por %p72, %p73
    %p75 = scmp.ne.s32.totalorder %s67, %s70
    %p76 = scmp.eq.s32.totalorder %s10, 0
    %p77 = por %p75, %p76
    %p78 = scmp.ne.s32.totalorder %s67, %s70
    %p79 = scmp.eq.s32.totalorder %s15, 1
    %p80 = por %p78, %p79
    %p81 = scmp.ne.s32.totalorder %s70, %s71
    %p82 = scmp.eq.s32.totalorder %s15, 0
    %p83 = por %p81, %p82
    %p84 = scmp.ne.s32.totalorder %s70, %s71
    %p85 = scmp.eq.s32.totalorder %s16, 1
    %p86 = por %p84, %p85
    %p88 = scmp.ne.s32.totalorder %s71, %s87
    %p89 = scmp.eq.s32.totalorder %s16, 0
    %p90 = por %p88, %p89
    %s91 = ssub.s32 %s10, %s17
    %p92 = scmp.eq.s32.totalorder %s91, 0
    %s94 = sadd.s32 %s93, 1
    %s95 = scalar_select %p92, %s93, %s94
    %p98 = pneg %p92
    %p99 = scmp.eq.s32.totalorder %s10, 1
    %p100 = por %p98, %p99
    %p101 = scmp.ne.s32.totalorder %s93, %s96
    %p102 = scmp.eq.s32.totalorder %s10, 0
    %p103 = por %p101, %p102
    %p104 = scmp.ne.s32.totalorder %s93, %s96
    %p105 = scmp.eq.s32.totalorder %s15, 1
    %p106 = por %p104, %p105
    %p107 = scmp.ne.s32.totalorder %s96, %s97
    %p108 = scmp.eq.s32.totalorder %s15, 0
    %p109 = por %p107, %p108
    %p110 = scmp.ne.s32.totalorder %s96, %s97
    %p111 = scmp.eq.s32.totalorder %s16, 1
    %p112 = por %p110, %p111
    %p114 = scmp.ne.s32.totalorder %s97, %s113
    %p115 = scmp.eq.s32.totalorder %s16, 0
    %p116 = por %p114, %p115
    %p117 = scmp.le.s32.totalorder 1, %s10
    %p118 = scmp.lt.s32.totalorder %s10, 3
    %p119 = pnand %p117, %p118
    %p120 = pneg %p119
    // Predicated region
    $region9: #{resnet_block50_forward.4} parent=5 // pred_check
      _
    $region10: #{resnet_block50_forward.4} parent=5 // pred_check_branch
      %122 = sbr.rel (%p119) target = $region12
    $region11: #{resnet_block50_forward.4} parent=5 // pred_region
      %s123 = ssub.s32 %s10, 1
      // Predicated region
      $region13: #{resnet_block50_forward.4} parent=11 // pred_check
        %p124 = pneg %p57
      $region14: #{resnet_block50_forward.4} parent=11 // pred_check_branch
        %126 = sbr.rel (%p124) target = $region16
      $region15: #{resnet_block50_forward.4} parent=11 // pred_region
        _
      $region16: #{resnet_block50_forward.4} parent=11 // pred_fallthru
        _
    $region12: #{resnet_block50_forward.4} parent=5 // pred_fallthru
      _
    %p127 = scmp.lt.s32.totalorder %s10, 2
    // Predicated region
    $region17: #{resnet_block50_forward.4} parent=5 // pred_check
      %p128 = pneg %p127
    $region18: #{resnet_block50_forward.4} parent=5 // pred_check_branch
      %130 = sbr.rel (%p128) target = $region20
    $region19: #{resnet_block50_forward.4} parent=5 // pred_region
      // Predicated region
      $region21: #{resnet_block50_forward.4} parent=19 // pred_check
        %p131 = pneg %p30
      $region22: #{resnet_block50_forward.4} parent=19 // pred_check_branch
        %133 = sbr.rel (%p131) target = $region24
      $region23: #{resnet_block50_forward.4} parent=19 // pred_region
        %p134 = scmp.lt.s32.totalorder %s10, 1
        %s135 = scalar_select %p134, %s10, 1
        %s136 = smul.addr %s135, 32
        %s137 = smul.addr %s136, 8
        %s138 = scalar_lea.vmem %s0, %s137
      $region24: #{resnet_block50_forward.4} parent=19 // pred_fallthru
        _
    $region20: #{resnet_block50_forward.4} parent=5 // pred_fallthru
      _
    %p139 = scmp.le.s32.totalorder 1, %s10
    %p140 = scmp.lt.s32.totalorder %s10, 3
    %p141 = pnand %p139, %p140
    %p142 = pneg %p141
    // Predicated region
    $region25: #{resnet_block50_forward.4} parent=5 // pred_check
      _
    $region26: #{resnet_block50_forward.4} parent=5 // pred_check_branch
      %144 = sbr.rel (%p141) target = $region28
    $region27: #{resnet_block50_forward.4} parent=5 // pred_region
      %s145 = ssub.s32 %s10, 1
      %p146 = scmp.lt.s32.totalorder %s15, 1
      %s147 = scalar_select %p146, %s15, 1
      %s148 = smul.addr %s147, 32
      %s149 = smul.addr %s148, 8
      %s150 = scalar_lea.vmem %s0, %s149
      %p151 = pneg %p36
      %p152 = pneg %p33
      %p153 = pneg %p57
      %p154 = pneg %p54
      %p155 = pneg %p83
      %p156 = pneg %p80
      %p157 = scmp.lt.s32.totalorder %s15, 1
      %s158 = scalar_select %p157, %s15, 1
      %s159 = smul.addr %s158, 32
      %s160 = smul.addr %s159, 4
      %s161 = scalar_lea.vmem %s2, %s160
      %p162 = pneg %p109
      %p163 = pneg %p106
      %p164 = scmp.lt.s32.totalorder %s15, 1
      %s165 = scalar_select %p164, %s15, 1
      %s166 = smul.addr %s165, 2
      %s167 = scalar_lea.vmem %s3, %s166
      %p168 = scmp.lt.s32.totalorder %s15, 1
      %s169 = scalar_select %p168, %s15, 1
      %s170 = smul.addr %s169, 32
      %s171 = smul.addr %s170, 8
      %s172 = scalar_lea.vmem %s0, %s171
      %p173 = scmp.lt.s32.totalorder %s15, 1
      %s174 = scalar_select %p173, %s15, 1
      %s175 = smul.addr %s174, 32
      %s176 = smul.addr %s175, 4
      %s177 = scalar_lea.vmem %s2, %s176
      %p178 = scmp.lt.s32.totalorder %s15, 1
      %s179 = scalar_select %p178, %s15, 1
      %s180 = smul.addr %s179, 2
      %s181 = scalar_lea.vmem %s3, %s180
      %v182 = vld [vmem:[%s172] sm:$0xff]
      %v183 = vld [vmem:[%s172 + $0x8] sm:$0xff]
      %v184 = vld [vmem:[%s172 + $0x10] sm:$0xff]
      %v185 = vld [vmem:[%s172 + $0x18] sm:$0xff]
      %v186 = vld [vmem:[%s172 + $0x20] sm:$0xff]
      %v187 = vld [vmem:[%s172 + $0x28] sm:$0xff]
      %v188 = vld [vmem:[%s172 + $0x30] sm:$0xff]
      %v189 = vld [vmem:[%s172 + $0x38] sm:$0xff]
      %v190 = vld [vmem:[%s172 + $0x40] sm:$0xff]
      %v191 = vld [vmem:[%s172 + $0x48] sm:$0xff]
      %v192 = vld [vmem:[%s172 + $0x50] sm:$0xff]
      %v193 = vld [vmem:[%s172 + $0x58] sm:$0xff]
      %v194 = vld [vmem:[%s172 + $0x60] sm:$0xff]
      %v195 = vld [vmem:[%s172 + $0x68] sm:$0xff]
      %v196 = vld [vmem:[%s172 + $0x70] sm:$0xff]
      %v197 = vld [vmem:[%s172 + $0x78] sm:$0xff]
      %v198 = vld [vmem:[%s172 + $0x80] sm:$0xff]
      %v199 = vld [vmem:[%s172 + $0x88] sm:$0xff]
      %v200 = vld [vmem:[%s172 + $0x90] sm:$0xff]
      %v201 = vld [vmem:[%s172 + $0x98] sm:$0xff]
      %v202 = vld [vmem:[%s172 + $0xa0] sm:$0xff]
      %v203 = vld [vmem:[%s172 + $0xa8] sm:$0xff]
      %v204 = vld [vmem:[%s172 + $0xb0] sm:$0xff]
      %v205 = vld [vmem:[%s172 + $0xb8] sm:$0xff]
      %v206 = vld [vmem:[%s172 + $0xc0] sm:$0xff]
      %v207 = vld [vmem:[%s172 + $0xc8] sm:$0xff]
      %v208 = vld [vmem:[%s172 + $0xd0] sm:$0xff]
      %v209 = vld [vmem:[%s172 + $0xd8] sm:$0xff]
      %v210 = vld [vmem:[%s172 + $0xe0] sm:$0xff]
      %v211 = vld [vmem:[%s172 + $0xe8] sm:$0xff]
      %v212 = vld [vmem:[%s172 + $0xf0] sm:$0xff]
      %v213 = vld [vmem:[%s172 + $0xf8] sm:$0xff]
      %214 = vxpose.xlu0.b32.start [1/16] %v182, 128
      %215 = vxpose.xlu0.b32.cont [2/16] %v184, 128
      %216 = vxpose.xlu0.b32.cont [3/16] %v186, 128
      %217 = vxpose.xlu0.b32.cont [4/16] %v188, 128
      %218 = vxpose.xlu0.b32.cont [5/16] %v190, 128
      %219 = vxpose.xlu0.b32.cont [6/16] %v192, 128
      %220 = vxpose.xlu0.b32.cont [7/16] %v194, 128
      %221 = vxpose.xlu0.b32.cont [8/16] %v196, 128
      %222 = vxpose.xlu0.b32.cont [9/16] %v198, 128
      %223 = vxpose.xlu0.b32.cont [10/16] %v200, 128
      %224 = vxpose.xlu0.b32.cont [11/16] %v202, 128
      %225 = vxpose.xlu0.b32.cont [12/16] %v204, 128
      %226 = vxpose.xlu0.b32.cont [13/16] %v206, 128
      %227 = vxpose.xlu0.b32.cont [14/16] %v208, 128
      %228 = vxpose.xlu0.b32.cont [15/16] %v210, 128
      %229 = vxpose.xlu0.b32.end [16/16] %v212, 128
      %v230 = vpop.trf.xlu0
      %v231 = vpop.trf.xlu0
      %v232 = vpop.trf.xlu0
      %v233 = vpop.trf.xlu0
      %v234 = vpop.trf.xlu0
      %v235 = vpop.trf.xlu0
      %v236 = vpop.trf.xlu0
      %v237 = vpop.trf.xlu0
      %v238 = vpop.trf.xlu0
      %v239 = vpop.trf.xlu0
      %v240 = vpop.trf.xlu0
      %v241 = vpop.trf.xlu0
      %v242 = vpop.trf.xlu0
      %v243 = vpop.trf.xlu0
      %v244 = vpop.trf.xlu0
      %v245 = vpop.trf.xlu0
      %246 = vxpose.xlu0.b32.start [1/16] %v183, 128
      %247 = vxpose.xlu0.b32.cont [2/16] %v185, 128
      %248 = vxpose.xlu0.b32.cont [3/16] %v187, 128
      %249 = vxpose.xlu0.b32.cont [4/16] %v189, 128
      %250 = vxpose.xlu0.b32.cont [5/16] %v191, 128
      %251 = vxpose.xlu0.b32.cont [6/16] %v193, 128
      %252 = vxpose.xlu0.b32.cont [7/16] %v195, 128
      %253 = vxpose.xlu0.b32.cont [8/16] %v197, 128
      %254 = vxpose.xlu0.b32.cont [9/16] %v199, 128
      %255 = vxpose.xlu0.b32.cont [10/16] %v201, 128
      %256 = vxpose.xlu0.b32.cont [11/16] %v203, 128
      %257 = vxpose.xlu0.b32.cont [12/16] %v205, 128
      %258 = vxpose.xlu0.b32.cont [13/16] %v207, 128
      %259 = vxpose.xlu0.b32.cont [14/16] %v209, 128
      %260 = vxpose.xlu0.b32.cont [15/16] %v211, 128
      %261 = vxpose.xlu0.b32.end [16/16] %v213, 128
      %v262 = vpop.trf.xlu0
      %v263 = vpop.trf.xlu0
      %v264 = vpop.trf.xlu0
      %v265 = vpop.trf.xlu0
      %v266 = vpop.trf.xlu0
      %v267 = vpop.trf.xlu0
      %v268 = vpop.trf.xlu0
      %v269 = vpop.trf.xlu0
      %v270 = vpop.trf.xlu0
      %v271 = vpop.trf.xlu0
      %v272 = vpop.trf.xlu0
      %v273 = vpop.trf.xlu0
      %v274 = vpop.trf.xlu0
      %v275 = vpop.trf.xlu0
      %v276 = vpop.trf.xlu0
      %v277 = vpop.trf.xlu0
      %v278 = vpack.c.bf16 %v231, %v230
      %v279 = vpack.c.bf16 %v233, %v232
      %v280 = vpack.c.bf16 %v235, %v234
      %v281 = vpack.c.bf16 %v237, %v236
      %v282 = vpack.c.bf16 %v239, %v238
      %v283 = vpack.c.bf16 %v241, %v240
      %v284 = vpack.c.bf16 %v243, %v242
      %v285 = vpack.c.bf16 %v245, %v244
      %v286 = vpack.c.bf16 %v263, %v262
      %v287 = vpack.c.bf16 %v265, %v264
      %v288 = vpack.c.bf16 %v267, %v266
      %v289 = vpack.c.bf16 %v269, %v268
      %v290 = vpack.c.bf16 %v271, %v270
      %v291 = vpack.c.bf16 %v273, %v272
      %v292 = vpack.c.bf16 %v275, %v274
      %v293 = vpack.c.bf16 %v277, %v276
      %v294 = vld [vmem:[%s1] sm:$0xf]
      %v295 = vld [vmem:[%s1 + $0x4] sm:$0xf]
      %v296 = vld [vmem:[%s1 + $0x8] sm:$0xf]
      %v297 = vld [vmem:[%s1 + $0xc] sm:$0xf]
      %v298 = vld [vmem:[%s1 + $0x10] sm:$0xf]
      %v299 = vld [vmem:[%s1 + $0x14] sm:$0xf]
      %v300 = vld [vmem:[%s1 + $0x18] sm:$0xf]
      %v301 = vld [vmem:[%s1 + $0x1c] sm:$0xf]
      %v302 = vld [vmem:[%s1 + $0x20] sm:$0xf]
      %v303 = vld [vmem:[%s1 + $0x24] sm:$0xf]
      %v304 = vld [vmem:[%s1 + $0x28] sm:$0xf]
      %v305 = vld [vmem:[%s1 + $0x2c] sm:$0xf]
      %v306 = vld [vmem:[%s1 + $0x30] sm:$0xf]
      %v307 = vld [vmem:[%s1 + $0x34] sm:$0xf]
      %v308 = vld [vmem:[%s1 + $0x38] sm:$0xf]
      %v309 = vld [vmem:[%s1 + $0x3c] sm:$0xf]
      %v326 = vunpack.c.l.b16 %v294
      %v327 = vunpack.c.l.b16 %v295
      %v328 = vunpack.c.l.b16 %v296
      %v329 = vunpack.c.l.b16 %v297
      %v330 = vunpack.c.l.b16 %v298
      %v331 = vunpack.c.l.b16 %v299
      %v332 = vunpack.c.l.b16 %v300
      %v333 = vunpack.c.l.b16 %v301
      %v334 = vunpack.c.l.b16 %v302
      %v335 = vunpack.c.l.b16 %v303
      %v336 = vunpack.c.l.b16 %v304
      %v337 = vunpack.c.l.b16 %v305
      %v338 = vunpack.c.l.b16 %v306
      %v339 = vunpack.c.l.b16 %v307
      %v340 = vunpack.c.l.b16 %v308
      %v341 = vunpack.c.l.b16 %v309
      %v342 = vpack.c.b16 %v327, %v326
      %v343 = vpack.c.b16 %v329, %v328
      %v344 = vpack.c.b16 %v331, %v330
      %v345 = vpack.c.b16 %v333, %v332
      %v346 = vpack.c.b16 %v335, %v334
      %v347 = vpack.c.b16 %v337, %v336
      %v348 = vpack.c.b16 %v339, %v338
      %v349 = vpack.c.b16 %v341, %v340
      %358 = vmatpush.bf16.msra.mxu0 %v349
      %359 = vmatpush.bf16.msra.mxu0 %v348
      %360 = vmatpush.bf16.msra.mxu0 %v347
      %361 = vmatpush.bf16.msra.mxu0 %v346
      %362 = vmatpush.bf16.msra.mxu0 %v345
      %363 = vmatpush.bf16.msra.mxu0 %v344
      %364 = vmatpush.bf16.msra.mxu0 %v343
      %365 = vmatpush.bf16.msra.mxu0 %v342
      %366 = vmatmul.bf16.gmra.mxu0 %v278
      %v367 = vpop.f32.mrf.mxu0
      %v368 = vadd.f32 0.0, %v367
      %v369 = vpop.f32.mrf.mxu0
      %v370 = vadd.f32 0.0, %v369
      %371 = vmatmul.bf16.gmra.mxu0 %v279
      %v372 = vpop.f32.mrf.mxu0
      %v373 = vadd.f32 0.0, %v372
      %v374 = vpop.f32.mrf.mxu0
      %v375 = vadd.f32 0.0, %v374
      %376 = vmatmul.bf16.gmra.mxu0 %v280
      %v377 = vpop.f32.mrf.mxu0
      %v378 = vadd.f32 0.0, %v377
      %v379 = vpop.f32.mrf.mxu0
      %v380 = vadd.f32 0.0, %v379
      %381 = vmatmul.bf16.gmra.mxu0 %v281
      %v382 = vpop.f32.mrf.mxu0
      %v383 = vadd.f32 0.0, %v382
      %v384 = vpop.f32.mrf.mxu0
      %v385 = vadd.f32 0.0, %v384
      %386 = vmatmul.bf16.gmra.mxu0 %v282
      %v387 = vpop.f32.mrf.mxu0
      %v388 = vadd.f32 0.0, %v387
      %v389 = vpop.f32.mrf.mxu0
      %v390 = vadd.f32 0.0, %v389
      %391 = vmatmul.bf16.gmra.mxu0 %v283
      %v392 = vpop.f32.mrf.mxu0
      %v393 = vadd.f32 0.0, %v392
      %v394 = vpop.f32.mrf.mxu0
      %v395 = vadd.f32 0.0, %v394
      %396 = vmatmul.bf16.gmra.mxu0 %v284
      %v397 = vpop.f32.mrf.mxu0
      %v398 = vadd.f32 0.0, %v397
      %v399 = vpop.f32.mrf.mxu0
      %v400 = vadd.f32 0.0, %v399
      %401 = vmatmul.bf16.gmra.mxu0 %v285
      %v402 = vpop.f32.mrf.mxu0
      %v403 = vadd.f32 0.0, %v402
      %v404 = vpop.f32.mrf.mxu0
      %v405 = vadd.f32 0.0, %v404
      %406 = vmatmul.bf16.gmra.mxu0 %v286
      %v407 = vpop.f32.mrf.mxu0
      %v408 = vadd.f32 0.0, %v407
      %v409 = vpop.f32.mrf.mxu0
      %v410 = vadd.f32 0.0, %v409
      %411 = vmatmul.bf16.gmra.mxu0 %v287
      %v412 = vpop.f32.mrf.mxu0
      %v413 = vadd.f32 0.0, %v412
      %v414 = vpop.f32.mrf.mxu0
      %v415 = vadd.f32 0.0, %v414
      %416 = vmatmul.bf16.gmra.mxu0 %v288
      %v417 = vpop.f32.mrf.mxu0
      %v418 = vadd.f32 0.0, %v417
      %v419 = vpop.f32.mrf.mxu0
      %v420 = vadd.f32 0.0, %v419
      %421 = vmatmul.bf16.gmra.mxu0 %v289
      %v422 = vpop.f32.mrf.mxu0
      %v423 = vadd.f32 0.0, %v422
      %v424 = vpop.f32.mrf.mxu0
      %v425 = vadd.f32 0.0, %v424
      %426 = vmatmul.bf16.gmra.mxu0 %v290
      %v427 = vpop.f32.mrf.mxu0
      %v428 = vadd.f32 0.0, %v427
      %v429 = vpop.f32.mrf.mxu0
      %v430 = vadd.f32 0.0, %v429
      %431 = vmatmul.bf16.gmra.mxu0 %v291
      %v432 = vpop.f32.mrf.mxu0
      %v433 = vadd.f32 0.0, %v432
      %v434 = vpop.f32.mrf.mxu0
      %v435 = vadd.f32 0.0, %v434
      %436 = vmatmul.bf16.gmra.mxu0 %v292
      %v437 = vpop.f32.mrf.mxu0
      %v438 = vadd.f32 0.0, %v437
      %v439 = vpop.f32.mrf.mxu0
      %v440 = vadd.f32 0.0, %v439
      %441 = vmatmul.bf16.gmra.mxu0 %v293
      %v442 = vpop.f32.mrf.mxu0
      %v443 = vadd.f32 0.0, %v442
      %v444 = vpop.f32.mrf.mxu0
      %v445 = vadd.f32 0.0, %v444
      %446 = vdwg.mxu0
      %v447 = vpack.c.bf16 %v368, %v368
      %v448 = vpack.c.bf16 %v370, %v370
      %v449 = vpack.c.bf16 %v373, %v373
      %v450 = vpack.c.bf16 %v375, %v375
      %v451 = vpack.c.bf16 %v378, %v378
      %v452 = vpack.c.bf16 %v380, %v380
      %v453 = vpack.c.bf16 %v383, %v383
      %v454 = vpack.c.bf16 %v385, %v385
      %v455 = vpack.c.bf16 %v388, %v388
      %v456 = vpack.c.bf16 %v390, %v390
      %v457 = vpack.c.bf16 %v393, %v393
      %v458 = vpack.c.bf16 %v395, %v395
      %v459 = vpack.c.bf16 %v398, %v398
      %v460 = vpack.c.bf16 %v400, %v400
      %v461 = vpack.c.bf16 %v403, %v403
      %v462 = vpack.c.bf16 %v405, %v405
      %v463 = vpack.c.bf16 %v408, %v408
      %v464 = vpack.c.bf16 %v410, %v410
      %v465 = vpack.c.bf16 %v413, %v413
      %v466 = vpack.c.bf16 %v415, %v415
      %v467 = vpack.c.bf16 %v418, %v418
      %v468 = vpack.c.bf16 %v420, %v420
      %v469 = vpack.c.bf16 %v423, %v423
      %v470 = vpack.c.bf16 %v425, %v425
      %v471 = vpack.c.bf16 %v428, %v428
      %v472 = vpack.c.bf16 %v430, %v430
      %v473 = vpack.c.bf16 %v433, %v433
      %v474 = vpack.c.bf16 %v435, %v435
      %v475 = vpack.c.bf16 %v438, %v438
      %v476 = vpack.c.bf16 %v440, %v440
      %v477 = vpack.c.bf16 %v443, %v443
      %v478 = vpack.c.bf16 %v445, %v445
      %479 = vst [vmem:[%s177] sm:$0xf] %v447
      %480 = vst [vmem:[%s177 + $0x4] sm:$0xf] %v448
      %481 = vst [vmem:[%s177 + $0x8] sm:$0xf] %v449
      %482 = vst [vmem:[%s177 + $0xc] sm:$0xf] %v450
      %483 = vst [vmem:[%s177 + $0x10] sm:$0xf] %v451
      %484 = vst [vmem:[%s177 + $0x14] sm:$0xf] %v452
      %485 = vst [vmem:[%s177 + $0x18] sm:$0xf] %v453
      %486 = vst [vmem:[%s177 + $0x1c] sm:$0xf] %v454
      %487 = vst [vmem:[%s177 + $0x20] sm:$0xf] %v455
      %488 = vst [vmem:[%s177 + $0x24] sm:$0xf] %v456
      %489 = vst [vmem:[%s177 + $0x28] sm:$0xf] %v457
      %490 = vst [vmem:[%s177 + $0x2c] sm:$0xf] %v458
      %491 = vst [vmem:[%s177 + $0x30] sm:$0xf] %v459
      %492 = vst [vmem:[%s177 + $0x34] sm:$0xf] %v460
      %493 = vst [vmem:[%s177 + $0x38] sm:$0xf] %v461
      %494 = vst [vmem:[%s177 + $0x3c] sm:$0xf] %v462
      %495 = vst [vmem:[%s177 + $0x40] sm:$0xf] %v463
      %496 = vst [vmem:[%s177 + $0x44] sm:$0xf] %v464
      %497 = vst [vmem:[%s177 + $0x48] sm:$0xf] %v465
      %498 = vst [vmem:[%s177 + $0x4c] sm:$0xf] %v466
      %499 = vst [vmem:[%s177 + $0x50] sm:$0xf] %v467
      %500 = vst [vmem:[%s177 + $0x54] sm:$0xf] %v468
      %501 = vst [vmem:[%s177 + $0x58] sm:$0xf] %v469
      %502 = vst [vmem:[%s177 + $0x5c] sm:$0xf] %v470
      %503 = vst [vmem:[%s177 + $0x60] sm:$0xf] %v471
      %504 = vst [vmem:[%s177 + $0x64] sm:$0xf] %v472
      %505 = vst [vmem:[%s177 + $0x68] sm:$0xf] %v473
      %506 = vst [vmem:[%s177 + $0x6c] sm:$0xf] %v474
      %507 = vst [vmem:[%s177 + $0x70] sm:$0xf] %v475
      %508 = vst [vmem:[%s177 + $0x74] sm:$0xf] %v476
      %509 = vst [vmem:[%s177 + $0x78] sm:$0xf] %v477
      %510 = vst [vmem:[%s177 + $0x7c] sm:$0xf] %v478
      %v511 = vadd.f32 %v368, %v370
      %v512 = vadd.f32 %v511, %v373
      %v513 = vadd.f32 %v512, %v375
      %v514 = vadd.f32 %v513, %v378
      %v515 = vadd.f32 %v514, %v380
      %v516 = vadd.f32 %v515, %v383
      %v517 = vadd.f32 %v516, %v385
      %v518 = vadd.f32 %v517, %v388
      %v519 = vadd.f32 %v518, %v390
      %v520 = vadd.f32 %v519, %v393
      %v521 = vadd.f32 %v520, %v395
      %v522 = vadd.f32 %v521, %v398
      %v523 = vadd.f32 %v522, %v400
      %v524 = vadd.f32 %v523, %v403
      %v525 = vadd.f32 %v524, %v405
      %v526 = vadd.f32 %v525, %v408
      %v527 = vadd.f32 %v526, %v410
      %v528 = vadd.f32 %v527, %v413
      %v529 = vadd.f32 %v528, %v415
      %v530 = vadd.f32 %v529, %v418
      %v531 = vadd.f32 %v530, %v420
      %v532 = vadd.f32 %v531, %v423
      %v533 = vadd.f32 %v532, %v425
      %v534 = vadd.f32 %v533, %v428
      %v535 = vadd.f32 %v534, %v430
      %v536 = vadd.f32 %v535, %v433
      %v537 = vadd.f32 %v536, %v435
      %v538 = vadd.f32 %v537, %v438
      %v539 = vadd.f32 %v538, %v440
      %v540 = vadd.f32 %v539, %v443
      %v541 = vadd.f32 %v540, %v445
      %v542 = vrot.slane %v541, 4
      %v543 = vadd.f32 %v541, %v542
      %v544 = vrot.slane %v543, 2
      %v545 = vadd.f32 %v543, %v544
      %v546 = vrot.slane %v545, 1
      %v547 = vadd.f32 %v545, %v546
      %v548 = vmul.f32 %v368, %v368
      %v549 = vmul.f32 %v370, %v370
      %v550 = vmul.f32 %v373, %v373
      %v551 = vmul.f32 %v375, %v375
      %v552 = vmul.f32 %v378, %v378
      %v553 = vmul.f32 %v380, %v380
      %v554 = vmul.f32 %v383, %v383
      %v555 = vmul.f32 %v385, %v385
      %v556 = vmul.f32 %v388, %v388
      %v557 = vmul.f32 %v390, %v390
      %v558 = vmul.f32 %v393, %v393
      %v559 = vmul.f32 %v395, %v395
      %v560 = vmul.f32 %v398, %v398
      %v561 = vmul.f32 %v400, %v400
      %v562 = vmul.f32 %v403, %v403
      %v563 = vmul.f32 %v405, %v405
      %v564 = vmul.f32 %v408, %v408
      %v565 = vmul.f32 %v410, %v410
      %v566 = vmul.f32 %v413, %v413
      %v567 = vmul.f32 %v415, %v415
      %v568 = vmul.f32 %v418, %v418
      %v569 = vmul.f32 %v420, %v420
      %v570 = vmul.f32 %v423, %v423
      %v571 = vmul.f32 %v425, %v425
      %v572 = vmul.f32 %v428, %v428
      %v573 = vmul.f32 %v430, %v430
      %v574 = vmul.f32 %v433, %v433
      %v575 = vmul.f32 %v435, %v435
      %v576 = vmul.f32 %v438, %v438
      %v577 = vmul.f32 %v440, %v440
      %v578 = vmul.f32 %v443, %v443
      %v579 = vmul.f32 %v445, %v445
      %v580 = vadd.f32 %v548, %v549
      %v581 = vadd.f32 %v580, %v550
      %v582 = vadd.f32 %v581, %v551
      %v583 = vadd.f32 %v582, %v552
      %v584 = vadd.f32 %v583, %v553
      %v585 = vadd.f32 %v584, %v554
      %v586 = vadd.f32 %v585, %v555
      %v587 = vadd.f32 %v586, %v556
      %v588 = vadd.f32 %v587, %v557
      %v589 = vadd.f32 %v588, %v558
      %v590 = vadd.f32 %v589, %v559
      %v591 = vadd.f32 %v590, %v560
      %v592 = vadd.f32 %v591, %v561
      %v593 = vadd.f32 %v592, %v562
      %v594 = vadd.f32 %v593, %v563
      %v595 = vadd.f32 %v594, %v564
      %v596 = vadd.f32 %v595, %v565
      %v597 = vadd.f32 %v596, %v566
      %v598 = vadd.f32 %v597, %v567
      %v599 = vadd.f32 %v598, %v568
      %v600 = vadd.f32 %v599, %v569
      %v601 = vadd.f32 %v600, %v570
      %v602 = vadd.f32 %v601, %v571
      %v603 = vadd.f32 %v602, %v572
      %v604 = vadd.f32 %v603, %v573
      %v605 = vadd.f32 %v604, %v574
      %v606 = vadd.f32 %v605, %v575
      %v607 = vadd.f32 %v606, %v576
      %v608 = vadd.f32 %v607, %v577
      %v609 = vadd.f32 %v608, %v578
      %v610 = vadd.f32 %v609, %v579
      %v611 = vrot.slane %v610, 4
      %v612 = vadd.f32 %v610, %v611
      %v613 = vrot.slane %v612, 2
      %v614 = vadd.f32 %v612, %v613
      %v615 = vrot.slane %v614, 1
      %v616 = vadd.f32 %v614, %v615
      %vm617 = vcmask 1040384
      %v618 = vsel %vm617, %v547, %v616
      %619 = vst [vmem:[%s181] sm:$0x3] %v618
      %p620 = scmp.lt.s32.totalorder %s15, 1
      %s621 = scalar_select %p620, %s15, 1
      %s622 = smul.addr %s621, 32
      %s623 = smul.addr %s622, 4
      %s624 = scalar_lea.vmem %s2, %s623
      %p625 = scmp.lt.s32.totalorder %s15, 1
      %s626 = scalar_select %p625, %s15, 1
      %s627 = smul.addr %s626, 2
      %s628 = scalar_lea.vmem %s3, %s627
      // Predicated region
      $region29: #{resnet_block50_forward.4} parent=27 // pred_check
        %p629 = pneg %p80
      $region30: #{resnet_block50_forward.4} parent=27 // pred_check_branch
        %631 = sbr.rel (%p629) target = $region32
      $region31: #{resnet_block50_forward.4} parent=27 // pred_region
        _
      $region32: #{resnet_block50_forward.4} parent=27 // pred_fallthru
        _
      // Predicated region
      $region33: #{resnet_block50_forward.4} parent=27 // pred_check
        %p632 = pneg %p106
      $region34: #{resnet_block50_forward.4} parent=27 // pred_check_branch
        %634 = sbr.rel (%p632) target = $region36
      $region35: #{resnet_block50_forward.4} parent=27 // pred_region
        _
      $region36: #{resnet_block50_forward.4} parent=27 // pred_fallthru
        _
    $region28: #{resnet_block50_forward.4} parent=5 // pred_fallthru
      _
    %p635 = scmp.le.s32.totalorder 2, %s10
    // Predicated region
    $region37: #{resnet_block50_forward.4} parent=5 // pred_check
      %p636 = pneg %p635
    $region38: #{resnet_block50_forward.4} parent=5 // pred_check_branch
      %638 = sbr.rel (%p636) target = $region40
    $region39: #{resnet_block50_forward.4} parent=5 // pred_region
      %s639 = ssub.s32 %s10, 2
      // Predicated region
      $region41: #{resnet_block50_forward.4} parent=39 // pred_check
        %p640 = pneg %p86
      $region42: #{resnet_block50_forward.4} parent=39 // pred_check_branch
        %642 = sbr.rel (%p640) target = $region44
      $region43: #{resnet_block50_forward.4} parent=39 // pred_region
        %p643 = scmp.lt.s32.totalorder %s16, 1
        %s644 = scalar_select %p643, %s16, 1
        %s645 = smul.addr %s644, 32
        %s646 = smul.addr %s645, 4
        %s647 = scalar_lea.vmem %s2, %s646
      $region44: #{resnet_block50_forward.4} parent=39 // pred_fallthru
        _
      // Predicated region
      $region45: #{resnet_block50_forward.4} parent=39 // pred_check
        %p648 = pneg %p112
      $region46: #{resnet_block50_forward.4} parent=39 // pred_check_branch
        %650 = sbr.rel (%p648) target = $region48
      $region47: #{resnet_block50_forward.4} parent=39 // pred_region
        %p651 = scmp.lt.s32.totalorder %s16, 1
        %s652 = scalar_select %p651, %s16, 1
        %s653 = smul.addr %s652, 2
        %s654 = scalar_lea.vmem %s3, %s653
      $region48: #{resnet_block50_forward.4} parent=39 // pred_fallthru
        _
    $region40: #{resnet_block50_forward.4} parent=5 // pred_fallthru
      _
  $region6: #{resnet_block50_forward.4} parent=0 // loop_footer
    %s14 = sadd.s32 1, %s10
  $region7: #{resnet_block50_forward.4} parent=0 // loop_footer_branch
    %9 = sbr.rel target = $region3
  $region8: #{resnet_block50_forward.4} parent=0 // loop_exit
    _

// kernel: resnet_block50_forward.7
$region0: #{resnet_block50_forward.7}
  #allocation0 [shape = 'u32[]', space=smem, size = 0x4, offset = 0x4, fixed_abs, tag = 'smem constant byte address 0x4 - core index']
  #allocation1 [shape = 'u32[72,128]{1,0:T(1,128)}', space=vmem, size = 0x9000, scoped, tag = 'internal scratch']
  %s0 = inlined_call_operand.vmem [shape: bf16[2,256,128], index: 0, kind: input, shape index: {}]
  %s1 = inlined_call_operand.vmem [shape: f32[1,128], index: 1, kind: input, shape index: {}]
  %s2 = inlined_call_operand.vmem [shape: f32[1,128], index: 2, kind: input, shape index: {}]
  %s3 = inlined_call_operand.vmem [shape: f32[2,128,256], index: 3, kind: input, shape index: {}]
  %s4 = inlined_call_operand.vmem [shape: f32[2,128,256], index: 4, kind: output, shape index: {}]
  %s5 = sld [smem:[#allocation0]]
  $region49: #{resnet_block50_forward.7} parent=0
    _
  %s7 = ssub.s32 1, %s5
  %s8 = scalar_select 0, %s7, %s5
  loop: start=0, step=1, limit=4
  $region2: #{resnet_block50_forward.7} parent=0 // loop_pre_header
    _
  $region3: #{resnet_block50_forward.7} parent=0 // loop_header
    %s10 = sphi 0, %s14
    %p11 = scmp.ge.s32.totalorder %s10, 4
    %s20 = sphi 0, %s22
    %s23 = sphi 0, %s20
    %s24 = sphi 0, %s23
    %s40 = sphi 0, %s24
    %s44 = sphi 0, %s44
    %s46 = sphi 0, %s44
    %s47 = sphi 0, %s46
    %s61 = sphi 0, %s47
    %s65 = sphi 0, %s65
    %s67 = sphi 0, %s65
    %s68 = sphi 0, %s67
    %s82 = sphi 0, %s68
    %s88 = sphi 0, %s90
    %s91 = sphi 0, %s88
    %s92 = sphi 0, %s91
    %s108 = sphi 0, %s92
    %s114 = sphi 0, %s116
    %s117 = sphi 0, %s114
    %s118 = sphi 0, %s117
    %s134 = sphi 0, %s118
  $region4: #{resnet_block50_forward.7} parent=0 // loop_header_branch
    %13 = sbr.rel (%p11) target = $region8
  $region5: #{resnet_block50_forward.7} parent=0 // loop_body
    %s15 = ssub.s32 %s10, 1
    %s16 = ssub.s32 %s10, 2
    %s17 = sadd.s32 %s10, 1
    %s18 = ssub.s32 %s10, %s17
    %p19 = scmp.eq.s32.totalorder %s18, 0
    %s21 = sadd.s32 %s20, 1
    %s22 = scalar_select %p19, %s20, %s21
    %p25 = pneg %p19
    %p26 = scmp.eq.s32.totalorder %s10, 1
    %p27 = por %p25, %p26
    %p28 = scmp.ne.s32.totalorder %s20, %s23
    %p29 = scmp.eq.s32.totalorder %s10, 0
    %p30 = por %p28, %p29
    %p31 = scmp.ne.s32.totalorder %s20, %s23
    %p32 = scmp.eq.s32.totalorder %s15, 1
    %p33 = por %p31, %p32
    %p34 = scmp.ne.s32.totalorder %s23, %s24
    %p35 = scmp.eq.s32.totalorder %s15, 0
    %p36 = por %p34, %p35
    %p37 = scmp.ne.s32.totalorder %s23, %s24
    %p38 = scmp.eq.s32.totalorder %s16, 1
    %p39 = por %p37, %p38
    %p41 = scmp.ne.s32.totalorder %s24, %s40
    %p42 = scmp.eq.s32.totalorder %s16, 0
    %p43 = por %p41, %p42
    %s45 = sadd.s32 %s44, 1
    %p48 = scmp.eq.s32.totalorder %s10, 1
    %p49 = scmp.ne.s32.totalorder %s44, %s46
    %p50 = scmp.eq.s32.totalorder %s10, 0
    %p51 = por %p49, %p50
    %p52 = scmp.ne.s32.totalorder %s44, %s46
    %p53 = scmp.eq.s32.totalorder %s15, 1
    %p54 = por %p52, %p53
    %p55 = scmp.ne.s32.totalorder %s46, %s47
    %p56 = scmp.eq.s32.totalorder %s15, 0
    %p57 = por %p55, %p56
    %p58 = scmp.ne.s32.totalorder %s46, %s47
    %p59 = scmp.eq.s32.totalorder %s16, 1
    %p60 = por %p58, %p59
    %p62 = scmp.ne.s32.totalorder %s47, %s61
    %p63 = scmp.eq.s32.totalorder %s16, 0
    %p64 = por %p62, %p63
    %s66 = sadd.s32 %s65, 1
    %p69 = scmp.eq.s32.totalorder %s10, 1
    %p70 = scmp.ne.s32.totalorder %s65, %s67
    %p71 = scmp.eq.s32.totalorder %s10, 0
    %p72 = por %p70, %p71
    %p73 = scmp.ne.s32.totalorder %s65, %s67
    %p74 = scmp.eq.s32.totalorder %s15, 1
    %p75 = por %p73, %p74
    %p76 = scmp.ne.s32.totalorder %s67, %s68
    %p77 = scmp.eq.s32.totalorder %s15, 0
    %p78 = por %p76, %p77
    %p79 = scmp.ne.s32.totalorder %s67, %s68
    %p80 = scmp.eq.s32.totalorder %s16, 1
    %p81 = por %p79, %p80
    %p83 = scmp.ne.s32.totalorder %s68, %s82
    %p84 = scmp.eq.s32.totalorder %s16, 0
    %p85 = por %p83, %p84
    %s86 = ssub.s32 %s10, %s17
    %p87 = scmp.eq.s32.totalorder %s86, 0
    %s89 = sadd.s32 %s88, 1
    %s90 = scalar_select %p87, %s88, %s89
    %p93 = pneg %p87
    %p94 = scmp.eq.s32.totalorder %s10, 1
    %p95 = por %p93, %p94
    %p96 = scmp.ne.s32.totalorder %s88, %s91
    %p97 = scmp.eq.s32.totalorder %s10, 0
    %p98 = por %p96, %p97
    %p99 = scmp.ne.s32.totalorder %s88, %s91
    %p100 = scmp.eq.s32.totalorder %s15, 1
    %p101 = por %p99, %p100
    %p102 = scmp.ne.s32.totalorder %s91, %s92
    %p103 = scmp.eq.s32.totalorder %s15, 0
    %p104 = por %p102, %p103
    %p105 = scmp.ne.s32.totalorder %s91, %s92
    %p106 = scmp.eq.s32.totalorder %s16, 1
    %p107 = por %p105, %p106
    %p109 = scmp.ne.s32.totalorder %s92, %s108
    %p110 = scmp.eq.s32.totalorder %s16, 0
    %p111 = por %p109, %p110
    %s112 = ssub.s32 %s10, %s17
    %p113 = scmp.eq.s32.totalorder %s112, 0
    %s115 = sadd.s32 %s114, 1
    %s116 = scalar_select %p113, %s114, %s115
    %p119 = pneg %p113
    %p120 = scmp.eq.s32.totalorder %s10, 1
    %p121 = por %p119, %p120
    %p122 = scmp.ne.s32.totalorder %s114, %s117
    %p123 = scmp.eq.s32.totalorder %s10, 0
    %p124 = por %p122, %p123
    %p125 = scmp.ne.s32.totalorder %s114, %s117
    %p126 = scmp.eq.s32.totalorder %s15, 1
    %p127 = por %p125, %p126
    %p128 = scmp.ne.s32.totalorder %s117, %s118
    %p129 = scmp.eq.s32.totalorder %s15, 0
    %p130 = por %p128, %p129
    %p131 = scmp.ne.s32.totalorder %s117, %s118
    %p132 = scmp.eq.s32.totalorder %s16, 1
    %p133 = por %p131, %p132
    %p135 = scmp.ne.s32.totalorder %s118, %s134
    %p136 = scmp.eq.s32.totalorder %s16, 0
    %p137 = por %p135, %p136
    %p138 = scmp.le.s32.totalorder 1, %s10
    %p139 = scmp.lt.s32.totalorder %s10, 3
    %p140 = pnand %p138, %p139
    %p141 = pneg %p140
    // Predicated region
    $region9: #{resnet_block50_forward.7} parent=5 // pred_check
      _
    $region10: #{resnet_block50_forward.7} parent=5 // pred_check_branch
      %143 = sbr.rel (%p140) target = $region12
    $region11: #{resnet_block50_forward.7} parent=5 // pred_region
      %s144 = ssub.s32 %s10, 1
      // Predicated region
      $region13: #{resnet_block50_forward.7} parent=11 // pred_check
        %p145 = pneg %p57
      $region14: #{resnet_block50_forward.7} parent=11 // pred_check_branch
        %147 = sbr.rel (%p145) target = $region16
      $region15: #{resnet_block50_forward.7} parent=11 // pred_region
        _
      $region16: #{resnet_block50_forward.7} parent=11 // pred_fallthru
        _
      // Predicated region
      $region17: #{resnet_block50_forward.7} parent=11 // pred_check
        %p148 = pneg %p78
      $region18: #{resnet_block50_forward.7} parent=11 // pred_check_branch
        %150 = sbr.rel (%p148) target = $region20
      $region19: #{resnet_block50_forward.7} parent=11 // pred_region
        _
      $region20: #{resnet_block50_forward.7} parent=11 // pred_fallthru
        _
    $region12: #{resnet_block50_forward.7} parent=5 // pred_fallthru
      _
    %p151 = scmp.lt.s32.totalorder %s10, 2
    // Predicated region
    $region21: #{resnet_block50_forward.7} parent=5 // pred_check
      %p152 = pneg %p151
    $region22: #{resnet_block50_forward.7} parent=5 // pred_check_branch
      %154 = sbr.rel (%p152) target = $region24
    $region23: #{resnet_block50_forward.7} parent=5 // pred_region
      // Predicated region
      $region25: #{resnet_block50_forward.7} parent=23 // pred_check
        %p155 = pneg %p30
      $region26: #{resnet_block50_forward.7} parent=23 // pred_check_branch
        %157 = sbr.rel (%p155) target = $region28
      $region27: #{resnet_block50_forward.7} parent=23 // pred_region
        %p158 = scmp.lt.s32.totalorder %s10, 1
        %s159 = scalar_select %p158, %s10, 1
        %s160 = smul.addr %s159, 32
        %s161 = smul.addr %s160, 4
        %s162 = scalar_lea.vmem %s0, %s161
      $region28: #{resnet_block50_forward.7} parent=23 // pred_fallthru
        _
      // Predicated region
      $region29: #{resnet_block50_forward.7} parent=23 // pred_check
        %p163 = pneg %p98
      $region30: #{resnet_block50_forward.7} parent=23 // pred_check_branch
        %165 = sbr.rel (%p163) target = $region32
      $region31: #{resnet_block50_forward.7} parent=23 // pred_region
        %p166 = scmp.lt.s32.totalorder %s10, 1
        %s167 = scalar_select %p166, %s10, 1
        %s168 = smul.addr %s167, 32
        %s169 = smul.addr %s168, 8
        %s170 = scalar_lea.vmem %s3, %s169
      $region32: #{resnet_block50_forward.7} parent=23 // pred_fallthru
        _
    $region24: #{resnet_block50_forward.7} parent=5 // pred_fallthru
      _
    %p171 = scmp.le.s32.totalorder 1, %s10
    %p172 = scmp.lt.s32.totalorder %s10, 3
    %p173 = pnand %p171, %p172
    %p174 = pneg %p173
    // Predicated region
    $region33: #{resnet_block50_forward.7} parent=5 // pred_check
      _
    $region34: #{resnet_block50_forward.7} parent=5 // pred_check_branch
      %176 = sbr.rel (%p173) target = $region36
    $region35: #{resnet_block50_forward.7} parent=5 // pred_region
      %s177 = ssub.s32 %s10, 1
      %p178 = scmp.lt.s32.totalorder %s15, 1
      %s179 = scalar_select %p178, %s15, 1
      %s180 = smul.addr %s179, 32
      %s181 = smul.addr %s180, 4
      %s182 = scalar_lea.vmem %s0, %s181
      %p183 = pneg %p36
      %p184 = pneg %p33
      %p185 = pneg %p57
      %p186 = pneg %p54
      %p187 = pneg %p78
      %p188 = pneg %p75
      %p189 = scmp.lt.s32.totalorder %s15, 1
      %s190 = scalar_select %p189, %s15, 1
      %s191 = smul.addr %s190, 32
      %s192 = smul.addr %s191, 8
      %s193 = scalar_lea.vmem %s3, %s192
      %p194 = pneg %p104
      %p195 = pneg %p101
      %p196 = pneg %p130
      %p197 = pneg %p127
      %p198 = scmp.lt.s32.totalorder %s15, 1
      %s199 = scalar_select %p198, %s15, 1
      %s200 = smul.addr %s199, 32
      %s201 = smul.addr %s200, 8
      %s202 = scalar_lea.vmem %s4, %s201
      %p203 = scmp.lt.s32.totalorder %s15, 1
      %s204 = scalar_select %p203, %s15, 1
      %s205 = smul.addr %s204, 32
      %s206 = smul.addr %s205, 4
      %s207 = scalar_lea.vmem %s0, %s206
      %p208 = scmp.lt.s32.totalorder %s15, 1
      %s209 = scalar_select %p208, %s15, 1
      %s210 = smul.addr %s209, 32
      %s211 = smul.addr %s210, 8
      %s212 = scalar_lea.vmem %s3, %s211
      %p213 = scmp.lt.s32.totalorder %s15, 1
      %s214 = scalar_select %p213, %s15, 1
      %s215 = smul.addr %s214, 32
      %s216 = smul.addr %s215, 8
      %s217 = scalar_lea.vmem %s4, %s216
      %v218 = vld [vmem:[%s207] sm:$0xf]
      %v219 = vld [vmem:[%s207 + $0x4] sm:$0xf]
      %v220 = vld [vmem:[%s207 + $0x8] sm:$0xf]
      %v221 = vld [vmem:[%s207 + $0xc] sm:$0xf]
      %v222 = vld [vmem:[%s207 + $0x10] sm:$0xf]
      %v223 = vld [vmem:[%s207 + $0x14] sm:$0xf]
      %v224 = vld [vmem:[%s207 + $0x18] sm:$0xf]
      %v225 = vld [vmem:[%s207 + $0x1c] sm:$0xf]
      %v226 = vld [vmem:[%s207 + $0x20] sm:$0xf]
      %v227 = vld [vmem:[%s207 + $0x24] sm:$0xf]
      %v228 = vld [vmem:[%s207 + $0x28] sm:$0xf]
      %v229 = vld [vmem:[%s207 + $0x2c] sm:$0xf]
      %v230 = vld [vmem:[%s207 + $0x30] sm:$0xf]
      %v231 = vld [vmem:[%s207 + $0x34] sm:$0xf]
      %v232 = vld [vmem:[%s207 + $0x38] sm:$0xf]
      %v233 = vld [vmem:[%s207 + $0x3c] sm:$0xf]
      %v234 = vld [vmem:[%s207 + $0x40] sm:$0xf]
      %v235 = vld [vmem:[%s207 + $0x44] sm:$0xf]
      %v236 = vld [vmem:[%s207 + $0x48] sm:$0xf]
      %v237 = vld [vmem:[%s207 + $0x4c] sm:$0xf]
      %v238 = vld [vmem:[%s207 + $0x50] sm:$0xf]
      %v239 = vld [vmem:[%s207 + $0x54] sm:$0xf]
      %v240 = vld [vmem:[%s207 + $0x58] sm:$0xf]
      %v241 = vld [vmem:[%s207 + $0x5c] sm:$0xf]
      %v242 = vld [vmem:[%s207 + $0x60] sm:$0xf]
      %v243 = vld [vmem:[%s207 + $0x64] sm:$0xf]
      %v244 = vld [vmem:[%s207 + $0x68] sm:$0xf]
      %v245 = vld [vmem:[%s207 + $0x6c] sm:$0xf]
      %v246 = vld [vmem:[%s207 + $0x70] sm:$0xf]
      %v247 = vld [vmem:[%s207 + $0x74] sm:$0xf]
      %v248 = vld [vmem:[%s207 + $0x78] sm:$0xf]
      %v249 = vld [vmem:[%s207 + $0x7c] sm:$0xf]
      %v250 = vunpack.c.l.bf16 %v218
      %v251 = vunpack.c.l.bf16 %v219
      %v252 = vunpack.c.l.bf16 %v220
      %v253 = vunpack.c.l.bf16 %v221
      %v254 = vunpack.c.l.bf16 %v222
      %v255 = vunpack.c.l.bf16 %v223
      %v256 = vunpack.c.l.bf16 %v224
      %v257 = vunpack.c.l.bf16 %v225
      %v258 = vunpack.c.l.bf16 %v226
      %v259 = vunpack.c.l.bf16 %v227
      %v260 = vunpack.c.l.bf16 %v228
      %v261 = vunpack.c.l.bf16 %v229
      %v262 = vunpack.c.l.bf16 %v230
      %v263 = vunpack.c.l.bf16 %v231
      %v264 = vunpack.c.l.bf16 %v232
      %v265 = vunpack.c.l.bf16 %v233
      %v266 = vunpack.c.l.bf16 %v234
      %v267 = vunpack.c.l.bf16 %v235
      %v268 = vunpack.c.l.bf16 %v236
      %v269 = vunpack.c.l.bf16 %v237
      %v270 = vunpack.c.l.bf16 %v238
      %v271 = vunpack.c.l.bf16 %v239
      %v272 = vunpack.c.l.bf16 %v240
      %v273 = vunpack.c.l.bf16 %v241
      %v274 = vunpack.c.l.bf16 %v242
      %v275 = vunpack.c.l.bf16 %v243
      %v276 = vunpack.c.l.bf16 %v244
      %v277 = vunpack.c.l.bf16 %v245
      %v278 = vunpack.c.l.bf16 %v246
      %v279 = vunpack.c.l.bf16 %v247
      %v280 = vunpack.c.l.bf16 %v248
      %v281 = vunpack.c.l.bf16 %v249
      %v282 = vld [vmem:[%s1] sm:$0x1]
      %v284 = vperm.slane %v282, 0
      %v286 = vmul.f32 %v250, %v284
      %v287 = vmul.f32 %v251, %v284
      %v288 = vmul.f32 %v252, %v284
      %v289 = vmul.f32 %v253, %v284
      %v290 = vmul.f32 %v254, %v284
      %v291 = vmul.f32 %v255, %v284
      %v292 = vmul.f32 %v256, %v284
      %v293 = vmul.f32 %v257, %v284
      %v294 = vmul.f32 %v258, %v284
      %v295 = vmul.f32 %v259, %v284
      %v296 = vmul.f32 %v260, %v284
      %v297 = vmul.f32 %v261, %v284
      %v298 = vmul.f32 %v262, %v284
      %v299 = vmul.f32 %v263, %v284
      %v300 = vmul.f32 %v264, %v284
      %v301 = vmul.f32 %v265, %v284
      %v302 = vmul.f32 %v266, %v284
      %v303 = vmul.f32 %v267, %v284
      %v304 = vmul.f32 %v268, %v284
      %v305 = vmul.f32 %v269, %v284
      %v306 = vmul.f32 %v270, %v284
      %v307 = vmul.f32 %v271, %v284
      %v308 = vmul.f32 %v272, %v284
      %v309 = vmul.f32 %v273, %v284
      %v310 = vmul.f32 %v274, %v284
      %v311 = vmul.f32 %v275, %v284
      %v312 = vmul.f32 %v276, %v284
      %v313 = vmul.f32 %v277, %v284
      %v314 = vmul.f32 %v278, %v284
      %v315 = vmul.f32 %v279, %v284
      %v316 = vmul.f32 %v280, %v284
      %v317 = vmul.f32 %v281, %v284
      %v318 = vld [vmem:[%s2] sm:$0x1]
      %v320 = vperm.slane %v318, 0
      %v322 = vadd.f32 %v286, %v320
      %v323 = vadd.f32 %v287, %v320
      %v324 = vadd.f32 %v288, %v320
      %v325 = vadd.f32 %v289, %v320
      %v326 = vadd.f32 %v290, %v320
      %v327 = vadd.f32 %v291, %v320
      %v328 = vadd.f32 %v292, %v320
      %v329 = vadd.f32 %v293, %v320
      %v330 = vadd.f32 %v294, %v320
      %v331 = vadd.f32 %v295, %v320
      %v332 = vadd.f32 %v296, %v320
      %v333 = vadd.f32 %v297, %v320
      %v334 = vadd.f32 %v298, %v320
      %v335 = vadd.f32 %v299, %v320
      %v336 = vadd.f32 %v300, %v320
      %v337 = vadd.f32 %v301, %v320
      %v338 = vadd.f32 %v302, %v320
      %v339 = vadd.f32 %v303, %v320
      %v340 = vadd.f32 %v304, %v320
      %v341 = vadd.f32 %v305, %v320
      %v342 = vadd.f32 %v306, %v320
      %v343 = vadd.f32 %v307, %v320
      %v344 = vadd.f32 %v308, %v320
      %v345 = vadd.f32 %v309, %v320
      %v346 = vadd.f32 %v310, %v320
      %v347 = vadd.f32 %v311, %v320
      %v348 = vadd.f32 %v312, %v320
      %v349 = vadd.f32 %v313, %v320
      %v350 = vadd.f32 %v314, %v320
      %v351 = vadd.f32 %v315, %v320
      %v352 = vadd.f32 %v316, %v320
      %v353 = vadd.f32 %v317, %v320
      %354 = vxpose.xlu0.b32.start [1/16] %v322, 128
      %355 = vxpose.xlu0.b32.cont [2/16] %v323, 128
      %356 = vxpose.xlu0.b32.cont [3/16] %v324, 128
      %357 = vxpose.xlu0.b32.cont [4/16] %v325, 128
      %358 = vxpose.xlu0.b32.cont [5/16] %v326, 128
      %359 = vxpose.xlu0.b32.cont [6/16] %v327, 128
      %360 = vxpose.xlu0.b32.cont [7/16] %v328, 128
      %361 = vxpose.xlu0.b32.cont [8/16] %v329, 128
      %362 = vxpose.xlu0.b32.cont [9/16] %v330, 128
      %363 = vxpose.xlu0.b32.cont [10/16] %v331, 128
      %364 = vxpose.xlu0.b32.cont [11/16] %v332, 128
      %365 = vxpose.xlu0.b32.cont [12/16] %v333, 128
      %366 = vxpose.xlu0.b32.cont [13/16] %v334, 128
      %367 = vxpose.xlu0.b32.cont [14/16] %v335, 128
      %368 = vxpose.xlu0.b32.cont [15/16] %v336, 128
      %369 = vxpose.xlu0.b32.end [16/16] %v337, 128
      %v370 = vpop.trf.xlu0
      %v371 = vpop.trf.xlu0
      %v372 = vpop.trf.xlu0
      %v373 = vpop.trf.xlu0
      %v374 = vpop.trf.xlu0
      %v375 = vpop.trf.xlu0
      %v376 = vpop.trf.xlu0
      %v377 = vpop.trf.xlu0
      %v378 = vpop.trf.xlu0
      %v379 = vpop.trf.xlu0
      %v380 = vpop.trf.xlu0
      %v381 = vpop.trf.xlu0
      %v382 = vpop.trf.xlu0
      %v383 = vpop.trf.xlu0
      %v384 = vpop.trf.xlu0
      %v385 = vpop.trf.xlu0
      %386 = vxpose.xlu0.b32.start [1/16] %v338, 128
      %387 = vxpose.xlu0.b32.cont [2/16] %v339, 128
      %388 = vxpose.xlu0.b32.cont [3/16] %v340, 128
      %389 = vxpose.xlu0.b32.cont [4/16] %v341, 128
      %390 = vxpose.xlu0.b32.cont [5/16] %v342, 128
      %391 = vxpose.xlu0.b32.cont [6/16] %v343, 128
      %392 = vxpose.xlu0.b32.cont [7/16] %v344, 128
      %393 = vxpose.xlu0.b32.cont [8/16] %v345, 128
      %394 = vxpose.xlu0.b32.cont [9/16] %v346, 128
      %395 = vxpose.xlu0.b32.cont [10/16] %v347, 128
      %396 = vxpose.xlu0.b32.cont [11/16] %v348, 128
      %397 = vxpose.xlu0.b32.cont [12/16] %v349, 128
      %398 = vxpose.xlu0.b32.cont [13/16] %v350, 128
      %399 = vxpose.xlu0.b32.cont [14/16] %v351, 128
      %400 = vxpose.xlu0.b32.cont [15/16] %v352, 128
      %401 = vxpose.xlu0.b32.end [16/16] %v353, 128
      %v402 = vpop.trf.xlu0
      %v403 = vpop.trf.xlu0
      %v404 = vpop.trf.xlu0
      %v405 = vpop.trf.xlu0
      %v406 = vpop.trf.xlu0
      %v407 = vpop.trf.xlu0
      %v408 = vpop.trf.xlu0
      %v409 = vpop.trf.xlu0
      %v410 = vpop.trf.xlu0
      %v411 = vpop.trf.xlu0
      %v412 = vpop.trf.xlu0
      %v413 = vpop.trf.xlu0
      %v414 = vpop.trf.xlu0
      %v415 = vpop.trf.xlu0
      %v416 = vpop.trf.xlu0
      %v417 = vpop.trf.xlu0
      %v418 = vld [vmem:[%s212] sm:$0xff]
      %v419 = vld [vmem:[%s212 + $0x8] sm:$0xff]
      %v420 = vld [vmem:[%s212 + $0x10] sm:$0xff]
      %v421 = vld [vmem:[%s212 + $0x18] sm:$0xff]
      %v422 = vld [vmem:[%s212 + $0x20] sm:$0xff]
      %v423 = vld [vmem:[%s212 + $0x28] sm:$0xff]
      %v424 = vld [vmem:[%s212 + $0x30] sm:$0xff]
      %v425 = vld [vmem:[%s212 + $0x38] sm:$0xff]
      %v426 = vld [vmem:[%s212 + $0x40] sm:$0xff]
      %v427 = vld [vmem:[%s212 + $0x48] sm:$0xff]
      %v428 = vld [vmem:[%s212 + $0x50] sm:$0xff]
      %v429 = vld [vmem:[%s212 + $0x58] sm:$0xff]
      %v430 = vld [vmem:[%s212 + $0x60] sm:$0xff]
      %v431 = vld [vmem:[%s212 + $0x68] sm:$0xff]
      %v432 = vld [vmem:[%s212 + $0x70] sm:$0xff]
      %v433 = vld [vmem:[%s212 + $0x78] sm:$0xff]
      %v434 = vld [vmem:[%s212 + $0x80] sm:$0xff]
      %v435 = vld [vmem:[%s212 + $0x88] sm:$0xff]
      %v436 = vld [vmem:[%s212 + $0x90] sm:$0xff]
      %v437 = vld [vmem:[%s212 + $0x98] sm:$0xff]
      %v438 = vld [vmem:[%s212 + $0xa0] sm:$0xff]
      %v439 = vld [vmem:[%s212 + $0xa8] sm:$0xff]
      %v440 = vld [vmem:[%s212 + $0xb0] sm:$0xff]
      %v441 = vld [vmem:[%s212 + $0xb8] sm:$0xff]
      %v442 = vld [vmem:[%s212 + $0xc0] sm:$0xff]
      %v443 = vld [vmem:[%s212 + $0xc8] sm:$0xff]
      %v444 = vld [vmem:[%s212 + $0xd0] sm:$0xff]
      %v445 = vld [vmem:[%s212 + $0xd8] sm:$0xff]
      %v446 = vld [vmem:[%s212 + $0xe0] sm:$0xff]
      %v447 = vld [vmem:[%s212 + $0xe8] sm:$0xff]
      %v448 = vld [vmem:[%s212 + $0xf0] sm:$0xff]
      %v449 = vld [vmem:[%s212 + $0xf8] sm:$0xff]
      %v450 = vadd.f32 %v370, %v418
      %v451 = vadd.f32 %v402, %v419
      %v452 = vadd.f32 %v371, %v420
      %v453 = vadd.f32 %v403, %v421
      %v454 = vadd.f32 %v372, %v422
      %v455 = vadd.f32 %v404, %v423
      %v456 = vadd.f32 %v373, %v424
      %v457 = vadd.f32 %v405, %v425
      %v458 = vadd.f32 %v374, %v426
      %v459 = vadd.f32 %v406, %v427
      %v460 = vadd.f32 %v375, %v428
      %v461 = vadd.f32 %v407, %v429
      %v462 = vadd.f32 %v376, %v430
      %v463 = vadd.f32 %v408, %v431
      %v464 = vadd.f32 %v377, %v432
      %v465 = vadd.f32 %v409, %v433
      %v466 = vadd.f32 %v378, %v434
      %v467 = vadd.f32 %v410, %v435
      %v468 = vadd.f32 %v379, %v436
      %v469 = vadd.f32 %v411, %v437
      %v470 = vadd.f32 %v380, %v438
      %v471 = vadd.f32 %v412, %v439
      %v472 = vadd.f32 %v381, %v440
      %v473 = vadd.f32 %v413, %v441
      %v474 = vadd.f32 %v382, %v442
      %v475 = vadd.f32 %v414, %v443
      %v476 = vadd.f32 %v383, %v444
      %v477 = vadd.f32 %v415, %v445
      %v478 = vadd.f32 %v384, %v446
      %v479 = vadd.f32 %v416, %v447
      %v480 = vadd.f32 %v385, %v448
      %v481 = vadd.f32 %v417, %v449
      %v482 = vmax.f32 %v450, 0.0
      %v483 = vmax.f32 %v451, 0.0
      %v484 = vmax.f32 %v452, 0.0
      %v485 = vmax.f32 %v453, 0.0
      %v486 = vmax.f32 %v454, 0.0
      %v487 = vmax.f32 %v455, 0.0
      %v488 = vmax.f32 %v456, 0.0
      %v489 = vmax.f32 %v457, 0.0
      %v490 = vmax.f32 %v458, 0.0
      %v491 = vmax.f32 %v459, 0.0
      %v492 = vmax.f32 %v460, 0.0
      %v493 = vmax.f32 %v461, 0.0
      %v494 = vmax.f32 %v462, 0.0
      %v495 = vmax.f32 %v463, 0.0
      %v496 = vmax.f32 %v464, 0.0
      %v497 = vmax.f32 %v465, 0.0
      %v498 = vmax.f32 %v466, 0.0
      %v499 = vmax.f32 %v467, 0.0
      %v500 = vmax.f32 %v468, 0.0
      %v501 = vmax.f32 %v469, 0.0
      %v502 = vmax.f32 %v470, 0.0
      %v503 = vmax.f32 %v471, 0.0
      %v504 = vmax.f32 %v472, 0.0
      %v505 = vmax.f32 %v473, 0.0
      %v506 = vmax.f32 %v474, 0.0
      %v507 = vmax.f32 %v475, 0.0
      %v508 = vmax.f32 %v476, 0.0
      %v509 = vmax.f32 %v477, 0.0
      %v510 = vmax.f32 %v478, 0.0
      %v511 = vmax.f32 %v479, 0.0
      %v512 = vmax.f32 %v480, 0.0
      %v513 = vmax.f32 %v481, 0.0
      %514 = vst [vmem:[%s217] sm:$0xff] %v482
      %515 = vst [vmem:[%s217 + $0x8] sm:$0xff] %v483
      %516 = vst [vmem:[%s217 + $0x10] sm:$0xff] %v484
      %517 = vst [vmem:[%s217 + $0x18] sm:$0xff] %v485
      %518 = vst [vmem:[%s217 + $0x20] sm:$0xff] %v486
      %519 = vst [vmem:[%s217 + $0x28] sm:$0xff] %v487
      %520 = vst [vmem:[%s217 + $0x30] sm:$0xff] %v488
      %521 = vst [vmem:[%s217 + $0x38] sm:$0xff] %v489
      %522 = vst [vmem:[%s217 + $0x40] sm:$0xff] %v490
      %523 = vst [vmem:[%s217 + $0x48] sm:$0xff] %v491
      %524 = vst [vmem:[%s217 + $0x50] sm:$0xff] %v492
      %525 = vst [vmem:[%s217 + $0x58] sm:$0xff] %v493
      %526 = vst [vmem:[%s217 + $0x60] sm:$0xff] %v494
      %527 = vst [vmem:[%s217 + $0x68] sm:$0xff] %v495
      %528 = vst [vmem:[%s217 + $0x70] sm:$0xff] %v496
      %529 = vst [vmem:[%s217 + $0x78] sm:$0xff] %v497
      %530 = vst [vmem:[%s217 + $0x80] sm:$0xff] %v498
      %531 = vst [vmem:[%s217 + $0x88] sm:$0xff] %v499
      %532 = vst [vmem:[%s217 + $0x90] sm:$0xff] %v500
      %533 = vst [vmem:[%s217 + $0x98] sm:$0xff] %v501
      %534 = vst [vmem:[%s217 + $0xa0] sm:$0xff] %v502
      %535 = vst [vmem:[%s217 + $0xa8] sm:$0xff] %v503
      %536 = vst [vmem:[%s217 + $0xb0] sm:$0xff] %v504
      %537 = vst [vmem:[%s217 + $0xb8] sm:$0xff] %v505
      %538 = vst [vmem:[%s217 + $0xc0] sm:$0xff] %v506
      %539 = vst [vmem:[%s217 + $0xc8] sm:$0xff] %v507
      %540 = vst [vmem:[%s217 + $0xd0] sm:$0xff] %v508
      %541 = vst [vmem:[%s217 + $0xd8] sm:$0xff] %v509
      %542 = vst [vmem:[%s217 + $0xe0] sm:$0xff] %v510
      %543 = vst [vmem:[%s217 + $0xe8] sm:$0xff] %v511
      %544 = vst [vmem:[%s217 + $0xf0] sm:$0xff] %v512
      %545 = vst [vmem:[%s217 + $0xf8] sm:$0xff] %v513
      %p546 = scmp.lt.s32.totalorder %s15, 1
      %s547 = scalar_select %p546, %s15, 1
      %s548 = smul.addr %s547, 32
      %s549 = smul.addr %s548, 8
      %s550 = scalar_lea.vmem %s4, %s549
      // Predicated region
      $region37: #{resnet_block50_forward.7} parent=35 // pred_check
        %p551 = pneg %p127
      $region38: #{resnet_block50_forward.7} parent=35 // pred_check_branch
        %553 = sbr.rel (%p551) target = $region40
      $region39: #{resnet_block50_forward.7} parent=35 // pred_region
        _
      $region40: #{resnet_block50_forward.7} parent=35 // pred_fallthru
        _
    $region36: #{resnet_block50_forward.7} parent=5 // pred_fallthru
      _
    %p554 = scmp.le.s32.totalorder 2, %s10
    // Predicated region
    $region41: #{resnet_block50_forward.7} parent=5 // pred_check
      %p555 = pneg %p554
    $region42: #{resnet_block50_forward.7} parent=5 // pred_check_branch
      %557 = sbr.rel (%p555) target = $region44
    $region43: #{resnet_block50_forward.7} parent=5 // pred_region
      %s558 = ssub.s32 %s10, 2
      // Predicated region
      $region45: #{resnet_block50_forward.7} parent=43 // pred_check
        %p559 = pneg %p133
      $region46: #{resnet_block50_forward.7} parent=43 // pred_check_branch
        %561 = sbr.rel (%p559) target = $region48
      $region47: #{resnet_block50_forward.7} parent=43 // pred_region
        %p562 = scmp.lt.s32.totalorder %s16, 1
        %s563 = scalar_select %p562, %s16, 1
        %s564 = smul.addr %s563, 32
        %s565 = smul.addr %s564, 8
        %s566 = scalar_lea.vmem %s4, %s565
      $region48: #{resnet_block50_forward.7} parent=43 // pred_fallthru
        _
    $region44: #{resnet_block50_forward.7} parent=5 // pred_fallthru
      _
  $region6: #{resnet_block50_forward.7} parent=0 // loop_footer
    %s14 = sadd.s32 1, %s10
  $region7: #{resnet_block50_forward.7} parent=0 // loop_footer_branch
    %9 = sbr.rel target = $region3
  $region8: #{resnet_block50_forward.7} parent=0 // loop_exit
    _

// kernel: resnet_block50_forward.5
$region0: #{resnet_block50_forward.5}
  #allocation0 [shape = 'u32[]', space=smem, size = 0x4, offset = 0x4, fixed_abs, tag = 'smem constant byte address 0x4 - core index']
  #allocation1 [shape = 'u32[72,128]{1,0:T(1,128)}', space=vmem, size = 0x9000, scoped, tag = 'internal scratch']
  #allocation2 [shape = 'f32[18,18,128]{2,1,0:T(8,128)}', space=vmem, size = 0x36000, scoped, tag = 'scratch operand']
  #allocation3 [shape = 'bf16[256,1152]{1,0:T(8,128)(2,1)}', space=vmem, size = 0x90000, scoped, tag = 'scratch operand']
  %s0 = inlined_call_operand.vmem [shape: bf16[2,256,128], index: 0, kind: input, shape index: {}]
  %s1 = inlined_call_operand.vmem [shape: f32[1,128], index: 1, kind: input, shape index: {}]
  %s2 = inlined_call_operand.vmem [shape: f32[1,128], index: 2, kind: input, shape index: {}]
  %s3 = inlined_call_operand.vmem [shape: bf16[1152,128], index: 3, kind: input, shape index: {}]
  %s4 = inlined_call_operand.vmem [shape: bf16[2,256,128], index: 4, kind: output, shape index: {0}]
  %s5 = inlined_call_operand.vmem [shape: f32[2,2,128], index: 5, kind: output, shape index: {1}]
  %6 = xla_tuple %s4, %s5
  %s7 = sld [smem:[#allocation0]]
  $region57: #{resnet_block50_forward.5} parent=0
    _
  %s9 = ssub.s32 1, %s7
  %s10 = scalar_select 0, %s9, %s7
  loop: start=0, step=1, limit=4
  $region2: #{resnet_block50_forward.5} parent=0 // loop_pre_header
    _
  $region3: #{resnet_block50_forward.5} parent=0 // loop_header
    %s12 = sphi 0, %s16
    %p13 = scmp.ge.s32.totalorder %s12, 4
    %s22 = sphi 0, %s24
    %s25 = sphi 0, %s22
    %s26 = sphi 0, %s25
    %s42 = sphi 0, %s26
    %s46 = sphi 0, %s46
    %s48 = sphi 0, %s46
    %s49 = sphi 0, %s48
    %s63 = sphi 0, %s49
    %s67 = sphi 0, %s67
    %s69 = sphi 0, %s67
    %s70 = sphi 0, %s69
    %s84 = sphi 0, %s70
    %s88 = sphi 0, %s88
    %s90 = sphi 0, %s88
    %s91 = sphi 0, %s90
    %s105 = sphi 0, %s91
    %s111 = sphi 0, %s113
    %s114 = sphi 0, %s111
    %s115 = sphi 0, %s114
    %s131 = sphi 0, %s115
    %s137 = sphi 0, %s139
    %s140 = sphi 0, %s137
    %s141 = sphi 0, %s140
    %s157 = sphi 0, %s141
  $region4: #{resnet_block50_forward.5} parent=0 // loop_header_branch
    %15 = sbr.rel (%p13) target = $region8
  $region5: #{resnet_block50_forward.5} parent=0 // loop_body
    %s17 = ssub.s32 %s12, 1
    %s18 = ssub.s32 %s12, 2
    %s19 = sadd.s32 %s12, 1
    %s20 = ssub.s32 %s12, %s19
    %p21 = scmp.eq.s32.totalorder %s20, 0
    %s23 = sadd.s32 %s22, 1
    %s24 = scalar_select %p21, %s22, %s23
    %p27 = pneg %p21
    %p28 = scmp.eq.s32.totalorder %s12, 1
    %p29 = por %p27, %p28
    %p30 = scmp.ne.s32.totalorder %s22, %s25
    %p31 = scmp.eq.s32.totalorder %s12, 0
    %p32 = por %p30, %p31
    %p33 = scmp.ne.s32.totalorder %s22, %s25
    %p34 = scmp.eq.s32.totalorder %s17, 1
    %p35 = por %p33, %p34
    %p36 = scmp.ne.s32.totalorder %s25, %s26
    %p37 = scmp.eq.s32.totalorder %s17, 0
    %p38 = por %p36, %p37
    %p39 = scmp.ne.s32.totalorder %s25, %s26
    %p40 = scmp.eq.s32.totalorder %s18, 1
    %p41 = por %p39, %p40
    %p43 = scmp.ne.s32.totalorder %s26, %s42
    %p44 = scmp.eq.s32.totalorder %s18, 0
    %p45 = por %p43, %p44
    %s47 = sadd.s32 %s46, 1
    %p50 = scmp.eq.s32.totalorder %s12, 1
    %p51 = scmp.ne.s32.totalorder %s46, %s48
    %p52 = scmp.eq.s32.totalorder %s12, 0
    %p53 = por %p51, %p52
    %p54 = scmp.ne.s32.totalorder %s46, %s48
    %p55 = scmp.eq.s32.totalorder %s17, 1
    %p56 = por %p54, %p55
    %p57 = scmp.ne.s32.totalorder %s48, %s49
    %p58 = scmp.eq.s32.totalorder %s17, 0
    %p59 = por %p57, %p58
    %p60 = scmp.ne.s32.totalorder %s48, %s49
    %p61 = scmp.eq.s32.totalorder %s18, 1
    %p62 = por %p60, %p61
    %p64 = scmp.ne.s32.totalorder %s49, %s63
    %p65 = scmp.eq.s32.totalorder %s18, 0
    %p66 = por %p64, %p65
    %s68 = sadd.s32 %s67, 1
    %p71 = scmp.eq.s32.totalorder %s12, 1
    %p72 = scmp.ne.s32.totalorder %s67, %s69
    %p73 = scmp.eq.s32.totalorder %s12, 0
    %p74 = por %p72, %p73
    %p75 = scmp.ne.s32.totalorder %s67, %s69
    %p76 = scmp.eq.s32.totalorder %s17, 1
    %p77 = por %p75, %p76
    %p78 = scmp.ne.s32.totalorder %s69, %s70
    %p79 = scmp.eq.s32.totalorder %s17, 0
    %p80 = por %p78, %p79
    %p81 = scmp.ne.s32.totalorder %s69, %s70
    %p82 = scmp.eq.s32.totalorder %s18, 1
    %p83 = por %p81, %p82
    %p85 = scmp.ne.s32.totalorder %s70, %s84
    %p86 = scmp.eq.s32.totalorder %s18, 0
    %p87 = por %p85, %p86
    %s89 = sadd.s32 %s88, 1
    %p92 = scmp.eq.s32.totalorder %s12, 1
    %p93 = scmp.ne.s32.totalorder %s88, %s90
    %p94 = scmp.eq.s32.totalorder %s12, 0
    %p95 = por %p93, %p94
    %p96 = scmp.ne.s32.totalorder %s88, %s90
    %p97 = scmp.eq.s32.totalorder %s17, 1
    %p98 = por %p96, %p97
    %p99 = scmp.ne.s32.totalorder %s90, %s91
    %p100 = scmp.eq.s32.totalorder %s17, 0
    %p101 = por %p99, %p100
    %p102 = scmp.ne.s32.totalorder %s90, %s91
    %p103 = scmp.eq.s32.totalorder %s18, 1
    %p104 = por %p102, %p103
    %p106 = scmp.ne.s32.totalorder %s91, %s105
    %p107 = scmp.eq.s32.totalorder %s18, 0
    %p108 = por %p106, %p107
    %s109 = ssub.s32 %s12, %s19
    %p110 = scmp.eq.s32.totalorder %s109, 0
    %s112 = sadd.s32 %s111, 1
    %s113 = scalar_select %p110, %s111, %s112
    %p116 = pneg %p110
    %p117 = scmp.eq.s32.totalorder %s12, 1
    %p118 = por %p116, %p117
    %p119 = scmp.ne.s32.totalorder %s111, %s114
    %p120 = scmp.eq.s32.totalorder %s12, 0
    %p121 = por %p119, %p120
    %p122 = scmp.ne.s32.totalorder %s111, %s114
    %p123 = scmp.eq.s32.totalorder %s17, 1
    %p124 = por %p122, %p123
    %p125 = scmp.ne.s32.totalorder %s114, %s115
    %p126 = scmp.eq.s32.totalorder %s17, 0
    %p127 = por %p125, %p126
    %p128 = scmp.ne.s32.totalorder %s114, %s115
    %p129 = scmp.eq.s32.totalorder %s18, 1
    %p130 = por %p128, %p129
    %p132 = scmp.ne.s32.totalorder %s115, %s131
    %p133 = scmp.eq.s32.totalorder %s18, 0
    %p134 = por %p132, %p133
    %s135 = ssub.s32 %s12, %s19
    %p136 = scmp.eq.s32.totalorder %s135, 0
    %s138 = sadd.s32 %s137, 1
    %s139 = scalar_select %p136, %s137, %s138
    %p142 = pneg %p136
    %p143 = scmp.eq.s32.totalorder %s12, 1
    %p144 = por %p142, %p143
    %p145 = scmp.ne.s32.totalorder %s137, %s140
    %p146 = scmp.eq.s32.totalorder %s12, 0
    %p147 = por %p145, %p146
    %p148 = scmp.ne.s32.totalorder %s137, %s140
    %p149 = scmp.eq.s32.totalorder %s17, 1
    %p150 = por %p148, %p149
    %p151 = scmp.ne.s32.totalorder %s140, %s141
    %p152 = scmp.eq.s32.totalorder %s17, 0
    %p153 = por %p151, %p152
    %p154 = scmp.ne.s32.totalorder %s140, %s141
    %p155 = scmp.eq.s32.totalorder %s18, 1
    %p156 = por %p154, %p155
    %p158 = scmp.ne.s32.totalorder %s141, %s157
    %p159 = scmp.eq.s32.totalorder %s18, 0
    %p160 = por %p158, %p159
    %p161 = scmp.le.s32.totalorder 1, %s12
    %p162 = scmp.lt.s32.totalorder %s12, 3
    %p163 = pnand %p161, %p162
    %p164 = pneg %p163
    // Predicated region
    $region9: #{resnet_block50_forward.5} parent=5 // pred_check
      _
    $region10: #{resnet_block50_forward.5} parent=5 // pred_check_branch
      %166 = sbr.rel (%p163) target = $region12
    $region11: #{resnet_block50_forward.5} parent=5 // pred_region
      %s167 = ssub.s32 %s12, 1
      // Predicated region
      $region13: #{resnet_block50_forward.5} parent=11 // pred_check
        %p168 = pneg %p59
      $region14: #{resnet_block50_forward.5} parent=11 // pred_check_branch
        %170 = sbr.rel (%p168) target = $region16
      $region15: #{resnet_block50_forward.5} parent=11 // pred_region
        _
      $region16: #{resnet_block50_forward.5} parent=11 // pred_fallthru
        _
      // Predicated region
      $region17: #{resnet_block50_forward.5} parent=11 // pred_check
        %p171 = pneg %p80
      $region18: #{resnet_block50_forward.5} parent=11 // pred_check_branch
        %173 = sbr.rel (%p171) target = $region20
      $region19: #{resnet_block50_forward.5} parent=11 // pred_region
        _
      $region20: #{resnet_block50_forward.5} parent=11 // pred_fallthru
        _
      // Predicated region
      $region21: #{resnet_block50_forward.5} parent=11 // pred_check
        %p174 = pneg %p101
      $region22: #{resnet_block50_forward.5} parent=11 // pred_check_branch
        %176 = sbr.rel (%p174) target = $region24
      $region23: #{resnet_block50_forward.5} parent=11 // pred_region
        _
      $region24: #{resnet_block50_forward.5} parent=11 // pred_fallthru
        _
    $region12: #{resnet_block50_forward.5} parent=5 // pred_fallthru
      _
    %p177 = scmp.lt.s32.totalorder %s12, 2
    // Predicated region
    $region25: #{resnet_block50_forward.5} parent=5 // pred_check
      %p178 = pneg %p177
    $region26: #{resnet_block50_forward.5} parent=5 // pred_check_branch
      %180 = sbr.rel (%p178) target = $region28
    $region27: #{resnet_block50_forward.5} parent=5 // pred_region
      // Predicated region
      $region29: #{resnet_block50_forward.5} parent=27 // pred_check
        %p181 = pneg %p32
      $region30: #{resnet_block50_forward.5} parent=27 // pred_check_branch
        %183 = sbr.rel (%p181) target = $region32
      $region31: #{resnet_block50_forward.5} parent=27 // pred_region
        %p184 = scmp.lt.s32.totalorder %s12, 1
        %s185 = scalar_select %p184, %s12, 1
        %s186 = smul.addr %s185, 32
        %s187 = smul.addr %s186, 4
        %s188 = scalar_lea.vmem %s0, %s187
      $region32: #{resnet_block50_forward.5} parent=27 // pred_fallthru
        _
    $region28: #{resnet_block50_forward.5} parent=5 // pred_fallthru
      _
    %p189 = scmp.le.s32.totalorder 1, %s12
    %p190 = scmp.lt.s32.totalorder %s12, 3
    %p191 = pnand %p189, %p190
    %p192 = pneg %p191
    // Predicated region
    $region33: #{resnet_block50_forward.5} parent=5 // pred_check
      _
    $region34: #{resnet_block50_forward.5} parent=5 // pred_check_branch
      %194 = sbr.rel (%p191) target = $region36
    $region35: #{resnet_block50_forward.5} parent=5 // pred_region
      %s195 = ssub.s32 %s12, 1
      %p196 = scmp.lt.s32.totalorder %s17, 1
      %s197 = scalar_select %p196, %s17, 1
      %s198 = smul.addr %s197, 32
      %s199 = smul.addr %s198, 4
      %s200 = scalar_lea.vmem %s0, %s199
      %p201 = pneg %p38
      %p202 = pneg %p35
      %p203 = pneg %p59
      %p204 = pneg %p56
      %p205 = pneg %p80
      %p206 = pneg %p77
      %p207 = pneg %p101
      %p208 = pneg %p98
      %p209 = pneg %p127
      %p210 = pneg %p124
      %p211 = scmp.lt.s32.totalorder %s17, 1
      %s212 = scalar_select %p211, %s17, 1
      %s213 = smul.addr %s212, 32
      %s214 = smul.addr %s213, 4
      %s215 = scalar_lea.vmem %s4, %s214
      %p216 = pneg %p153
      %p217 = pneg %p150
      %p218 = scmp.lt.s32.totalorder %s17, 1
      %s219 = scalar_select %p218, %s17, 1
      %s220 = smul.addr %s219, 2
      %s221 = scalar_lea.vmem %s5, %s220
      %p222 = scmp.lt.s32.totalorder %s17, 1
      %s223 = scalar_select %p222, %s17, 1
      %s224 = smul.addr %s223, 32
      %s225 = smul.addr %s224, 4
      %s226 = scalar_lea.vmem %s0, %s225
      %p227 = scmp.lt.s32.totalorder %s17, 1
      %s228 = scalar_select %p227, %s17, 1
      %s229 = smul.addr %s228, 32
      %s230 = smul.addr %s229, 4
      %s231 = scalar_lea.vmem %s4, %s230
      %p232 = scmp.lt.s32.totalorder %s17, 1
      %s233 = scalar_select %p232, %s17, 1
      %s234 = smul.addr %s233, 2
      %s235 = scalar_lea.vmem %s5, %s234
      %v236 = vld [vmem:[%s226] sm:$0xf]
      %v237 = vld [vmem:[%s226 + $0x4] sm:$0xf]
      %v238 = vld [vmem:[%s226 + $0x8] sm:$0xf]
      %v239 = vld [vmem:[%s226 + $0xc] sm:$0xf]
      %v240 = vld [vmem:[%s226 + $0x10] sm:$0xf]
      %v241 = vld [vmem:[%s226 + $0x14] sm:$0xf]
      %v242 = vld [vmem:[%s226 + $0x18] sm:$0xf]
      %v243 = vld [vmem:[%s226 + $0x1c] sm:$0xf]
      %v244 = vld [vmem:[%s226 + $0x20] sm:$0xf]
      %v245 = vld [vmem:[%s226 + $0x24] sm:$0xf]
      %v246 = vld [vmem:[%s226 + $0x28] sm:$0xf]
      %v247 = vld [vmem:[%s226 + $0x2c] sm:$0xf]
      %v248 = vld [vmem:[%s226 + $0x30] sm:$0xf]
      %v249 = vld [vmem:[%s226 + $0x34] sm:$0xf]
      %v250 = vld [vmem:[%s226 + $0x38] sm:$0xf]
      %v251 = vld [vmem:[%s226 + $0x3c] sm:$0xf]
      %v252 = vld [vmem:[%s226 + $0x40] sm:$0xf]
      %v253 = vld [vmem:[%s226 + $0x44] sm:$0xf]
      %v254 = vld [vmem:[%s226 + $0x48] sm:$0xf]
      %v255 = vld [vmem:[%s226 + $0x4c] sm:$0xf]
      %v256 = vld [vmem:[%s226 + $0x50] sm:$0xf]
      %v257 = vld [vmem:[%s226 + $0x54] sm:$0xf]
      %v258 = vld [vmem:[%s226 + $0x58] sm:$0xf]
      %v259 = vld [vmem:[%s226 + $0x5c] sm:$0xf]
      %v260 = vld [vmem:[%s226 + $0x60] sm:$0xf]
      %v261 = vld [vmem:[%s226 + $0x64] sm:$0xf]
      %v262 = vld [vmem:[%s226 + $0x68] sm:$0xf]
      %v263 = vld [vmem:[%s226 + $0x6c] sm:$0xf]
      %v264 = vld [vmem:[%s226 + $0x70] sm:$0xf]
      %v265 = vld [vmem:[%s226 + $0x74] sm:$0xf]
      %v266 = vld [vmem:[%s226 + $0x78] sm:$0xf]
      %v267 = vld [vmem:[%s226 + $0x7c] sm:$0xf]
      %v268 = vunpack.c.l.bf16 %v236
      %v269 = vunpack.c.l.bf16 %v237
      %v270 = vunpack.c.l.bf16 %v238
      %v271 = vunpack.c.l.bf16 %v239
      %v272 = vunpack.c.l.bf16 %v240
      %v273 = vunpack.c.l.bf16 %v241
      %v274 = vunpack.c.l.bf16 %v242
      %v275 = vunpack.c.l.bf16 %v243
      %v276 = vunpack.c.l.bf16 %v244
      %v277 = vunpack.c.l.bf16 %v245
      %v278 = vunpack.c.l.bf16 %v246
      %v279 = vunpack.c.l.bf16 %v247
      %v280 = vunpack.c.l.bf16 %v248
      %v281 = vunpack.c.l.bf16 %v249
      %v282 = vunpack.c.l.bf16 %v250
      %v283 = vunpack.c.l.bf16 %v251
      %v284 = vunpack.c.l.bf16 %v252
      %v285 = vunpack.c.l.bf16 %v253
      %v286 = vunpack.c.l.bf16 %v254
      %v287 = vunpack.c.l.bf16 %v255
      %v288 = vunpack.c.l.bf16 %v256
      %v289 = vunpack.c.l.bf16 %v257
      %v290 = vunpack.c.l.bf16 %v258
      %v291 = vunpack.c.l.bf16 %v259
      %v292 = vunpack.c.l.bf16 %v260
      %v293 = vunpack.c.l.bf16 %v261
      %v294 = vunpack.c.l.bf16 %v262
      %v295 = vunpack.c.l.bf16 %v263
      %v296 = vunpack.c.l.bf16 %v264
      %v297 = vunpack.c.l.bf16 %v265
      %v298 = vunpack.c.l.bf16 %v266
      %v299 = vunpack.c.l.bf16 %v267
      %v300 = vld [vmem:[%s1] sm:$0x1]
      %v302 = vperm.slane %v300, 0
      %v304 = vmul.f32 %v268, %v302
      %v305 = vmul.f32 %v269, %v302
      %v306 = vmul.f32 %v270, %v302
      %v307 = vmul.f32 %v271, %v302
      %v308 = vmul.f32 %v272, %v302
      %v309 = vmul.f32 %v273, %v302
      %v310 = vmul.f32 %v274, %v302
      %v311 = vmul.f32 %v275, %v302
      %v312 = vmul.f32 %v276, %v302
      %v313 = vmul.f32 %v277, %v302
      %v314 = vmul.f32 %v278, %v302
      %v315 = vmul.f32 %v279, %v302
      %v316 = vmul.f32 %v280, %v302
      %v317 = vmul.f32 %v281, %v302
      %v318 = vmul.f32 %v282, %v302
      %v319 = vmul.f32 %v283, %v302
      %v320 = vmul.f32 %v284, %v302
      %v321 = vmul.f32 %v285, %v302
      %v322 = vmul.f32 %v286, %v302
      %v323 = vmul.f32 %v287, %v302
      %v324 = vmul.f32 %v288, %v302
      %v325 = vmul.f32 %v289, %v302
      %v326 = vmul.f32 %v290, %v302
      %v327 = vmul.f32 %v291, %v302
      %v328 = vmul.f32 %v292, %v302
      %v329 = vmul.f32 %v293, %v302
      %v330 = vmul.f32 %v294, %v302
      %v331 = vmul.f32 %v295, %v302
      %v332 = vmul.f32 %v296, %v302
      %v333 = vmul.f32 %v297, %v302
      %v334 = vmul.f32 %v298, %v302
      %v335 = vmul.f32 %v299, %v302
      %v336 = vld [vmem:[%s2] sm:$0x1]
      %v338 = vperm.slane %v336, 0
      %v340 = vadd.f32 %v304, %v338
      %v341 = vadd.f32 %v305, %v338
      %v342 = vadd.f32 %v306, %v338
      %v343 = vadd.f32 %v307, %v338
      %v344 = vadd.f32 %v308, %v338
      %v345 = vadd.f32 %v309, %v338
      %v346 = vadd.f32 %v310, %v338
      %v347 = vadd.f32 %v311, %v338
      %v348 = vadd.f32 %v312, %v338
      %v349 = vadd.f32 %v313, %v338
      %v350 = vadd.f32 %v314, %v338
      %v351 = vadd.f32 %v315, %v338
      %v352 = vadd.f32 %v316, %v338
      %v353 = vadd.f32 %v317, %v338
      %v354 = vadd.f32 %v318, %v338
      %v355 = vadd.f32 %v319, %v338
      %v356 = vadd.f32 %v320, %v338
      %v357 = vadd.f32 %v321, %v338
      %v358 = vadd.f32 %v322, %v338
      %v359 = vadd.f32 %v323, %v338
      %v360 = vadd.f32 %v324, %v338
      %v361 = vadd.f32 %v325, %v338
      %v362 = vadd.f32 %v326, %v338
      %v363 = vadd.f32 %v327, %v338
      %v364 = vadd.f32 %v328, %v338
      %v365 = vadd.f32 %v329, %v338
      %v366 = vadd.f32 %v330, %v338
      %v367 = vadd.f32 %v331, %v338
      %v368 = vadd.f32 %v332, %v338
      %v369 = vadd.f32 %v333, %v338
      %v370 = vadd.f32 %v334, %v338
      %v371 = vadd.f32 %v335, %v338
      %v372 = vmax.f32 %v340, 0.0
      %v373 = vmax.f32 %v341, 0.0
      %v374 = vmax.f32 %v342, 0.0
      %v375 = vmax.f32 %v343, 0.0
      %v376 = vmax.f32 %v344, 0.0
      %v377 = vmax.f32 %v345, 0.0
      %v378 = vmax.f32 %v346, 0.0
      %v379 = vmax.f32 %v347, 0.0
      %v380 = vmax.f32 %v348, 0.0
      %v381 = vmax.f32 %v349, 0.0
      %v382 = vmax.f32 %v350, 0.0
      %v383 = vmax.f32 %v351, 0.0
      %v384 = vmax.f32 %v352, 0.0
      %v385 = vmax.f32 %v353, 0.0
      %v386 = vmax.f32 %v354, 0.0
      %v387 = vmax.f32 %v355, 0.0
      %v388 = vmax.f32 %v356, 0.0
      %v389 = vmax.f32 %v357, 0.0
      %v390 = vmax.f32 %v358, 0.0
      %v391 = vmax.f32 %v359, 0.0
      %v392 = vmax.f32 %v360, 0.0
      %v393 = vmax.f32 %v361, 0.0
      %v394 = vmax.f32 %v362, 0.0
      %v395 = vmax.f32 %v363, 0.0
      %v396 = vmax.f32 %v364, 0.0
      %v397 = vmax.f32 %v365, 0.0
      %v398 = vmax.f32 %v366, 0.0
      %v399 = vmax.f32 %v367, 0.0
      %v400 = vmax.f32 %v368, 0.0
      %v401 = vmax.f32 %v369, 0.0
      %v402 = vmax.f32 %v370, 0.0
      %v403 = vmax.f32 %v371, 0.0
      %404 = vst [vmem:[#allocation2] sm:$0xff] 0.0
      %405 = vst [vmem:[#allocation2 + $0x8] sm:$0xff] 0.0
      %406 = vst [vmem:[#allocation2 + $0x10] sm:$0x3] 0.0
      %s407 = scalar_lea.vmem [#allocation2], 408
      %408 = vst [vmem:[%s407] sm:$0xff] 0.0
      %409 = vst [vmem:[%s407 + $0x8] sm:$0xff] 0.0
      %410 = vst [vmem:[%s407 + $0x10] sm:$0x3] 0.0
      %411 = vst [vmem:[#allocation2] sm:$0x1] 0.0
      %412 = vst [vmem:[#allocation2 + $0x18] sm:$0x1] 0.0
      %413 = vst [vmem:[#allocation2 + $0x30] sm:$0x1] 0.0
      %414 = vst [vmem:[#allocation2 + $0x48] sm:$0x1] 0.0
      %415 = vst [vmem:[#allocation2 + $0x60] sm:$0x1] 0.0
      %416 = vst [vmem:[#allocation2 + $0x78] sm:$0x1] 0.0
      %417 = vst [vmem:[#allocation2 + $0x90] sm:$0x1] 0.0
      %418 = vst [vmem:[#allocation2 + $0xa8] sm:$0x1] 0.0
      %419 = vst [vmem:[#allocation2 + $0xc0] sm:$0x1] 0.0
      %420 = vst [vmem:[#allocation2 + $0xd8] sm:$0x1] 0.0
      %421 = vst [vmem:[#allocation2 + $0xf0] sm:$0x1] 0.0
      %422 = vst [vmem:[#allocation2 + $0x108] sm:$0x1] 0.0
      %423 = vst [vmem:[#allocation2 + $0x120] sm:$0x1] 0.0
      %424 = vst [vmem:[#allocation2 + $0x138] sm:$0x1] 0.0
      %425 = vst [vmem:[#allocation2 + $0x150] sm:$0x1] 0.0
      %426 = vst [vmem:[#allocation2 + $0x168] sm:$0x1] 0.0
      %427 = vst [vmem:[#allocation2 + $0x180] sm:$0x1] 0.0
      %428 = vst [vmem:[#allocation2 + $0x198] sm:$0x1] 0.0
      %429 = vst [vmem:[#allocation2 + $0x11] sm:$0x1] 0.0
      %430 = vst [vmem:[#allocation2 + $0x29] sm:$0x1] 0.0
      %431 = vst [vmem:[#allocation2 + $0x41] sm:$0x1] 0.0
      %432 = vst [vmem:[#allocation2 + $0x59] sm:$0x1] 0.0
      %433 = vst [vmem:[#allocation2 + $0x71] sm:$0x1] 0.0
      %434 = vst [vmem:[#allocation2 + $0x89] sm:$0x1] 0.0
      %435 = vst [vmem:[#allocation2 + $0xa1] sm:$0x1] 0.0
      %436 = vst [vmem:[#allocation2 + $0xb9] sm:$0x1] 0.0
      %437 = vst [vmem:[#allocation2 + $0xd1] sm:$0x1] 0.0
      %438 = vst [vmem:[#allocation2 + $0xe9] sm:$0x1] 0.0
      %439 = vst [vmem:[#allocation2 + $0x101] sm:$0x1] 0.0
      %440 = vst [vmem:[#allocation2 + $0x119] sm:$0x1] 0.0
      %441 = vst [vmem:[#allocation2 + $0x131] sm:$0x1] 0.0
      %442 = vst [vmem:[#allocation2 + $0x149] sm:$0x1] 0.0
      %443 = vst [vmem:[#allocation2 + $0x161] sm:$0x1] 0.0
      %444 = vst [vmem:[#allocation2 + $0x179] sm:$0x1] 0.0
      %445 = vst [vmem:[#allocation2 + $0x191] sm:$0x1] 0.0
      %446 = vst [vmem:[#allocation2 + $0x1a9] sm:$0x1] 0.0
      %s447 = scalar_lea.vmem [#allocation2], 24
      %448 = vst [vmem:[%s447 + $0x1] sm:$0xff] %v372
      %449 = vst [vmem:[%s447 + $0x9] sm:$0xff] %v373
      %450 = vst [vmem:[%s447 + $0x19] sm:$0xff] %v374
      %451 = vst [vmem:[%s447 + $0x21] sm:$0xff] %v375
      %452 = vst [vmem:[%s447 + $0x31] sm:$0xff] %v376
      %453 = vst [vmem:[%s447 + $0x39] sm:$0xff] %v377
      %454 = vst [vmem:[%s447 + $0x49] sm:$0xff] %v378
      %455 = vst [vmem:[%s447 + $0x51] sm:$0xff] %v379
      %456 = vst [vmem:[%s447 + $0x61] sm:$0xff] %v380
      %457 = vst [vmem:[%s447 + $0x69] sm:$0xff] %v381
      %458 = vst [vmem:[%s447 + $0x79] sm:$0xff] %v382
      %459 = vst [vmem:[%s447 + $0x81] sm:$0xff] %v383
      %460 = vst [vmem:[%s447 + $0x91] sm:$0xff] %v384
      %461 = vst [vmem:[%s447 + $0x99] sm:$0xff] %v385
      %462 = vst [vmem:[%s447 + $0xa9] sm:$0xff] %v386
      %463 = vst [vmem:[%s447 + $0xb1] sm:$0xff] %v387
      %464 = vst [vmem:[%s447 + $0xc1] sm:$0xff] %v388
      %465 = vst [vmem:[%s447 + $0xc9] sm:$0xff] %v389
      %466 = vst [vmem:[%s447 + $0xd9] sm:$0xff] %v390
      %467 = vst [vmem:[%s447 + $0xe1] sm:$0xff] %v391
      %468 = vst [vmem:[%s447 + $0xf1] sm:$0xff] %v392
      %469 = vst [vmem:[%s447 + $0xf9] sm:$0xff] %v393
      %470 = vst [vmem:[%s447 + $0x109] sm:$0xff] %v394
      %471 = vst [vmem:[%s447 + $0x111] sm:$0xff] %v395
      %472 = vst [vmem:[%s447 + $0x121] sm:$0xff] %v396
      %473 = vst [vmem:[%s447 + $0x129] sm:$0xff] %v397
      %474 = vst [vmem:[%s447 + $0x139] sm:$0xff] %v398
      %475 = vst [vmem:[%s447 + $0x141] sm:$0xff] %v399
      %476 = vst [vmem:[%s447 + $0x151] sm:$0xff] %v400
      %477 = vst [vmem:[%s447 + $0x159] sm:$0xff] %v401
      %478 = vst [vmem:[%s447 + $0x169] sm:$0xff] %v402
      %479 = vst [vmem:[%s447 + $0x171] sm:$0xff] %v403
      %v480 = vld [vmem:[#allocation2] sm:$0xff]
      %v481 = vld [vmem:[#allocation2 + $0x8] sm:$0xff]
      %v482 = vld [vmem:[#allocation2 + $0x18] sm:$0xff]
      %v483 = vld [vmem:[#allocation2 + $0x20] sm:$0xff]
      %v484 = vld [vmem:[#allocation2 + $0x30] sm:$0xff]
      %v485 = vld [vmem:[#allocation2 + $0x38] sm:$0xff]
      %v486 = vld [vmem:[#allocation2 + $0x48] sm:$0xff]
      %v487 = vld [vmem:[#allocation2 + $0x50] sm:$0xff]
      %v488 = vld [vmem:[#allocation2 + $0x60] sm:$0xff]
      %v489 = vld [vmem:[#allocation2 + $0x68] sm:$0xff]
      %v490 = vld [vmem:[#allocation2 + $0x78] sm:$0xff]
      %v491 = vld [vmem:[#allocation2 + $0x80] sm:$0xff]
      %v492 = vld [vmem:[#allocation2 + $0x90] sm:$0xff]
      %v493 = vld [vmem:[#allocation2 + $0x98] sm:$0xff]
      %v494 = vld [vmem:[#allocation2 + $0xa8] sm:$0xff]
      %v495 = vld [vmem:[#allocation2 + $0xb0] sm:$0xff]
      %v496 = vld [vmem:[#allocation2 + $0xc0] sm:$0xff]
      %v497 = vld [vmem:[#allocation2 + $0xc8] sm:$0xff]
      %v498 = vld [vmem:[#allocation2 + $0xd8] sm:$0xff]
      %v499 = vld [vmem:[#allocation2 + $0xe0] sm:$0xff]
      %v500 = vld [vmem:[#allocation2 + $0xf0] sm:$0xff]
      %v501 = vld [vmem:[#allocation2 + $0xf8] sm:$0xff]
      %v502 = vld [vmem:[#allocation2 + $0x108] sm:$0xff]
      %v503 = vld [vmem:[#allocation2 + $0x110] sm:$0xff]
      %v504 = vld [vmem:[#allocation2 + $0x120] sm:$0xff]
      %v505 = vld [vmem:[#allocation2 + $0x128] sm:$0xff]
      %v506 = vld [vmem:[#allocation2 + $0x138] sm:$0xff]
      %v507 = vld [vmem:[#allocation2 + $0x140] sm:$0xff]
      %v508 = vld [vmem:[#allocation2 + $0x150] sm:$0xff]
      %v509 = vld [vmem:[#allocation2 + $0x158] sm:$0xff]
      %v510 = vld [vmem:[#allocation2 + $0x168] sm:$0xff]
      %v511 = vld [vmem:[#allocation2 + $0x170] sm:$0xff]
      %v512 = vpack.c.bf16 %v480, %v480
      %v513 = vpack.c.bf16 %v481, %v481
      %v514 = vpack.c.bf16 %v482, %v482
      %v515 = vpack.c.bf16 %v483, %v483
      %v516 = vpack.c.bf16 %v484, %v484
      %v517 = vpack.c.bf16 %v485, %v485
      %v518 = vpack.c.bf16 %v486, %v486
      %v519 = vpack.c.bf16 %v487, %v487
      %v520 = vpack.c.bf16 %v488, %v488
      %v521 = vpack.c.bf16 %v489, %v489
      %v522 = vpack.c.bf16 %v490, %v490
      %v523 = vpack.c.bf16 %v491, %v491
      %v524 = vpack.c.bf16 %v492, %v492
      %v525 = vpack.c.bf16 %v493, %v493
      %v526 = vpack.c.bf16 %v494, %v494
      %v527 = vpack.c.bf16 %v495, %v495
      %v528 = vpack.c.bf16 %v496, %v496
      %v529 = vpack.c.bf16 %v497, %v497
      %v530 = vpack.c.bf16 %v498, %v498
      %v531 = vpack.c.bf16 %v499, %v499
      %v532 = vpack.c.bf16 %v500, %v500
      %v533 = vpack.c.bf16 %v501, %v501
      %v534 = vpack.c.bf16 %v502, %v502
      %v535 = vpack.c.bf16 %v503, %v503
      %v536 = vpack.c.bf16 %v504, %v504
      %v537 = vpack.c.bf16 %v505, %v505
      %v538 = vpack.c.bf16 %v506, %v506
      %v539 = vpack.c.bf16 %v507, %v507
      %v540 = vpack.c.bf16 %v508, %v508
      %v541 = vpack.c.bf16 %v509, %v509
      %v542 = vpack.c.bf16 %v510, %v510
      %v543 = vpack.c.bf16 %v511, %v511
      %544 = vst [vmem:[#allocation3] sm:$0xf] %v512
      %545 = vst [vmem:[#allocation3 + $0x24] sm:$0xf] %v513
      %546 = vst [vmem:[#allocation3 + $0x48] sm:$0xf] %v514
      %547 = vst [vmem:[#allocation3 + $0x6c] sm:$0xf] %v515
      %548 = vst [vmem:[#allocation3 + $0x90] sm:$0xf] %v516
      %549 = vst [vmem:[#allocation3 + $0xb4] sm:$0xf] %v517
      %550 = vst [vmem:[#allocation3 + $0xd8] sm:$0xf] %v518
      %551 = vst [vmem:[#allocation3 + $0xfc] sm:$0xf] %v519
      %552 = vst [vmem:[#allocation3 + $0x120] sm:$0xf] %v520
      %553 = vst [vmem:[#allocation3 + $0x144] sm:$0xf] %v521
      %554 = vst [vmem:[#allocation3 + $0x168] sm:$0xf] %v522
      %555 = vst [vmem:[#allocation3 + $0x18c] sm:$0xf] %v523
      %556 = vst [vmem:[#allocation3 + $0x1b0] sm:$0xf] %v524
      %557 = vst [vmem:[#allocation3 + $0x1d4] sm:$0xf] %v525
      %558 = vst [vmem:[#allocation3 + $0x1f8] sm:$0xf] %v526
      %559 = vst [vmem:[#allocation3 + $0x21c] sm:$0xf] %v527
      %560 = vst [vmem:[#allocation3 + $0x240] sm:$0xf] %v528
      %561 = vst [vmem:[#allocation3 + $0x264] sm:$0xf] %v529
      %562 = vst [vmem:[#allocation3 + $0x288] sm:$0xf] %v530
      %563 = vst [vmem:[#allocation3 + $0x2ac] sm:$0xf] %v531
      %564 = vst [vmem:[#allocation3 + $0x2d0] sm:$0xf] %v532
      %565 = vst [vmem:[#allocation3 + $0x2f4] sm:$0xf] %v533
      %566 = vst [vmem:[#allocation3 + $0x318] sm:$0xf] %v534
      %567 = vst [vmem:[#allocation3 + $0x33c] sm:$0xf] %v535
      %568 = vst [vmem:[#allocation3 + $0x360] sm:$0xf] %v536
      %569 = vst [vmem:[#allocation3 + $0x384] sm:$0xf] %v537
      %570 = vst [vmem:[#allocation3 + $0x3a8] sm:$0xf] %v538
      %571 = vst [vmem:[#allocation3 + $0x3cc] sm:$0xf] %v539
      %572 = vst [vmem:[#allocation3 + $0x3f0] sm:$0xf] %v540
      %573 = vst [vmem:[#allocation3 + $0x414] sm:$0xf] %v541
      %574 = vst [vmem:[#allocation3 + $0x438] sm:$0xf] %v542
      %575 = vst [vmem:[#allocation3 + $0x45c] sm:$0xf] %v543
      %v576 = vld [vmem:[#allocation2 + $0x1] sm:$0xff]
      %v577 = vld [vmem:[#allocation2 + $0x9] sm:$0xff]
      %v578 = vld [vmem:[#allocation2 + $0x19] sm:$0xff]
      %v579 = vld [vmem:[#allocation2 + $0x21] sm:$0xff]
      %v580 = vld [vmem:[#allocation2 + $0x31] sm:$0xff]
      %v581 = vld [vmem:[#allocation2 + $0x39] sm:$0xff]
      %v582 = vld [vmem:[#allocation2 + $0x49] sm:$0xff]
      %v583 = vld [vmem:[#allocation2 + $0x51] sm:$0xff]
      %v584 = vld [vmem:[#allocation2 + $0x61] sm:$0xff]
      %v585 = vld [vmem:[#allocation2 + $0x69] sm:$0xff]
      %v586 = vld [vmem:[#allocation2 + $0x79] sm:$0xff]
      %v587 = vld [vmem:[#allocation2 + $0x81] sm:$0xff]
      %v588 = vld [vmem:[#allocation2 + $0x91] sm:$0xff]
      %v589 = vld [vmem:[#allocation2 + $0x99] sm:$0xff]
      %v590 = vld [vmem:[#allocation2 + $0xa9] sm:$0xff]
      %v591 = vld [vmem:[#allocation2 + $0xb1] sm:$0xff]
      %v592 = vld [vmem:[#allocation2 + $0xc1] sm:$0xff]
      %v593 = vld [vmem:[#allocation2 + $0xc9] sm:$0xff]
      %v594 = vld [vmem:[#allocation2 + $0xd9] sm:$0xff]
      %v595 = vld [vmem:[#allocation2 + $0xe1] sm:$0xff]
      %v596 = vld [vmem:[#allocation2 + $0xf1] sm:$0xff]
      %v597 = vld [vmem:[#allocation2 + $0xf9] sm:$0xff]
      %v598 = vld [vmem:[#allocation2 + $0x109] sm:$0xff]
      %v599 = vld [vmem:[#allocation2 + $0x111] sm:$0xff]
      %v600 = vld [vmem:[#allocation2 + $0x121] sm:$0xff]
      %v601 = vld [vmem:[#allocation2 + $0x129] sm:$0xff]
      %v602 = vld [vmem:[#allocation2 + $0x139] sm:$0xff]
      %v603 = vld [vmem:[#allocation2 + $0x141] sm:$0xff]
      %v604 = vld [vmem:[#allocation2 + $0x151] sm:$0xff]
      %v605 = vld [vmem:[#allocation2 + $0x159] sm:$0xff]
      %v606 = vld [vmem:[#allocation2 + $0x169] sm:$0xff]
      %v607 = vld [vmem:[#allocation2 + $0x171] sm:$0xff]
      %v608 = vpack.c.bf16 %v576, %v576
      %v609 = vpack.c.bf16 %v577, %v577
      %v610 = vpack.c.bf16 %v578, %v578
      %v611 = vpack.c.bf16 %v579, %v579
      %v612 = vpack.c.bf16 %v580, %v580
      %v613 = vpack.c.bf16 %v581, %v581
      %v614 = vpack.c.bf16 %v582, %v582
      %v615 = vpack.c.bf16 %v583, %v583
      %v616 = vpack.c.bf16 %v584, %v584
      %v617 = vpack.c.bf16 %v585, %v585
      %v618 = vpack.c.bf16 %v586, %v586
      %v619 = vpack.c.bf16 %v587, %v587
      %v620 = vpack.c.bf16 %v588, %v588
      %v621 = vpack.c.bf16 %v589, %v589
      %v622 = vpack.c.bf16 %v590, %v590
      %v623 = vpack.c.bf16 %v591, %v591
      %v624 = vpack.c.bf16 %v592, %v592
      %v625 = vpack.c.bf16 %v593, %v593
      %v626 = vpack.c.bf16 %v594, %v594
      %v627 = vpack.c.bf16 %v595, %v595
      %v628 = vpack.c.bf16 %v596, %v596
      %v629 = vpack.c.bf16 %v597, %v597
      %v630 = vpack.c.bf16 %v598, %v598
      %v631 = vpack.c.bf16 %v599, %v599
      %v632 = vpack.c.bf16 %v600, %v600
      %v633 = vpack.c.bf16 %v601, %v601
      %v634 = vpack.c.bf16 %v602, %v602
      %v635 = vpack.c.bf16 %v603, %v603
      %v636 = vpack.c.bf16 %v604, %v604
      %v637 = vpack.c.bf16 %v605, %v605
      %v638 = vpack.c.bf16 %v606, %v606
      %v639 = vpack.c.bf16 %v607, %v607
      %640 = vst [vmem:[#allocation3 + $0x4] sm:$0xf] %v608
      %641 = vst [vmem:[#allocation3 + $0x28] sm:$0xf] %v609
      %642 = vst [vmem:[#allocation3 + $0x4c] sm:$0xf] %v610
      %643 = vst [vmem:[#allocation3 + $0x70] sm:$0xf] %v611
      %644 = vst [vmem:[#allocation3 + $0x94] sm:$0xf] %v612
      %645 = vst [vmem:[#allocation3 + $0xb8] sm:$0xf] %v613
      %646 = vst [vmem:[#allocation3 + $0xdc] sm:$0xf] %v614
      %647 = vst [vmem:[#allocation3 + $0x100] sm:$0xf] %v615
      %648 = vst [vmem:[#allocation3 + $0x124] sm:$0xf] %v616
      %649 = vst [vmem:[#allocation3 + $0x148] sm:$0xf] %v617
      %650 = vst [vmem:[#allocation3 + $0x16c] sm:$0xf] %v618
      %651 = vst [vmem:[#allocation3 + $0x190] sm:$0xf] %v619
      %652 = vst [vmem:[#allocation3 + $0x1b4] sm:$0xf] %v620
      %653 = vst [vmem:[#allocation3 + $0x1d8] sm:$0xf] %v621
      %654 = vst [vmem:[#allocation3 + $0x1fc] sm:$0xf] %v622
      %655 = vst [vmem:[#allocation3 + $0x220] sm:$0xf] %v623
      %656 = vst [vmem:[#allocation3 + $0x244] sm:$0xf] %v624
      %657 = vst [vmem:[#allocation3 + $0x268] sm:$0xf] %v625
      %658 = vst [vmem:[#allocation3 + $0x28c] sm:$0xf] %v626
      %659 = vst [vmem:[#allocation3 + $0x2b0] sm:$0xf] %v627
      %660 = vst [vmem:[#allocation3 + $0x2d4] sm:$0xf] %v628
      %661 = vst [vmem:[#allocation3 + $0x2f8] sm:$0xf] %v629
      %662 = vst [vmem:[#allocation3 + $0x31c] sm:$0xf] %v630
      %663 = vst [vmem:[#allocation3 + $0x340] sm:$0xf] %v631
      %664 = vst [vmem:[#allocation3 + $0x364] sm:$0xf] %v632
      %665 = vst [vmem:[#allocation3 + $0x388] sm:$0xf] %v633
      %666 = vst [vmem:[#allocation3 + $0x3ac] sm:$0xf] %v634
      %667 = vst [vmem:[#allocation3 + $0x3d0] sm:$0xf] %v635
      %668 = vst [vmem:[#allocation3 + $0x3f4] sm:$0xf] %v636
      %669 = vst [vmem:[#allocation3 + $0x418] sm:$0xf] %v637
      %670 = vst [vmem:[#allocation3 + $0x43c] sm:$0xf] %v638
      %671 = vst [vmem:[#allocation3 + $0x460] sm:$0xf] %v639
      %v672 = vld [vmem:[#allocation2 + $0x2] sm:$0xff]
      %v673 = vld [vmem:[#allocation2 + $0xa] sm:$0xff]
      %v674 = vld [vmem:[#allocation2 + $0x1a] sm:$0xff]
      %v675 = vld [vmem:[#allocation2 + $0x22] sm:$0xff]
      %v676 = vld [vmem:[#allocation2 + $0x32] sm:$0xff]
      %v677 = vld [vmem:[#allocation2 + $0x3a] sm:$0xff]
      %v678 = vld [vmem:[#allocation2 + $0x4a] sm:$0xff]
      %v679 = vld [vmem:[#allocation2 + $0x52] sm:$0xff]
      %v680 = vld [vmem:[#allocation2 + $0x62] sm:$0xff]
      %v681 = vld [vmem:[#allocation2 + $0x6a] sm:$0xff]
      %v682 = vld [vmem:[#allocation2 + $0x7a] sm:$0xff]
      %v683 = vld [vmem:[#allocation2 + $0x82] sm:$0xff]
      %v684 = vld [vmem:[#allocation2 + $0x92] sm:$0xff]
      %v685 = vld [vmem:[#allocation2 + $0x9a] sm:$0xff]
      %v686 = vld [vmem:[#allocation2 + $0xaa] sm:$0xff]
      %v687 = vld [vmem:[#allocation2 + $0xb2] sm:$0xff]
      %v688 = vld [vmem:[#allocation2 + $0xc2] sm:$0xff]
      %v689 = vld [vmem:[#allocation2 + $0xca] sm:$0xff]
      %v690 = vld [vmem:[#allocation2 + $0xda] sm:$0xff]
      %v691 = vld [vmem:[#allocation2 + $0xe2] sm:$0xff]
      %v692 = vld [vmem:[#allocation2 + $0xf2] sm:$0xff]
      %v693 = vld [vmem:[#allocation2 + $0xfa] sm:$0xff]
      %v694 = vld [vmem:[#allocation2 + $0x10a] sm:$0xff]
      %v695 = vld [vmem:[#allocation2 + $0x112] sm:$0xff]
      %v696 = vld [vmem:[#allocation2 + $0x122] sm:$0xff]
      %v697 = vld [vmem:[#allocation2 + $0x12a] sm:$0xff]
      %v698 = vld [vmem:[#allocation2 + $0x13a] sm:$0xff]
      %v699 = vld [vmem:[#allocation2 + $0x142] sm:$0xff]
      %v700 = vld [vmem:[#allocation2 + $0x152] sm:$0xff]
      %v701 = vld [vmem:[#allocation2 + $0x15a] sm:$0xff]
      %v702 = vld [vmem:[#allocation2 + $0x16a] sm:$0xff]
      %v703 = vld [vmem:[#allocation2 + $0x172] sm:$0xff]
      %v704 = vpack.c.bf16 %v672, %v672
      %v705 = vpack.c.bf16 %v673, %v673
      %v706 = vpack.c.bf16 %v674, %v674
      %v707 = vpack.c.bf16 %v675, %v675
      %v708 = vpack.c.bf16 %v676, %v676
      %v709 = vpack.c.bf16 %v677, %v677
      %v710 = vpack.c.bf16 %v678, %v678
      %v711 = vpack.c.bf16 %v679, %v679
      %v712 = vpack.c.bf16 %v680, %v680
      %v713 = vpack.c.bf16 %v681, %v681
      %v714 = vpack.c.bf16 %v682, %v682
      %v715 = vpack.c.bf16 %v683, %v683
      %v716 = vpack.c.bf16 %v684, %v684
      %v717 = vpack.c.bf16 %v685, %v685
      %v718 = vpack.c.bf16 %v686, %v686
      %v719 = vpack.c.bf16 %v687, %v687
      %v720 = vpack.c.bf16 %v688, %v688
      %v721 = vpack.c.bf16 %v689, %v689
      %v722 = vpack.c.bf16 %v690, %v690
      %v723 = vpack.c.bf16 %v691, %v691
      %v724 = vpack.c.bf16 %v692, %v692
      %v725 = vpack.c.bf16 %v693, %v693
      %v726 = vpack.c.bf16 %v694, %v694
      %v727 = vpack.c.bf16 %v695, %v695
      %v728 = vpack.c.bf16 %v696, %v696
      %v729 = vpack.c.bf16 %v697, %v697
      %v730 = vpack.c.bf16 %v698, %v698
      %v731 = vpack.c.bf16 %v699, %v699
      %v732 = vpack.c.bf16 %v700, %v700
      %v733 = vpack.c.bf16 %v701, %v701
      %v734 = vpack.c.bf16 %v702, %v702
      %v735 = vpack.c.bf16 %v703, %v703
      %736 = vst [vmem:[#allocation3 + $0x8] sm:$0xf] %v704
      %737 = vst [vmem:[#allocation3 + $0x2c] sm:$0xf] %v705
      %738 = vst [vmem:[#allocation3 + $0x50] sm:$0xf] %v706
      %739 = vst [vmem:[#allocation3 + $0x74] sm:$0xf] %v707
      %740 = vst [vmem:[#allocation3 + $0x98] sm:$0xf] %v708
      %741 = vst [vmem:[#allocation3 + $0xbc] sm:$0xf] %v709
      %742 = vst [vmem:[#allocation3 + $0xe0] sm:$0xf] %v710
      %743 = vst [vmem:[#allocation3 + $0x104] sm:$0xf] %v711
      %744 = vst [vmem:[#allocation3 + $0x128] sm:$0xf] %v712
      %745 = vst [vmem:[#allocation3 + $0x14c] sm:$0xf] %v713
      %746 = vst [vmem:[#allocation3 + $0x170] sm:$0xf] %v714
      %747 = vst [vmem:[#allocation3 + $0x194] sm:$0xf] %v715
      %748 = vst [vmem:[#allocation3 + $0x1b8] sm:$0xf] %v716
      %749 = vst [vmem:[#allocation3 + $0x1dc] sm:$0xf] %v717
      %750 = vst [vmem:[#allocation3 + $0x200] sm:$0xf] %v718
      %751 = vst [vmem:[#allocation3 + $0x224] sm:$0xf] %v719
      %752 = vst [vmem:[#allocation3 + $0x248] sm:$0xf] %v720
      %753 = vst [vmem:[#allocation3 + $0x26c] sm:$0xf] %v721
      %754 = vst [vmem:[#allocation3 + $0x290] sm:$0xf] %v722
      %755 = vst [vmem:[#allocation3 + $0x2b4] sm:$0xf] %v723
      %756 = vst [vmem:[#allocation3 + $0x2d8] sm:$0xf] %v724
      %757 = vst [vmem:[#allocation3 + $0x2fc] sm:$0xf] %v725
      %758 = vst [vmem:[#allocation3 + $0x320] sm:$0xf] %v726
      %759 = vst [vmem:[#allocation3 + $0x344] sm:$0xf] %v727
      %760 = vst [vmem:[#allocation3 + $0x368] sm:$0xf] %v728
      %761 = vst [vmem:[#allocation3 + $0x38c] sm:$0xf] %v729
      %762 = vst [vmem:[#allocation3 + $0x3b0] sm:$0xf] %v730
      %763 = vst [vmem:[#allocation3 + $0x3d4] sm:$0xf] %v731
      %764 = vst [vmem:[#allocation3 + $0x3f8] sm:$0xf] %v732
      %765 = vst [vmem:[#allocation3 + $0x41c] sm:$0xf] %v733
      %766 = vst [vmem:[#allocation3 + $0x440] sm:$0xf] %v734
      %767 = vst [vmem:[#allocation3 + $0x464] sm:$0xf] %v735
      %v768 = vld [vmem:[%s447] sm:$0xff]
      %v769 = vld [vmem:[%s447 + $0x8] sm:$0xff]
      %v770 = vld [vmem:[%s447 + $0x18] sm:$0xff]
      %v771 = vld [vmem:[%s447 + $0x20] sm:$0xff]
      %v772 = vld [vmem:[%s447 + $0x30] sm:$0xff]
      %v773 = vld [vmem:[%s447 + $0x38] sm:$0xff]
      %v774 = vld [vmem:[%s447 + $0x48] sm:$0xff]
      %v775 = vld [vmem:[%s447 + $0x50] sm:$0xff]
      %v776 = vld [vmem:[%s447 + $0x60] sm:$0xff]
      %v777 = vld [vmem:[%s447 + $0x68] sm:$0xff]
      %v778 = vld [vmem:[%s447 + $0x78] sm:$0xff]
      %v779 = vld [vmem:[%s447 + $0x80] sm:$0xff]
      %v780 = vld [vmem:[%s447 + $0x90] sm:$0xff]
      %v781 = vld [vmem:[%s447 + $0x98] sm:$0xff]
      %v782 = vld [vmem:[%s447 + $0xa8] sm:$0xff]
      %v783 = vld [vmem:[%s447 + $0xb0] sm:$0xff]
      %v784 = vld [vmem:[%s447 + $0xc0] sm:$0xff]
      %v785 = vld [vmem:[%s447 + $0xc8] sm:$0xff]
      %v786 = vld [vmem:[%s447 + $0xd8] sm:$0xff]
      %v787 = vld [vmem:[%s447 + $0xe0] sm:$0xff]
      %v788 = vld [vmem:[%s447 + $0xf0] sm:$0xff]
      %v789 = vld [vmem:[%s447 + $0xf8] sm:$0xff]
      %v790 = vld [vmem:[%s447 + $0x108] sm:$0xff]
      %v791 = vld [vmem:[%s447 + $0x110] sm:$0xff]
      %v792 = vld [vmem:[%s447 + $0x120] sm:$0xff]
      %v793 = vld [vmem:[%s447 + $0x128] sm:$0xff]
      %v794 = vld [vmem:[%s447 + $0x138] sm:$0xff]
      %v795 = vld [vmem:[%s447 + $0x140] sm:$0xff]
      %v796 = vld [vmem:[%s447 + $0x150] sm:$0xff]
      %v797 = vld [vmem:[%s447 + $0x158] sm:$0xff]
      %v798 = vld [vmem:[%s447 + $0x168] sm:$0xff]
      %v799 = vld [vmem:[%s447 + $0x170] sm:$0xff]
      %v800 = vpack.c.bf16 %v768, %v768
      %v801 = vpack.c.bf16 %v769, %v769
      %v802 = vpack.c.bf16 %v770, %v770
      %v803 = vpack.c.bf16 %v771, %v771
      %v804 = vpack.c.bf16 %v772, %v772
      %v805 = vpack.c.bf16 %v773, %v773
      %v806 = vpack.c.bf16 %v774, %v774
      %v807 = vpack.c.bf16 %v775, %v775
      %v808 = vpack.c.bf16 %v776, %v776
      %v809 = vpack.c.bf16 %v777, %v777
      %v810 = vpack.c.bf16 %v778, %v778
      %v811 = vpack.c.bf16 %v779, %v779
      %v812 = vpack.c.bf16 %v780, %v780
      %v813 = vpack.c.bf16 %v781, %v781
      %v814 = vpack.c.bf16 %v782, %v782
      %v815 = vpack.c.bf16 %v783, %v783
      %v816 = vpack.c.bf16 %v784, %v784
      %v817 = vpack.c.bf16 %v785, %v785
      %v818 = vpack.c.bf16 %v786, %v786
      %v819 = vpack.c.bf16 %v787, %v787
      %v820 = vpack.c.bf16 %v788, %v788
      %v821 = vpack.c.bf16 %v789, %v789
      %v822 = vpack.c.bf16 %v790, %v790
      %v823 = vpack.c.bf16 %v791, %v791
      %v824 = vpack.c.bf16 %v792, %v792
      %v825 = vpack.c.bf16 %v793, %v793
      %v826 = vpack.c.bf16 %v794, %v794
      %v827 = vpack.c.bf16 %v795, %v795
      %v828 = vpack.c.bf16 %v796, %v796
      %v829 = vpack.c.bf16 %v797, %v797
      %v830 = vpack.c.bf16 %v798, %v798
      %v831 = vpack.c.bf16 %v799, %v799
      %832 = vst [vmem:[#allocation3 + $0xc] sm:$0xf] %v800
      %833 = vst [vmem:[#allocation3 + $0x30] sm:$0xf] %v801
      %834 = vst [vmem:[#allocation3 + $0x54] sm:$0xf] %v802
      %835 = vst [vmem:[#allocation3 + $0x78] sm:$0xf] %v803
      %836 = vst [vmem:[#allocation3 + $0x9c] sm:$0xf] %v804
      %837 = vst [vmem:[#allocation3 + $0xc0] sm:$0xf] %v805
      %838 = vst [vmem:[#allocation3 + $0xe4] sm:$0xf] %v806
      %839 = vst [vmem:[#allocation3 + $0x108] sm:$0xf] %v807
      %840 = vst [vmem:[#allocation3 + $0x12c] sm:$0xf] %v808
      %841 = vst [vmem:[#allocation3 + $0x150] sm:$0xf] %v809
      %842 = vst [vmem:[#allocation3 + $0x174] sm:$0xf] %v810
      %843 = vst [vmem:[#allocation3 + $0x198] sm:$0xf] %v811
      %844 = vst [vmem:[#allocation3 + $0x1bc] sm:$0xf] %v812
      %845 = vst [vmem:[#allocation3 + $0x1e0] sm:$0xf] %v813
      %846 = vst [vmem:[#allocation3 + $0x204] sm:$0xf] %v814
      %847 = vst [vmem:[#allocation3 + $0x228] sm:$0xf] %v815
      %848 = vst [vmem:[#allocation3 + $0x24c] sm:$0xf] %v816
      %849 = vst [vmem:[#allocation3 + $0x270] sm:$0xf] %v817
      %850 = vst [vmem:[#allocation3 + $0x294] sm:$0xf] %v818
      %851 = vst [vmem:[#allocation3 + $0x2b8] sm:$0xf] %v819
      %852 = vst [vmem:[#allocation3 + $0x2dc] sm:$0xf] %v820
      %853 = vst [vmem:[#allocation3 + $0x300] sm:$0xf] %v821
      %854 = vst [vmem:[#allocation3 + $0x324] sm:$0xf] %v822
      %855 = vst [vmem:[#allocation3 + $0x348] sm:$0xf] %v823
      %856 = vst [vmem:[#allocation3 + $0x36c] sm:$0xf] %v824
      %857 = vst [vmem:[#allocation3 + $0x390] sm:$0xf] %v825
      %858 = vst [vmem:[#allocation3 + $0x3b4] sm:$0xf] %v826
      %859 = vst [vmem:[#allocation3 + $0x3d8] sm:$0xf] %v827
      %860 = vst [vmem:[#allocation3 + $0x3fc] sm:$0xf] %v828
      %861 = vst [vmem:[#allocation3 + $0x420] sm:$0xf] %v829
      %862 = vst [vmem:[#allocation3 + $0x444] sm:$0xf] %v830
      %863 = vst [vmem:[#allocation3 + $0x468] sm:$0xf] %v831
      %v864 = vld [vmem:[%s447 + $0x1] sm:$0xff]
      %v865 = vld [vmem:[%s447 + $0x9] sm:$0xff]
      %v866 = vld [vmem:[%s447 + $0x19] sm:$0xff]
      %v867 = vld [vmem:[%s447 + $0x21] sm:$0xff]
      %v868 = vld [vmem:[%s447 + $0x31] sm:$0xff]
      %v869 = vld [vmem:[%s447 + $0x39] sm:$0xff]
      %v870 = vld [vmem:[%s447 + $0x49] sm:$0xff]
      %v871 = vld [vmem:[%s447 + $0x51] sm:$0xff]
      %v872 = vld [vmem:[%s447 + $0x61] sm:$0xff]
      %v873 = vld [vmem:[%s447 + $0x69] sm:$0xff]
      %v874 = vld [vmem:[%s447 + $0x79] sm:$0xff]
      %v875 = vld [vmem:[%s447 + $0x81] sm:$0xff]
      %v876 = vld [vmem:[%s447 + $0x91] sm:$0xff]
      %v877 = vld [vmem:[%s447 + $0x99] sm:$0xff]
      %v878 = vld [vmem:[%s447 + $0xa9] sm:$0xff]
      %v879 = vld [vmem:[%s447 + $0xb1] sm:$0xff]
      %v880 = vld [vmem:[%s447 + $0xc1] sm:$0xff]
      %v881 = vld [vmem:[%s447 + $0xc9] sm:$0xff]
      %v882 = vld [vmem:[%s447 + $0xd9] sm:$0xff]
      %v883 = vld [vmem:[%s447 + $0xe1] sm:$0xff]
      %v884 = vld [vmem:[%s447 + $0xf1] sm:$0xff]
      %v885 = vld [vmem:[%s447 + $0xf9] sm:$0xff]
      %v886 = vld [vmem:[%s447 + $0x109] sm:$0xff]
      %v887 = vld [vmem:[%s447 + $0x111] sm:$0xff]
      %v888 = vld [vmem:[%s447 + $0x121] sm:$0xff]
      %v889 = vld [vmem:[%s447 + $0x129] sm:$0xff]
      %v890 = vld [vmem:[%s447 + $0x139] sm:$0xff]
      %v891 = vld [vmem:[%s447 + $0x141] sm:$0xff]
      %v892 = vld [vmem:[%s447 + $0x151] sm:$0xff]
      %v893 = vld [vmem:[%s447 + $0x159] sm:$0xff]
      %v894 = vld [vmem:[%s447 + $0x169] sm:$0xff]
      %v895 = vld [vmem:[%s447 + $0x171] sm:$0xff]
      %v896 = vpack.c.bf16 %v864, %v864
      %v897 = vpack.c.bf16 %v865, %v865
      %v898 = vpack.c.bf16 %v866, %v866
      %v899 = vpack.c.bf16 %v867, %v867
      %v900 = vpack.c.bf16 %v868, %v868
      %v901 = vpack.c.bf16 %v869, %v869
      %v902 = vpack.c.bf16 %v870, %v870
      %v903 = vpack.c.bf16 %v871, %v871
      %v904 = vpack.c.bf16 %v872, %v872
      %v905 = vpack.c.bf16 %v873, %v873
      %v906 = vpack.c.bf16 %v874, %v874
      %v907 = vpack.c.bf16 %v875, %v875
      %v908 = vpack.c.bf16 %v876, %v876
      %v909 = vpack.c.bf16 %v877, %v877
      %v910 = vpack.c.bf16 %v878, %v878
      %v911 = vpack.c.bf16 %v879, %v879
      %v912 = vpack.c.bf16 %v880, %v880
      %v913 = vpack.c.bf16 %v881, %v881
      %v914 = vpack.c.bf16 %v882, %v882
      %v915 = vpack.c.bf16 %v883, %v883
      %v916 = vpack.c.bf16 %v884, %v884
      %v917 = vpack.c.bf16 %v885, %v885
      %v918 = vpack.c.bf16 %v886, %v886
      %v919 = vpack.c.bf16 %v887, %v887
      %v920 = vpack.c.bf16 %v888, %v888
      %v921 = vpack.c.bf16 %v889, %v889
      %v922 = vpack.c.bf16 %v890, %v890
      %v923 = vpack.c.bf16 %v891, %v891
      %v924 = vpack.c.bf16 %v892, %v892
      %v925 = vpack.c.bf16 %v893, %v893
      %v926 = vpack.c.bf16 %v894, %v894
      %v927 = vpack.c.bf16 %v895, %v895
      %928 = vst [vmem:[#allocation3 + $0x10] sm:$0xf] %v896
      %929 = vst [vmem:[#allocation3 + $0x34] sm:$0xf] %v897
      %930 = vst [vmem:[#allocation3 + $0x58] sm:$0xf] %v898
      %931 = vst [vmem:[#allocation3 + $0x7c] sm:$0xf] %v899
      %932 = vst [vmem:[#allocation3 + $0xa0] sm:$0xf] %v900
      %933 = vst [vmem:[#allocation3 + $0xc4] sm:$0xf] %v901
      %934 = vst [vmem:[#allocation3 + $0xe8] sm:$0xf] %v902
      %935 = vst [vmem:[#allocation3 + $0x10c] sm:$0xf] %v903
      %936 = vst [vmem:[#allocation3 + $0x130] sm:$0xf] %v904
      %937 = vst [vmem:[#allocation3 + $0x154] sm:$0xf] %v905
      %938 = vst [vmem:[#allocation3 + $0x178] sm:$0xf] %v906
      %939 = vst [vmem:[#allocation3 + $0x19c] sm:$0xf] %v907
      %940 = vst [vmem:[#allocation3 + $0x1c0] sm:$0xf] %v908
      %941 = vst [vmem:[#allocation3 + $0x1e4] sm:$0xf] %v909
      %942 = vst [vmem:[#allocation3 + $0x208] sm:$0xf] %v910
      %943 = vst [vmem:[#allocation3 + $0x22c] sm:$0xf] %v911
      %944 = vst [vmem:[#allocation3 + $0x250] sm:$0xf] %v912
      %945 = vst [vmem:[#allocation3 + $0x274] sm:$0xf] %v913
      %946 = vst [vmem:[#allocation3 + $0x298] sm:$0xf] %v914
      %947 = vst [vmem:[#allocation3 + $0x2bc] sm:$0xf] %v915
      %948 = vst [vmem:[#allocation3 + $0x2e0] sm:$0xf] %v916
      %949 = vst [vmem:[#allocation3 + $0x304] sm:$0xf] %v917
      %950 = vst [vmem:[#allocation3 + $0x328] sm:$0xf] %v918
      %951 = vst [vmem:[#allocation3 + $0x34c] sm:$0xf] %v919
      %952 = vst [vmem:[#allocation3 + $0x370] sm:$0xf] %v920
      %953 = vst [vmem:[#allocation3 + $0x394] sm:$0xf] %v921
      %954 = vst [vmem:[#allocation3 + $0x3b8] sm:$0xf] %v922
      %955 = vst [vmem:[#allocation3 + $0x3dc] sm:$0xf] %v923
      %956 = vst [vmem:[#allocation3 + $0x400] sm:$0xf] %v924
      %957 = vst [vmem:[#allocation3 + $0x424] sm:$0xf] %v925
      %958 = vst [vmem:[#allocation3 + $0x448] sm:$0xf] %v926
      %959 = vst [vmem:[#allocation3 + $0x46c] sm:$0xf] %v927
      %v960 = vld [vmem:[%s447 + $0x2] sm:$0xff]
      %v961 = vld [vmem:[%s447 + $0xa] sm:$0xff]
      %v962 = vld [vmem:[%s447 + $0x1a] sm:$0xff]
      %v963 = vld [vmem:[%s447 + $0x22] sm:$0xff]
      %v964 = vld [vmem:[%s447 + $0x32] sm:$0xff]
      %v965 = vld [vmem:[%s447 + $0x3a] sm:$0xff]
      %v966 = vld [vmem:[%s447 + $0x4a] sm:$0xff]
      %v967 = vld [vmem:[%s447 + $0x52] sm:$0xff]
      %v968 = vld [vmem:[%s447 + $0x62] sm:$0xff]
      %v969 = vld [vmem:[%s447 + $0x6a] sm:$0xff]
      %v970 = vld [vmem:[%s447 + $0x7a] sm:$0xff]
      %v971 = vld [vmem:[%s447 + $0x82] sm:$0xff]
      %v972 = vld [vmem:[%s447 + $0x92] sm:$0xff]
      %v973 = vld [vmem:[%s447 + $0x9a] sm:$0xff]
      %v974 = vld [vmem:[%s447 + $0xaa] sm:$0xff]
      %v975 = vld [vmem:[%s447 + $0xb2] sm:$0xff]
      %v976 = vld [vmem:[%s447 + $0xc2] sm:$0xff]
      %v977 = vld [vmem:[%s447 + $0xca] sm:$0xff]
      %v978 = vld [vmem:[%s447 + $0xda] sm:$0xff]
      %v979 = vld [vmem:[%s447 + $0xe2] sm:$0xff]
      %v980 = vld [vmem:[%s447 + $0xf2] sm:$0xff]
      %v981 = vld [vmem:[%s447 + $0xfa] sm:$0xff]
      %v982 = vld [vmem:[%s447 + $0x10a] sm:$0xff]
      %v983 = vld [vmem:[%s447 + $0x112] sm:$0xff]
      %v984 = vld [vmem:[%s447 + $0x122] sm:$0xff]
      %v985 = vld [vmem:[%s447 + $0x12a] sm:$0xff]
      %v986 = vld [vmem:[%s447 + $0x13a] sm:$0xff]
      %v987 = vld [vmem:[%s447 + $0x142] sm:$0xff]
      %v988 = vld [vmem:[%s447 + $0x152] sm:$0xff]
      %v989 = vld [vmem:[%s447 + $0x15a] sm:$0xff]
      %v990 = vld [vmem:[%s447 + $0x16a] sm:$0xff]
      %v991 = vld [vmem:[%s447 + $0x172] sm:$0xff]
      %v992 = vpack.c.bf16 %v960, %v960
      %v993 = vpack.c.bf16 %v961, %v961
      %v994 = vpack.c.bf16 %v962, %v962
      %v995 = vpack.c.bf16 %v963, %v963
      %v996 = vpack.c.bf16 %v964, %v964
      %v997 = vpack.c.bf16 %v965, %v965
      %v998 = vpack.c.bf16 %v966, %v966
      %v999 = vpack.c.bf16 %v967, %v967
      %v1000 = vpack.c.bf16 %v968, %v968
      %v1001 = vpack.c.bf16 %v969, %v969
      %v1002 = vpack.c.bf16 %v970, %v970
      %v1003 = vpack.c.bf16 %v971, %v971
      %v1004 = vpack.c.bf16 %v972, %v972
      %v1005 = vpack.c.bf16 %v973, %v973
      %v1006 = vpack.c.bf16 %v974, %v974
      %v1007 = vpack.c.bf16 %v975, %v975
      %v1008 = vpack.c.bf16 %v976, %v976
      %v1009 = vpack.c.bf16 %v977, %v977
      %v1010 = vpack.c.bf16 %v978, %v978
      %v1011 = vpack.c.bf16 %v979, %v979
      %v1012 = vpack.c.bf16 %v980, %v980
      %v1013 = vpack.c.bf16 %v981, %v981
      %v1014 = vpack.c.bf16 %v982, %v982
      %v1015 = vpack.c.bf16 %v983, %v983
      %v1016 = vpack.c.bf16 %v984, %v984
      %v1017 = vpack.c.bf16 %v985, %v985
      %v1018 = vpack.c.bf16 %v986, %v986
      %v1019 = vpack.c.bf16 %v987, %v987
      %v1020 = vpack.c.bf16 %v988, %v988
      %v1021 = vpack.c.bf16 %v989, %v989
      %v1022 = vpack.c.bf16 %v990, %v990
      %v1023 = vpack.c.bf16 %v991, %v991
      %1024 = vst [vmem:[#allocation3 + $0x14] sm:$0xf] %v992
      %1025 = vst [vmem:[#allocation3 + $0x38] sm:$0xf] %v993
      %1026 = vst [vmem:[#allocation3 + $0x5c] sm:$0xf] %v994
      %1027 = vst [vmem:[#allocation3 + $0x80] sm:$0xf] %v995
      %1028 = vst [vmem:[#allocation3 + $0xa4] sm:$0xf] %v996
      %1029 = vst [vmem:[#allocation3 + $0xc8] sm:$0xf] %v997
      %1030 = vst [vmem:[#allocation3 + $0xec] sm:$0xf] %v998
      %1031 = vst [vmem:[#allocation3 + $0x110] sm:$0xf] %v999
      %1032 = vst [vmem:[#allocation3 + $0x134] sm:$0xf] %v1000
      %1033 = vst [vmem:[#allocation3 + $0x158] sm:$0xf] %v1001
      %1034 = vst [vmem:[#allocation3 + $0x17c] sm:$0xf] %v1002
      %1035 = vst [vmem:[#allocation3 + $0x1a0] sm:$0xf] %v1003
      %1036 = vst [vmem:[#allocation3 + $0x1c4] sm:$0xf] %v1004
      %1037 = vst [vmem:[#allocation3 + $0x1e8] sm:$0xf] %v1005
      %1038 = vst [vmem:[#allocation3 + $0x20c] sm:$0xf] %v1006
      %1039 = vst [vmem:[#allocation3 + $0x230] sm:$0xf] %v1007
      %1040 = vst [vmem:[#allocation3 + $0x254] sm:$0xf] %v1008
      %1041 = vst [vmem:[#allocation3 + $0x278] sm:$0xf] %v1009
      %1042 = vst [vmem:[#allocation3 + $0x29c] sm:$0xf] %v1010
      %1043 = vst [vmem:[#allocation3 + $0x2c0] sm:$0xf] %v1011
      %1044 = vst [vmem:[#allocation3 + $0x2e4] sm:$0xf] %v1012
      %1045 = vst [vmem:[#allocation3 + $0x308] sm:$0xf] %v1013
      %1046 = vst [vmem:[#allocation3 + $0x32c] sm:$0xf] %v1014
      %1047 = vst [vmem:[#allocation3 + $0x350] sm:$0xf] %v1015
      %1048 = vst [vmem:[#allocation3 + $0x374] sm:$0xf] %v1016
      %1049 = vst [vmem:[#allocation3 + $0x398] sm:$0xf] %v1017
      %1050 = vst [vmem:[#allocation3 + $0x3bc] sm:$0xf] %v1018
      %1051 = vst [vmem:[#allocation3 + $0x3e0] sm:$0xf] %v1019
      %1052 = vst [vmem:[#allocation3 + $0x404] sm:$0xf] %v1020
      %1053 = vst [vmem:[#allocation3 + $0x428] sm:$0xf] %v1021
      %1054 = vst [vmem:[#allocation3 + $0x44c] sm:$0xf] %v1022
      %1055 = vst [vmem:[#allocation3 + $0x470] sm:$0xf] %v1023
      %s1056 = scalar_lea.vmem [#allocation2], 48
      %v1057 = vld [vmem:[%s1056] sm:$0xff]
      %v1058 = vld [vmem:[%s1056 + $0x8] sm:$0xff]
      %v1059 = vld [vmem:[%s1056 + $0x18] sm:$0xff]
      %v1060 = vld [vmem:[%s1056 + $0x20] sm:$0xff]
      %v1061 = vld [vmem:[%s1056 + $0x30] sm:$0xff]
      %v1062 = vld [vmem:[%s1056 + $0x38] sm:$0xff]
      %v1063 = vld [vmem:[%s1056 + $0x48] sm:$0xff]
      %v1064 = vld [vmem:[%s1056 + $0x50] sm:$0xff]
      %v1065 = vld [vmem:[%s1056 + $0x60] sm:$0xff]
      %v1066 = vld [vmem:[%s1056 + $0x68] sm:$0xff]
      %v1067 = vld [vmem:[%s1056 + $0x78] sm:$0xff]
      %v1068 = vld [vmem:[%s1056 + $0x80] sm:$0xff]
      %v1069 = vld [vmem:[%s1056 + $0x90] sm:$0xff]
      %v1070 = vld [vmem:[%s1056 + $0x98] sm:$0xff]
      %v1071 = vld [vmem:[%s1056 + $0xa8] sm:$0xff]
      %v1072 = vld [vmem:[%s1056 + $0xb0] sm:$0xff]
      %v1073 = vld [vmem:[%s1056 + $0xc0] sm:$0xff]
      %v1074 = vld [vmem:[%s1056 + $0xc8] sm:$0xff]
      %v1075 = vld [vmem:[%s1056 + $0xd8] sm:$0xff]
      %v1076 = vld [vmem:[%s1056 + $0xe0] sm:$0xff]
      %v1077 = vld [vmem:[%s1056 + $0xf0] sm:$0xff]
      %v1078 = vld [vmem:[%s1056 + $0xf8] sm:$0xff]
      %v1079 = vld [vmem:[%s1056 + $0x108] sm:$0xff]
      %v1080 = vld [vmem:[%s1056 + $0x110] sm:$0xff]
      %v1081 = vld [vmem:[%s1056 + $0x120] sm:$0xff]
      %v1082 = vld [vmem:[%s1056 + $0x128] sm:$0xff]
      %v1083 = vld [vmem:[%s1056 + $0x138] sm:$0xff]
      %v1084 = vld [vmem:[%s1056 + $0x140] sm:$0xff]
      %v1085 = vld [vmem:[%s1056 + $0x150] sm:$0xff]
      %v1086 = vld [vmem:[%s1056 + $0x158] sm:$0xff]
      %v1087 = vld [vmem:[%s1056 + $0x168] sm:$0xff]
      %v1088 = vld [vmem:[%s1056 + $0x170] sm:$0xff]
      %v1089 = vpack.c.bf16 %v1057, %v1057
      %v1090 = vpack.c.bf16 %v1058, %v1058
      %v1091 = vpack.c.bf16 %v1059, %v1059
      %v1092 = vpack.c.bf16 %v1060, %v1060
      %v1093 = vpack.c.bf16 %v1061, %v1061
      %v1094 = vpack.c.bf16 %v1062, %v1062
      %v1095 = vpack.c.bf16 %v1063, %v1063
      %v1096 = vpack.c.bf16 %v1064, %v1064
      %v1097 = vpack.c.bf16 %v1065, %v1065
      %v1098 = vpack.c.bf16 %v1066, %v1066
      %v1099 = vpack.c.bf16 %v1067, %v1067
      %v1100 = vpack.c.bf16 %v1068, %v1068
      %v1101 = vpack.c.bf16 %v1069, %v1069
      %v1102 = vpack.c.bf16 %v1070, %v1070
      %v1103 = vpack.c.bf16 %v1071, %v1071
      %v1104 = vpack.c.bf16 %v1072, %v1072
      %v1105 = vpack.c.bf16 %v1073, %v1073
      %v1106 = vpack.c.bf16 %v1074, %v1074
      %v1107 = vpack.c.bf16 %v1075, %v1075
      %v1108 = vpack.c.bf16 %v1076, %v1076
      %v1109 = vpack.c.bf16 %v1077, %v1077
      %v1110 = vpack.c.bf16 %v1078, %v1078
      %v1111 = vpack.c.bf16 %v1079, %v1079
      %v1112 = vpack.c.bf16 %v1080, %v1080
      %v1113 = vpack.c.bf16 %v1081, %v1081
      %v1114 = vpack.c.bf16 %v1082, %v1082
      %v1115 = vpack.c.bf16 %v1083, %v1083
      %v1116 = vpack.c.bf16 %v1084, %v1084
      %v1117 = vpack.c.bf16 %v1085, %v1085
      %v1118 = vpack.c.bf16 %v1086, %v1086
      %v1119 = vpack.c.bf16 %v1087, %v1087
      %v1120 = vpack.c.bf16 %v1088, %v1088
      %1121 = vst [vmem:[#allocation3 + $0x18] sm:$0xf] %v1089
      %1122 = vst [vmem:[#allocation3 + $0x3c] sm:$0xf] %v1090
      %1123 = vst [vmem:[#allocation3 + $0x60] sm:$0xf] %v1091
      %1124 = vst [vmem:[#allocation3 + $0x84] sm:$0xf] %v1092
      %1125 = vst [vmem:[#allocation3 + $0xa8] sm:$0xf] %v1093
      %1126 = vst [vmem:[#allocation3 + $0xcc] sm:$0xf] %v1094
      %1127 = vst [vmem:[#allocation3 + $0xf0] sm:$0xf] %v1095
      %1128 = vst [vmem:[#allocation3 + $0x114] sm:$0xf] %v1096
      %1129 = vst [vmem:[#allocation3 + $0x138] sm:$0xf] %v1097
      %1130 = vst [vmem:[#allocation3 + $0x15c] sm:$0xf] %v1098
      %1131 = vst [vmem:[#allocation3 + $0x180] sm:$0xf] %v1099
      %1132 = vst [vmem:[#allocation3 + $0x1a4] sm:$0xf] %v1100
      %1133 = vst [vmem:[#allocation3 + $0x1c8] sm:$0xf] %v1101
      %1134 = vst [vmem:[#allocation3 + $0x1ec] sm:$0xf] %v1102
      %1135 = vst [vmem:[#allocation3 + $0x210] sm:$0xf] %v1103
      %1136 = vst [vmem:[#allocation3 + $0x234] sm:$0xf] %v1104
      %1137 = vst [vmem:[#allocation3 + $0x258] sm:$0xf] %v1105
      %1138 = vst [vmem:[#allocation3 + $0x27c] sm:$0xf] %v1106
      %1139 = vst [vmem:[#allocation3 + $0x2a0] sm:$0xf] %v1107
      %1140 = vst [vmem:[#allocation3 + $0x2c4] sm:$0xf] %v1108
      %1141 = vst [vmem:[#allocation3 + $0x2e8] sm:$0xf] %v1109
      %1142 = vst [vmem:[#allocation3 + $0x30c] sm:$0xf] %v1110
      %1143 = vst [vmem:[#allocation3 + $0x330] sm:$0xf] %v1111
      %1144 = vst [vmem:[#allocation3 + $0x354] sm:$0xf] %v1112
      %1145 = vst [vmem:[#allocation3 + $0x378] sm:$0xf] %v1113
      %1146 = vst [vmem:[#allocation3 + $0x39c] sm:$0xf] %v1114
      %1147 = vst [vmem:[#allocation3 + $0x3c0] sm:$0xf] %v1115
      %1148 = vst [vmem:[#allocation3 + $0x3e4] sm:$0xf] %v1116
      %1149 = vst [vmem:[#allocation3 + $0x408] sm:$0xf] %v1117
      %1150 = vst [vmem:[#allocation3 + $0x42c] sm:$0xf] %v1118
      %1151 = vst [vmem:[#allocation3 + $0x450] sm:$0xf] %v1119
      %1152 = vst [vmem:[#allocation3 + $0x474] sm:$0xf] %v1120
      %v1153 = vld [vmem:[%s1056 + $0x1] sm:$0xff]
      %v1154 = vld [vmem:[%s1056 + $0x9] sm:$0xff]
      %v1155 = vld [vmem:[%s1056 + $0x19] sm:$0xff]
      %v1156 = vld [vmem:[%s1056 + $0x21] sm:$0xff]
      %v1157 = vld [vmem:[%s1056 + $0x31] sm:$0xff]
      %v1158 = vld [vmem:[%s1056 + $0x39] sm:$0xff]
      %v1159 = vld [vmem:[%s1056 + $0x49] sm:$0xff]
      %v1160 = vld [vmem:[%s1056 + $0x51] sm:$0xff]
      %v1161 = vld [vmem:[%s1056 + $0x61] sm:$0xff]
      %v1162 = vld [vmem:[%s1056 + $0x69] sm:$0xff]
      %v1163 = vld [vmem:[%s1056 + $0x79] sm:$0xff]
      %v1164 = vld [vmem:[%s1056 + $0x81] sm:$0xff]
      %v1165 = vld [vmem:[%s1056 + $0x91] sm:$0xff]
      %v1166 = vld [vmem:[%s1056 + $0x99] sm:$0xff]
      %v1167 = vld [vmem:[%s1056 + $0xa9] sm:$0xff]
      %v1168 = vld [vmem:[%s1056 + $0xb1] sm:$0xff]
      %v1169 = vld [vmem:[%s1056 + $0xc1] sm:$0xff]
      %v1170 = vld [vmem:[%s1056 + $0xc9] sm:$0xff]
      %v1171 = vld [vmem:[%s1056 + $0xd9] sm:$0xff]
      %v1172 = vld [vmem:[%s1056 + $0xe1] sm:$0xff]
      %v1173 = vld [vmem:[%s1056 + $0xf1] sm:$0xff]
      %v1174 = vld [vmem:[%s1056 + $0xf9] sm:$0xff]
      %v1175 = vld [vmem:[%s1056 + $0x109] sm:$0xff]
      %v1176 = vld [vmem:[%s1056 + $0x111] sm:$0xff]
      %v1177 = vld [vmem:[%s1056 + $0x121] sm:$0xff]
      %v1178 = vld [vmem:[%s1056 + $0x129] sm:$0xff]
      %v1179 = vld [vmem:[%s1056 + $0x139] sm:$0xff]
      %v1180 = vld [vmem:[%s1056 + $0x141] sm:$0xff]
      %v1181 = vld [vmem:[%s1056 + $0x151] sm:$0xff]
      %v1182 = vld [vmem:[%s1056 + $0x159] sm:$0xff]
      %v1183 = vld [vmem:[%s1056 + $0x169] sm:$0xff]
      %v1184 = vld [vmem:[%s1056 + $0x171] sm:$0xff]
      %v1185 = vpack.c.bf16 %v1153, %v1153
      %v1186 = vpack.c.bf16 %v1154, %v1154
      %v1187 = vpack.c.bf16 %v1155, %v1155
      %v1188 = vpack.c.bf16 %v1156, %v1156
      %v1189 = vpack.c.bf16 %v1157, %v1157
      %v1190 = vpack.c.bf16 %v1158, %v1158
      %v1191 = vpack.c.bf16 %v1159, %v1159
      %v1192 = vpack.c.bf16 %v1160, %v1160
      %v1193 = vpack.c.bf16 %v1161, %v1161
      %v1194 = vpack.c.bf16 %v1162, %v1162
      %v1195 = vpack.c.bf16 %v1163, %v1163
      %v1196 = vpack.c.bf16 %v1164, %v1164
      %v1197 = vpack.c.bf16 %v1165, %v1165
      %v1198 = vpack.c.bf16 %v1166, %v1166
      %v1199 = vpack.c.bf16 %v1167, %v1167
      %v1200 = vpack.c.bf16 %v1168, %v1168
      %v1201 = vpack.c.bf16 %v1169, %v1169
      %v1202 = vpack.c.bf16 %v1170, %v1170
      %v1203 = vpack.c.bf16 %v1171, %v1171
      %v1204 = vpack.c.bf16 %v1172, %v1172
      %v1205 = vpack.c.bf16 %v1173, %v1173
      %v1206 = vpack.c.bf16 %v1174, %v1174
      %v1207 = vpack.c.bf16 %v1175, %v1175
      %v1208 = vpack.c.bf16 %v1176, %v1176
      %v1209 = vpack.c.bf16 %v1177, %v1177
      %v1210 = vpack.c.bf16 %v1178, %v1178
      %v1211 = vpack.c.bf16 %v1179, %v1179
      %v1212 = vpack.c.bf16 %v1180, %v1180
      %v1213 = vpack.c.bf16 %v1181, %v1181
      %v1214 = vpack.c.bf16 %v1182, %v1182
      %v1215 = vpack.c.bf16 %v1183, %v1183
      %v1216 = vpack.c.bf16 %v1184, %v1184
      %1217 = vst [vmem:[#allocation3 + $0x1c] sm:$0xf] %v1185
      %1218 = vst [vmem:[#allocation3 + $0x40] sm:$0xf] %v1186
      %1219 = vst [vmem:[#allocation3 + $0x64] sm:$0xf] %v1187
      %1220 = vst [vmem:[#allocation3 + $0x88] sm:$0xf] %v1188
      %1221 = vst [vmem:[#allocation3 + $0xac] sm:$0xf] %v1189
      %1222 = vst [vmem:[#allocation3 + $0xd0] sm:$0xf] %v1190
      %1223 = vst [vmem:[#allocation3 + $0xf4] sm:$0xf] %v1191
      %1224 = vst [vmem:[#allocation3 + $0x118] sm:$0xf] %v1192
      %1225 = vst [vmem:[#allocation3 + $0x13c] sm:$0xf] %v1193
      %1226 = vst [vmem:[#allocation3 + $0x160] sm:$0xf] %v1194
      %1227 = vst [vmem:[#allocation3 + $0x184] sm:$0xf] %v1195
      %1228 = vst [vmem:[#allocation3 + $0x1a8] sm:$0xf] %v1196
      %1229 = vst [vmem:[#allocation3 + $0x1cc] sm:$0xf] %v1197
      %1230 = vst [vmem:[#allocation3 + $0x1f0] sm:$0xf] %v1198
      %1231 = vst [vmem:[#allocation3 + $0x214] sm:$0xf] %v1199
      %1232 = vst [vmem:[#allocation3 + $0x238] sm:$0xf] %v1200
      %1233 = vst [vmem:[#allocation3 + $0x25c] sm:$0xf] %v1201
      %1234 = vst [vmem:[#allocation3 + $0x280] sm:$0xf] %v1202
      %1235 = vst [vmem:[#allocation3 + $0x2a4] sm:$0xf] %v1203
      %1236 = vst [vmem:[#allocation3 + $0x2c8] sm:$0xf] %v1204
      %1237 = vst [vmem:[#allocation3 + $0x2ec] sm:$0xf] %v1205
      %1238 = vst [vmem:[#allocation3 + $0x310] sm:$0xf] %v1206
      %1239 = vst [vmem:[#allocation3 + $0x334] sm:$0xf] %v1207
      %1240 = vst [vmem:[#allocation3 + $0x358] sm:$0xf] %v1208
      %1241 = vst [vmem:[#allocation3 + $0x37c] sm:$0xf] %v1209
      %1242 = vst [vmem:[#allocation3 + $0x3a0] sm:$0xf] %v1210
      %1243 = vst [vmem:[#allocation3 + $0x3c4] sm:$0xf] %v1211
      %1244 = vst [vmem:[#allocation3 + $0x3e8] sm:$0xf] %v1212
      %1245 = vst [vmem:[#allocation3 + $0x40c] sm:$0xf] %v1213
      %1246 = vst [vmem:[#allocation3 + $0x430] sm:$0xf] %v1214
      %1247 = vst [vmem:[#allocation3 + $0x454] sm:$0xf] %v1215
      %1248 = vst [vmem:[#allocation3 + $0x478] sm:$0xf] %v1216
      %v1249 = vld [vmem:[%s1056 + $0x2] sm:$0xff]
      %v1250 = vld [vmem:[%s1056 + $0xa] sm:$0xff]
      %v1251 = vld [vmem:[%s1056 + $0x1a] sm:$0xff]
      %v1252 = vld [vmem:[%s1056 + $0x22] sm:$0xff]
      %v1253 = vld [vmem:[%s1056 + $0x32] sm:$0xff]
      %v1254 = vld [vmem:[%s1056 + $0x3a] sm:$0xff]
      %v1255 = vld [vmem:[%s1056 + $0x4a] sm:$0xff]
      %v1256 = vld [vmem:[%s1056 + $0x52] sm:$0xff]
      %v1257 = vld [vmem:[%s1056 + $0x62] sm:$0xff]
      %v1258 = vld [vmem:[%s1056 + $0x6a] sm:$0xff]
      %v1259 = vld [vmem:[%s1056 + $0x7a] sm:$0xff]
      %v1260 = vld [vmem:[%s1056 + $0x82] sm:$0xff]
      %v1261 = vld [vmem:[%s1056 + $0x92] sm:$0xff]
      %v1262 = vld [vmem:[%s1056 + $0x9a] sm:$0xff]
      %v1263 = vld [vmem:[%s1056 + $0xaa] sm:$0xff]
      %v1264 = vld [vmem:[%s1056 + $0xb2] sm:$0xff]
      %v1265 = vld [vmem:[%s1056 + $0xc2] sm:$0xff]
      %v1266 = vld [vmem:[%s1056 + $0xca] sm:$0xff]
      %v1267 = vld [vmem:[%s1056 + $0xda] sm:$0xff]
      %v1268 = vld [vmem:[%s1056 + $0xe2] sm:$0xff]
      %v1269 = vld [vmem:[%s1056 + $0xf2] sm:$0xff]
      %v1270 = vld [vmem:[%s1056 + $0xfa] sm:$0xff]
      %v1271 = vld [vmem:[%s1056 + $0x10a] sm:$0xff]
      %v1272 = vld [vmem:[%s1056 + $0x112] sm:$0xff]
      %v1273 = vld [vmem:[%s1056 + $0x122] sm:$0xff]
      %v1274 = vld [vmem:[%s1056 + $0x12a] sm:$0xff]
      %v1275 = vld [vmem:[%s1056 + $0x13a] sm:$0xff]
      %v1276 = vld [vmem:[%s1056 + $0x142] sm:$0xff]
      %v1277 = vld [vmem:[%s1056 + $0x152] sm:$0xff]
      %v1278 = vld [vmem:[%s1056 + $0x15a] sm:$0xff]
      %v1279 = vld [vmem:[%s1056 + $0x16a] sm:$0xff]
      %v1280 = vld [vmem:[%s1056 + $0x172] sm:$0xff]
      %v1281 = vpack.c.bf16 %v1249, %v1249
      %v1282 = vpack.c.bf16 %v1250, %v1250
      %v1283 = vpack.c.bf16 %v1251, %v1251
      %v1284 = vpack.c.bf16 %v1252, %v1252
      %v1285 = vpack.c.bf16 %v1253, %v1253
      %v1286 = vpack.c.bf16 %v1254, %v1254
      %v1287 = vpack.c.bf16 %v1255, %v1255
      %v1288 = vpack.c.bf16 %v1256, %v1256
      %v1289 = vpack.c.bf16 %v1257, %v1257
      %v1290 = vpack.c.bf16 %v1258, %v1258
      %v1291 = vpack.c.bf16 %v1259, %v1259
      %v1292 = vpack.c.bf16 %v1260, %v1260
      %v1293 = vpack.c.bf16 %v1261, %v1261
      %v1294 = vpack.c.bf16 %v1262, %v1262
      %v1295 = vpack.c.bf16 %v1263, %v1263
      %v1296 = vpack.c.bf16 %v1264, %v1264
      %v1297 = vpack.c.bf16 %v1265, %v1265
      %v1298 = vpack.c.bf16 %v1266, %v1266
      %v1299 = vpack.c.bf16 %v1267, %v1267
      %v1300 = vpack.c.bf16 %v1268, %v1268
      %v1301 = vpack.c.bf16 %v1269, %v1269
      %v1302 = vpack.c.bf16 %v1270, %v1270
      %v1303 = vpack.c.bf16 %v1271, %v1271
      %v1304 = vpack.c.bf16 %v1272, %v1272
      %v1305 = vpack.c.bf16 %v1273, %v1273
      %v1306 = vpack.c.bf16 %v1274, %v1274
      %v1307 = vpack.c.bf16 %v1275, %v1275
      %v1308 = vpack.c.bf16 %v1276, %v1276
      %v1309 = vpack.c.bf16 %v1277, %v1277
      %v1310 = vpack.c.bf16 %v1278, %v1278
      %v1311 = vpack.c.bf16 %v1279, %v1279
      %v1312 = vpack.c.bf16 %v1280, %v1280
      %1313 = vst [vmem:[#allocation3 + $0x20] sm:$0xf] %v1281
      %1314 = vst [vmem:[#allocation3 + $0x44] sm:$0xf] %v1282
      %1315 = vst [vmem:[#allocation3 + $0x68] sm:$0xf] %v1283
      %1316 = vst [vmem:[#allocation3 + $0x8c] sm:$0xf] %v1284
      %1317 = vst [vmem:[#allocation3 + $0xb0] sm:$0xf] %v1285
      %1318 = vst [vmem:[#allocation3 + $0xd4] sm:$0xf] %v1286
      %1319 = vst [vmem:[#allocation3 + $0xf8] sm:$0xf] %v1287
      %1320 = vst [vmem:[#allocation3 + $0x11c] sm:$0xf] %v1288
      %1321 = vst [vmem:[#allocation3 + $0x140] sm:$0xf] %v1289
      %1322 = vst [vmem:[#allocation3 + $0x164] sm:$0xf] %v1290
      %1323 = vst [vmem:[#allocation3 + $0x188] sm:$0xf] %v1291
      %1324 = vst [vmem:[#allocation3 + $0x1ac] sm:$0xf] %v1292
      %1325 = vst [vmem:[#allocation3 + $0x1d0] sm:$0xf] %v1293
      %1326 = vst [vmem:[#allocation3 + $0x1f4] sm:$0xf] %v1294
      %1327 = vst [vmem:[#allocation3 + $0x218] sm:$0xf] %v1295
      %1328 = vst [vmem:[#allocation3 + $0x23c] sm:$0xf] %v1296
      %1329 = vst [vmem:[#allocation3 + $0x260] sm:$0xf] %v1297
      %1330 = vst [vmem:[#allocation3 + $0x284] sm:$0xf] %v1298
      %1331 = vst [vmem:[#allocation3 + $0x2a8] sm:$0xf] %v1299
      %1332 = vst [vmem:[#allocation3 + $0x2cc] sm:$0xf] %v1300
      %1333 = vst [vmem:[#allocation3 + $0x2f0] sm:$0xf] %v1301
      %1334 = vst [vmem:[#allocation3 + $0x314] sm:$0xf] %v1302
      %1335 = vst [vmem:[#allocation3 + $0x338] sm:$0xf] %v1303
      %1336 = vst [vmem:[#allocation3 + $0x35c] sm:$0xf] %v1304
      %1337 = vst [vmem:[#allocation3 + $0x380] sm:$0xf] %v1305
      %1338 = vst [vmem:[#allocation3 + $0x3a4] sm:$0xf] %v1306
      %1339 = vst [vmem:[#allocation3 + $0x3c8] sm:$0xf] %v1307
      %1340 = vst [vmem:[#allocation3 + $0x3ec] sm:$0xf] %v1308
      %1341 = vst [vmem:[#allocation3 + $0x410] sm:$0xf] %v1309
      %1342 = vst [vmem:[#allocation3 + $0x434] sm:$0xf] %v1310
      %1343 = vst [vmem:[#allocation3 + $0x458] sm:$0xf] %v1311
      %1344 = vst [vmem:[#allocation3 + $0x47c] sm:$0xf] %v1312
      %v1345 = vld [vmem:[#allocation3] sm:$0xff]
      %v1346 = vld [vmem:[#allocation3 + $0x8] sm:$0xff]
      %v1347 = vld [vmem:[#allocation3 + $0x10] sm:$0xff]
      %v1348 = vld [vmem:[#allocation3 + $0x18] sm:$0xff]
      %v1349 = vld [vmem:[#allocation3 + $0x20] sm:$0xf]
      %v1350 = vld [vmem:[#allocation3 + $0x24] sm:$0xff]
      %v1351 = vld [vmem:[#allocation3 + $0x2c] sm:$0xff]
      %v1352 = vld [vmem:[#allocation3 + $0x34] sm:$0xff]
      %v1353 = vld [vmem:[#allocation3 + $0x3c] sm:$0xff]
      %v1354 = vld [vmem:[#allocation3 + $0x44] sm:$0xf]
      %v1355 = vld [vmem:[#allocation3 + $0x48] sm:$0xff]
      %v1356 = vld [vmem:[#allocation3 + $0x50] sm:$0xff]
      %v1357 = vld [vmem:[#allocation3 + $0x58] sm:$0xff]
      %v1358 = vld [vmem:[#allocation3 + $0x60] sm:$0xff]
      %v1359 = vld [vmem:[#allocation3 + $0x68] sm:$0xf]
      %v1360 = vld [vmem:[#allocation3 + $0x6c] sm:$0xff]
      %v1361 = vld [vmem:[#allocation3 + $0x74] sm:$0xff]
      %v1362 = vld [vmem:[#allocation3 + $0x7c] sm:$0xff]
      %v1363 = vld [vmem:[#allocation3 + $0x84] sm:$0xff]
      %v1364 = vld [vmem:[#allocation3 + $0x8c] sm:$0xf]
      %v1365 = vld [vmem:[#allocation3 + $0x90] sm:$0xff]
      %v1366 = vld [vmem:[#allocation3 + $0x98] sm:$0xff]
      %v1367 = vld [vmem:[#allocation3 + $0xa0] sm:$0xff]
      %v1368 = vld [vmem:[#allocation3 + $0xa8] sm:$0xff]
      %v1369 = vld [vmem:[#allocation3 + $0xb0] sm:$0xf]
      %v1370 = vld [vmem:[#allocation3 + $0xb4] sm:$0xff]
      %v1371 = vld [vmem:[#allocation3 + $0xbc] sm:$0xff]
      %v1372 = vld [vmem:[#allocation3 + $0xc4] sm:$0xff]
      %v1373 = vld [vmem:[#allocation3 + $0xcc] sm:$0xff]
      %v1374 = vld [vmem:[#allocation3 + $0xd4] sm:$0xf]
      %v1375 = vld [vmem:[#allocation3 + $0xd8] sm:$0xff]
      %v1376 = vld [vmem:[#allocation3 + $0xe0] sm:$0xff]
      %v1377 = vld [vmem:[#allocation3 + $0xe8] sm:$0xff]
      %v1378 = vld [vmem:[#allocation3 + $0xf0] sm:$0xff]
      %v1379 = vld [vmem:[#allocation3 + $0xf8] sm:$0xf]
      %v1380 = vld [vmem:[#allocation3 + $0xfc] sm:$0xff]
      %v1381 = vld [vmem:[#allocation3 + $0x104] sm:$0xff]
      %v1382 = vld [vmem:[#allocation3 + $0x10c] sm:$0xff]
      %v1383 = vld [vmem:[#allocation3 + $0x114] sm:$0xff]
      %v1384 = vld [vmem:[#allocation3 + $0x11c] sm:$0xf]
      %v1385 = vld [vmem:[#allocation3 + $0x120] sm:$0xff]
      %v1386 = vld [vmem:[#allocation3 + $0x128] sm:$0xff]
      %v1387 = vld [vmem:[#allocation3 + $0x130] sm:$0xff]
      %v1388 = vld [vmem:[#allocation3 + $0x138] sm:$0xff]
      %v1389 = vld [vmem:[#allocation3 + $0x140] sm:$0xf]
      %v1390 = vld [vmem:[#allocation3 + $0x144] sm:$0xff]
      %v1391 = vld [vmem:[#allocation3 + $0x14c] sm:$0xff]
      %v1392 = vld [vmem:[#allocation3 + $0x154] sm:$0xff]
      %v1393 = vld [vmem:[#allocation3 + $0x15c] sm:$0xff]
      %v1394 = vld [vmem:[#allocation3 + $0x164] sm:$0xf]
      %v1395 = vld [vmem:[#allocation3 + $0x168] sm:$0xff]
      %v1396 = vld [vmem:[#allocation3 + $0x170] sm:$0xff]
      %v1397 = vld [vmem:[#allocation3 + $0x178] sm:$0xff]
      %v1398 = vld [vmem:[#allocation3 + $0x180] sm:$0xff]
      %v1399 = vld [vmem:[#allocation3 + $0x188] sm:$0xf]
      %v1400 = vld [vmem:[#allocation3 + $0x18c] sm:$0xff]
      %v1401 = vld [vmem:[#allocation3 + $0x194] sm:$0xff]
      %v1402 = vld [vmem:[#allocation3 + $0x19c] sm:$0xff]
      %v1403 = vld [vmem:[#allocation3 + $0x1a4] sm:$0xff]
      %v1404 = vld [vmem:[#allocation3 + $0x1ac] sm:$0xf]
      %v1405 = vld [vmem:[#allocation3 + $0x1b0] sm:$0xff]
      %v1406 = vld [vmem:[#allocation3 + $0x1b8] sm:$0xff]
      %v1407 = vld [vmem:[#allocation3 + $0x1c0] sm:$0xff]
      %v1408 = vld [vmem:[#allocation3 + $0x1c8] sm:$0xff]
      %v1409 = vld [vmem:[#allocation3 + $0x1d0] sm:$0xf]
      %v1410 = vld [vmem:[#allocation3 + $0x1d4] sm:$0xff]
      %v1411 = vld [vmem:[#allocation3 + $0x1dc] sm:$0xff]
      %v1412 = vld [vmem:[#allocation3 + $0x1e4] sm:$0xff]
      %v1413 = vld [vmem:[#allocation3 + $0x1ec] sm:$0xff]
      %v1414 = vld [vmem:[#allocation3 + $0x1f4] sm:$0xf]
      %v1415 = vld [vmem:[#allocation3 + $0x1f8] sm:$0xff]
      %v1416 = vld [vmem:[#allocation3 + $0x200] sm:$0xff]
      %v1417 = vld [vmem:[#allocation3 + $0x208] sm:$0xff]
      %v1418 = vld [vmem:[#allocation3 + $0x210] sm:$0xff]
      %v1419 = vld [vmem:[#allocation3 + $0x218] sm:$0xf]
      %v1420 = vld [vmem:[#allocation3 + $0x21c] sm:$0xff]
      %v1421 = vld [vmem:[#allocation3 + $0x224] sm:$0xff]
      %v1422 = vld [vmem:[#allocation3 + $0x22c] sm:$0xff]
      %v1423 = vld [vmem:[#allocation3 + $0x234] sm:$0xff]
      %v1424 = vld [vmem:[#allocation3 + $0x23c] sm:$0xf]
      %v1425 = vld [vmem:[#allocation3 + $0x240] sm:$0xff]
      %v1426 = vld [vmem:[#allocation3 + $0x248] sm:$0xff]
      %v1427 = vld [vmem:[#allocation3 + $0x250] sm:$0xff]
      %v1428 = vld [vmem:[#allocation3 + $0x258] sm:$0xff]
      %v1429 = vld [vmem:[#allocation3 + $0x260] sm:$0xf]
      %v1430 = vld [vmem:[#allocation3 + $0x264] sm:$0xff]
      %v1431 = vld [vmem:[#allocation3 + $0x26c] sm:$0xff]
      %v1432 = vld [vmem:[#allocation3 + $0x274] sm:$0xff]
      %v1433 = vld [vmem:[#allocation3 + $0x27c] sm:$0xff]
      %v1434 = vld [vmem:[#allocation3 + $0x284] sm:$0xf]
      %v1435 = vld [vmem:[#allocation3 + $0x288] sm:$0xff]
      %v1436 = vld [vmem:[#allocation3 + $0x290] sm:$0xff]
      %v1437 = vld [vmem:[#allocation3 + $0x298] sm:$0xff]
      %v1438 = vld [vmem:[#allocation3 + $0x2a0] sm:$0xff]
      %v1439 = vld [vmem:[#allocation3 + $0x2a8] sm:$0xf]
      %v1440 = vld [vmem:[#allocation3 + $0x2ac] sm:$0xff]
      %v1441 = vld [vmem:[#allocation3 + $0x2b4] sm:$0xff]
      %v1442 = vld [vmem:[#allocation3 + $0x2bc] sm:$0xff]
      %v1443 = vld [vmem:[#allocation3 + $0x2c4] sm:$0xff]
      %v1444 = vld [vmem:[#allocation3 + $0x2cc] sm:$0xf]
      %v1445 = vld [vmem:[#allocation3 + $0x2d0] sm:$0xff]
      %v1446 = vld [vmem:[#allocation3 + $0x2d8] sm:$0xff]
      %v1447 = vld [vmem:[#allocation3 + $0x2e0] sm:$0xff]
      %v1448 = vld [vmem:[#allocation3 + $0x2e8] sm:$0xff]
      %v1449 = vld [vmem:[#allocation3 + $0x2f0] sm:$0xf]
      %v1450 = vld [vmem:[#allocation3 + $0x2f4] sm:$0xff]
      %v1451 = vld [vmem:[#allocation3 + $0x2fc] sm:$0xff]
      %v1452 = vld [vmem:[#allocation3 + $0x304] sm:$0xff]
      %v1453 = vld [vmem:[#allocation3 + $0x30c] sm:$0xff]
      %v1454 = vld [vmem:[#allocation3 + $0x314] sm:$0xf]
      %v1455 = vld [vmem:[#allocation3 + $0x318] sm:$0xff]
      %v1456 = vld [vmem:[#allocation3 + $0x320] sm:$0xff]
      %v1457 = vld [vmem:[#allocation3 + $0x328] sm:$0xff]
      %v1458 = vld [vmem:[#allocation3 + $0x330] sm:$0xff]
      %v1459 = vld [vmem:[#allocation3 + $0x338] sm:$0xf]
      %v1460 = vld [vmem:[#allocation3 + $0x33c] sm:$0xff]
      %v1461 = vld [vmem:[#allocation3 + $0x344] sm:$0xff]
      %v1462 = vld [vmem:[#allocation3 + $0x34c] sm:$0xff]
      %v1463 = vld [vmem:[#allocation3 + $0x354] sm:$0xff]
      %v1464 = vld [vmem:[#allocation3 + $0x35c] sm:$0xf]
      %v1465 = vld [vmem:[#allocation3 + $0x360] sm:$0xff]
      %v1466 = vld [vmem:[#allocation3 + $0x368] sm:$0xff]
      %v1467 = vld [vmem:[#allocation3 + $0x370] sm:$0xff]
      %v1468 = vld [vmem:[#allocation3 + $0x378] sm:$0xff]
      %v1469 = vld [vmem:[#allocation3 + $0x380] sm:$0xf]
      %v1470 = vld [vmem:[#allocation3 + $0x384] sm:$0xff]
      %v1471 = vld [vmem:[#allocation3 + $0x38c] sm:$0xff]
      %v1472 = vld [vmem:[#allocation3 + $0x394] sm:$0xff]
      %v1473 = vld [vmem:[#allocation3 + $0x39c] sm:$0xff]
      %v1474 = vld [vmem:[#allocation3 + $0x3a4] sm:$0xf]
      %v1475 = vld [vmem:[#allocation3 + $0x3a8] sm:$0xff]
      %v1476 = vld [vmem:[#allocation3 + $0x3b0] sm:$0xff]
      %v1477 = vld [vmem:[#allocation3 + $0x3b8] sm:$0xff]
      %v1478 = vld [vmem:[#allocation3 + $0x3c0] sm:$0xff]
      %v1479 = vld [vmem:[#allocation3 + $0x3c8] sm:$0xf]
      %v1480 = vld [vmem:[#allocation3 + $0x3cc] sm:$0xff]
      %v1481 = vld [vmem:[#allocation3 + $0x3d4] sm:$0xff]
      %v1482 = vld [vmem:[#allocation3 + $0x3dc] sm:$0xff]
      %v1483 = vld [vmem:[#allocation3 + $0x3e4] sm:$0xff]
      %v1484 = vld [vmem:[#allocation3 + $0x3ec] sm:$0xf]
      %v1485 = vld [vmem:[#allocation3 + $0x3f0] sm:$0xff]
      %v1486 = vld [vmem:[#allocation3 + $0x3f8] sm:$0xff]
      %v1487 = vld [vmem:[#allocation3 + $0x400] sm:$0xff]
      %v1488 = vld [vmem:[#allocation3 + $0x408] sm:$0xff]
      %v1489 = vld [vmem:[#allocation3 + $0x410] sm:$0xf]
      %v1490 = vld [vmem:[#allocation3 + $0x414] sm:$0xff]
      %v1491 = vld [vmem:[#allocation3 + $0x41c] sm:$0xff]
      %v1492 = vld [vmem:[#allocation3 + $0x424] sm:$0xff]
      %v1493 = vld [vmem:[#allocation3 + $0x42c] sm:$0xff]
      %v1494 = vld [vmem:[#allocation3 + $0x434] sm:$0xf]
      %v1495 = vld [vmem:[#allocation3 + $0x438] sm:$0xff]
      %v1496 = vld [vmem:[#allocation3 + $0x440] sm:$0xff]
      %v1497 = vld [vmem:[#allocation3 + $0x448] sm:$0xff]
      %v1498 = vld [vmem:[#allocation3 + $0x450] sm:$0xff]
      %v1499 = vld [vmem:[#allocation3 + $0x458] sm:$0xf]
      %v1500 = vld [vmem:[#allocation3 + $0x45c] sm:$0xff]
      %v1501 = vld [vmem:[#allocation3 + $0x464] sm:$0xff]
      %v1502 = vld [vmem:[#allocation3 + $0x46c] sm:$0xff]
      %v1503 = vld [vmem:[#allocation3 + $0x474] sm:$0xff]
      %v1504 = vld [vmem:[#allocation3 + $0x47c] sm:$0xf]
      %v1505 = vld [vmem:[%s3] sm:$0xf]
      %v1506 = vld [vmem:[%s3 + $0x4] sm:$0xf]
      %v1507 = vld [vmem:[%s3 + $0x8] sm:$0xf]
      %v1508 = vld [vmem:[%s3 + $0xc] sm:$0xf]
      %v1509 = vld [vmem:[%s3 + $0x10] sm:$0xf]
      %v1510 = vld [vmem:[%s3 + $0x14] sm:$0xf]
      %v1511 = vld [vmem:[%s3 + $0x18] sm:$0xf]
      %v1512 = vld [vmem:[%s3 + $0x1c] sm:$0xf]
      %v1513 = vld [vmem:[%s3 + $0x20] sm:$0xf]
      %v1514 = vld [vmem:[%s3 + $0x24] sm:$0xf]
      %v1515 = vld [vmem:[%s3 + $0x28] sm:$0xf]
      %v1516 = vld [vmem:[%s3 + $0x2c] sm:$0xf]
      %v1517 = vld [vmem:[%s3 + $0x30] sm:$0xf]
      %v1518 = vld [vmem:[%s3 + $0x34] sm:$0xf]
      %v1519 = vld [vmem:[%s3 + $0x38] sm:$0xf]
      %v1520 = vld [vmem:[%s3 + $0x3c] sm:$0xf]
      %v1521 = vld [vmem:[%s3 + $0x40] sm:$0xf]
      %v1522 = vld [vmem:[%s3 + $0x44] sm:$0xf]
      %v1523 = vld [vmem:[%s3 + $0x48] sm:$0xf]
      %v1524 = vld [vmem:[%s3 + $0x4c] sm:$0xf]
      %v1525 = vld [vmem:[%s3 + $0x50] sm:$0xf]
      %v1526 = vld [vmem:[%s3 + $0x54] sm:$0xf]
      %v1527 = vld [vmem:[%s3 + $0x58] sm:$0xf]
      %v1528 = vld [vmem:[%s3 + $0x5c] sm:$0xf]
      %v1529 = vld [vmem:[%s3 + $0x60] sm:$0xf]
      %v1530 = vld [vmem:[%s3 + $0x64] sm:$0xf]
      %v1531 = vld [vmem:[%s3 + $0x68] sm:$0xf]
      %v1532 = vld [vmem:[%s3 + $0x6c] sm:$0xf]
      %v1533 = vld [vmem:[%s3 + $0x70] sm:$0xf]
      %v1534 = vld [vmem:[%s3 + $0x74] sm:$0xf]
      %v1535 = vld [vmem:[%s3 + $0x78] sm:$0xf]
      %v1536 = vld [vmem:[%s3 + $0x7c] sm:$0xf]
      %v1537 = vld [vmem:[%s3 + $0x80] sm:$0xf]
      %v1538 = vld [vmem:[%s3 + $0x84] sm:$0xf]
      %v1539 = vld [vmem:[%s3 + $0x88] sm:$0xf]
      %v1540 = vld [vmem:[%s3 + $0x8c] sm:$0xf]
      %v1541 = vld [vmem:[%s3 + $0x90] sm:$0xf]
      %v1542 = vld [vmem:[%s3 + $0x94] sm:$0xf]
      %v1543 = vld [vmem:[%s3 + $0x98] sm:$0xf]
      %v1544 = vld [vmem:[%s3 + $0x9c] sm:$0xf]
      %v1545 = vld [vmem:[%s3 + $0xa0] sm:$0xf]
      %v1546 = vld [vmem:[%s3 + $0xa4] sm:$0xf]
      %v1547 = vld [vmem:[%s3 + $0xa8] sm:$0xf]
      %v1548 = vld [vmem:[%s3 + $0xac] sm:$0xf]
      %v1549 = vld [vmem:[%s3 + $0xb0] sm:$0xf]
      %v1550 = vld [vmem:[%s3 + $0xb4] sm:$0xf]
      %v1551 = vld [vmem:[%s3 + $0xb8] sm:$0xf]
      %v1552 = vld [vmem:[%s3 + $0xbc] sm:$0xf]
      %v1553 = vld [vmem:[%s3 + $0xc0] sm:$0xf]
      %v1554 = vld [vmem:[%s3 + $0xc4] sm:$0xf]
      %v1555 = vld [vmem:[%s3 + $0xc8] sm:$0xf]
      %v1556 = vld [vmem:[%s3 + $0xcc] sm:$0xf]
      %v1557 = vld [vmem:[%s3 + $0xd0] sm:$0xf]
      %v1558 = vld [vmem:[%s3 + $0xd4] sm:$0xf]
      %v1559 = vld [vmem:[%s3 + $0xd8] sm:$0xf]
      %v1560 = vld [vmem:[%s3 + $0xdc] sm:$0xf]
      %v1561 = vld [vmem:[%s3 + $0xe0] sm:$0xf]
      %v1562 = vld [vmem:[%s3 + $0xe4] sm:$0xf]
      %v1563 = vld [vmem:[%s3 + $0xe8] sm:$0xf]
      %v1564 = vld [vmem:[%s3 + $0xec] sm:$0xf]
      %v1565 = vld [vmem:[%s3 + $0xf0] sm:$0xf]
      %v1566 = vld [vmem:[%s3 + $0xf4] sm:$0xf]
      %v1567 = vld [vmem:[%s3 + $0xf8] sm:$0xf]
      %v1568 = vld [vmem:[%s3 + $0xfc] sm:$0xf]
      %v1569 = vld [vmem:[%s3 + $0x100] sm:$0xf]
      %v1570 = vld [vmem:[%s3 + $0x104] sm:$0xf]
      %v1571 = vld [vmem:[%s3 + $0x108] sm:$0xf]
      %v1572 = vld [vmem:[%s3 + $0x10c] sm:$0xf]
      %v1573 = vld [vmem:[%s3 + $0x110] sm:$0xf]
      %v1574 = vld [vmem:[%s3 + $0x114] sm:$0xf]
      %v1575 = vld [vmem:[%s3 + $0x118] sm:$0xf]
      %v1576 = vld [vmem:[%s3 + $0x11c] sm:$0xf]
      %v1577 = vld [vmem:[%s3 + $0x120] sm:$0xf]
      %v1578 = vld [vmem:[%s3 + $0x124] sm:$0xf]
      %v1579 = vld [vmem:[%s3 + $0x128] sm:$0xf]
      %v1580 = vld [vmem:[%s3 + $0x12c] sm:$0xf]
      %v1581 = vld [vmem:[%s3 + $0x130] sm:$0xf]
      %v1582 = vld [vmem:[%s3 + $0x134] sm:$0xf]
      %v1583 = vld [vmem:[%s3 + $0x138] sm:$0xf]
      %v1584 = vld [vmem:[%s3 + $0x13c] sm:$0xf]
      %v1585 = vld [vmem:[%s3 + $0x140] sm:$0xf]
      %v1586 = vld [vmem:[%s3 + $0x144] sm:$0xf]
      %v1587 = vld [vmem:[%s3 + $0x148] sm:$0xf]
      %v1588 = vld [vmem:[%s3 + $0x14c] sm:$0xf]
      %v1589 = vld [vmem:[%s3 + $0x150] sm:$0xf]
      %v1590 = vld [vmem:[%s3 + $0x154] sm:$0xf]
      %v1591 = vld [vmem:[%s3 + $0x158] sm:$0xf]
      %v1592 = vld [vmem:[%s3 + $0x15c] sm:$0xf]
      %v1593 = vld [vmem:[%s3 + $0x160] sm:$0xf]
      %v1594 = vld [vmem:[%s3 + $0x164] sm:$0xf]
      %v1595 = vld [vmem:[%s3 + $0x168] sm:$0xf]
      %v1596 = vld [vmem:[%s3 + $0x16c] sm:$0xf]
      %v1597 = vld [vmem:[%s3 + $0x170] sm:$0xf]
      %v1598 = vld [vmem:[%s3 + $0x174] sm:$0xf]
      %v1599 = vld [vmem:[%s3 + $0x178] sm:$0xf]
      %v1600 = vld [vmem:[%s3 + $0x17c] sm:$0xf]
      %v1601 = vld [vmem:[%s3 + $0x180] sm:$0xf]
      %v1602 = vld [vmem:[%s3 + $0x184] sm:$0xf]
      %v1603 = vld [vmem:[%s3 + $0x188] sm:$0xf]
      %v1604 = vld [vmem:[%s3 + $0x18c] sm:$0xf]
      %v1605 = vld [vmem:[%s3 + $0x190] sm:$0xf]
      %v1606 = vld [vmem:[%s3 + $0x194] sm:$0xf]
      %v1607 = vld [vmem:[%s3 + $0x198] sm:$0xf]
      %v1608 = vld [vmem:[%s3 + $0x19c] sm:$0xf]
      %v1609 = vld [vmem:[%s3 + $0x1a0] sm:$0xf]
      %v1610 = vld [vmem:[%s3 + $0x1a4] sm:$0xf]
      %v1611 = vld [vmem:[%s3 + $0x1a8] sm:$0xf]
      %v1612 = vld [vmem:[%s3 + $0x1ac] sm:$0xf]
      %v1613 = vld [vmem:[%s3 + $0x1b0] sm:$0xf]
      %v1614 = vld [vmem:[%s3 + $0x1b4] sm:$0xf]
      %v1615 = vld [vmem:[%s3 + $0x1b8] sm:$0xf]
      %v1616 = vld [vmem:[%s3 + $0x1bc] sm:$0xf]
      %v1617 = vld [vmem:[%s3 + $0x1c0] sm:$0xf]
      %v1618 = vld [vmem:[%s3 + $0x1c4] sm:$0xf]
      %v1619 = vld [vmem:[%s3 + $0x1c8] sm:$0xf]
      %v1620 = vld [vmem:[%s3 + $0x1cc] sm:$0xf]
      %v1621 = vld [vmem:[%s3 + $0x1d0] sm:$0xf]
      %v1622 = vld [vmem:[%s3 + $0x1d4] sm:$0xf]
      %v1623 = vld [vmem:[%s3 + $0x1d8] sm:$0xf]
      %v1624 = vld [vmem:[%s3 + $0x1dc] sm:$0xf]
      %v1625 = vld [vmem:[%s3 + $0x1e0] sm:$0xf]
      %v1626 = vld [vmem:[%s3 + $0x1e4] sm:$0xf]
      %v1627 = vld [vmem:[%s3 + $0x1e8] sm:$0xf]
      %v1628 = vld [vmem:[%s3 + $0x1ec] sm:$0xf]
      %v1629 = vld [vmem:[%s3 + $0x1f0] sm:$0xf]
      %v1630 = vld [vmem:[%s3 + $0x1f4] sm:$0xf]
      %v1631 = vld [vmem:[%s3 + $0x1f8] sm:$0xf]
      %v1632 = vld [vmem:[%s3 + $0x1fc] sm:$0xf]
      %v1633 = vld [vmem:[%s3 + $0x200] sm:$0xf]
      %v1634 = vld [vmem:[%s3 + $0x204] sm:$0xf]
      %v1635 = vld [vmem:[%s3 + $0x208] sm:$0xf]
      %v1636 = vld [vmem:[%s3 + $0x20c] sm:$0xf]
      %v1637 = vld [vmem:[%s3 + $0x210] sm:$0xf]
      %v1638 = vld [vmem:[%s3 + $0x214] sm:$0xf]
      %v1639 = vld [vmem:[%s3 + $0x218] sm:$0xf]
      %v1640 = vld [vmem:[%s3 + $0x21c] sm:$0xf]
      %v1641 = vld [vmem:[%s3 + $0x220] sm:$0xf]
      %v1642 = vld [vmem:[%s3 + $0x224] sm:$0xf]
      %v1643 = vld [vmem:[%s3 + $0x228] sm:$0xf]
      %v1644 = vld [vmem:[%s3 + $0x22c] sm:$0xf]
      %v1645 = vld [vmem:[%s3 + $0x230] sm:$0xf]
      %v1646 = vld [vmem:[%s3 + $0x234] sm:$0xf]
      %v1647 = vld [vmem:[%s3 + $0x238] sm:$0xf]
      %v1648 = vld [vmem:[%s3 + $0x23c] sm:$0xf]
      %v1809 = vunpack.c.l.b16 %v1345
      %v1810 = vunpack.c.h.b16 %v1345
      %v1811 = vunpack.c.l.b16 %v1346
      %v1812 = vunpack.c.h.b16 %v1346
      %v1813 = vunpack.c.l.b16 %v1347
      %v1814 = vunpack.c.h.b16 %v1347
      %v1815 = vunpack.c.l.b16 %v1348
      %v1816 = vunpack.c.h.b16 %v1348
      %v1817 = vunpack.c.l.b16 %v1349
      %v1818 = vunpack.c.l.b16 %v1350
      %v1819 = vunpack.c.h.b16 %v1350
      %v1820 = vunpack.c.l.b16 %v1351
      %v1821 = vunpack.c.h.b16 %v1351
      %v1822 = vunpack.c.l.b16 %v1352
      %v1823 = vunpack.c.h.b16 %v1352
      %v1824 = vunpack.c.l.b16 %v1353
      %v1825 = vunpack.c.h.b16 %v1353
      %v1826 = vunpack.c.l.b16 %v1354
      %v1827 = vunpack.c.l.b16 %v1355
      %v1828 = vunpack.c.h.b16 %v1355
      %v1829 = vunpack.c.l.b16 %v1356
      %v1830 = vunpack.c.h.b16 %v1356
      %v1831 = vunpack.c.l.b16 %v1357
      %v1832 = vunpack.c.h.b16 %v1357
      %v1833 = vunpack.c.l.b16 %v1358
      %v1834 = vunpack.c.h.b16 %v1358
      %v1835 = vunpack.c.l.b16 %v1359
      %v1836 = vunpack.c.l.b16 %v1360
      %v1837 = vunpack.c.h.b16 %v1360
      %v1838 = vunpack.c.l.b16 %v1361
      %v1839 = vunpack.c.h.b16 %v1361
      %v1840 = vunpack.c.l.b16 %v1362
      %v1841 = vunpack.c.h.b16 %v1362
      %v1842 = vunpack.c.l.b16 %v1363
      %v1843 = vunpack.c.h.b16 %v1363
      %v1844 = vunpack.c.l.b16 %v1364
      %v1845 = vunpack.c.l.b16 %v1365
      %v1846 = vunpack.c.h.b16 %v1365
      %v1847 = vunpack.c.l.b16 %v1366
      %v1848 = vunpack.c.h.b16 %v1366
      %v1849 = vunpack.c.l.b16 %v1367
      %v1850 = vunpack.c.h.b16 %v1367
      %v1851 = vunpack.c.l.b16 %v1368
      %v1852 = vunpack.c.h.b16 %v1368
      %v1853 = vunpack.c.l.b16 %v1369
      %v1854 = vunpack.c.l.b16 %v1370
      %v1855 = vunpack.c.h.b16 %v1370
      %v1856 = vunpack.c.l.b16 %v1371
      %v1857 = vunpack.c.h.b16 %v1371
      %v1858 = vunpack.c.l.b16 %v1372
      %v1859 = vunpack.c.h.b16 %v1372
      %v1860 = vunpack.c.l.b16 %v1373
      %v1861 = vunpack.c.h.b16 %v1373
      %v1862 = vunpack.c.l.b16 %v1374
      %v1863 = vunpack.c.l.b16 %v1375
      %v1864 = vunpack.c.h.b16 %v1375
      %v1865 = vunpack.c.l.b16 %v1376
      %v1866 = vunpack.c.h.b16 %v1376
      %v1867 = vunpack.c.l.b16 %v1377
      %v1868 = vunpack.c.h.b16 %v1377
      %v1869 = vunpack.c.l.b16 %v1378
      %v1870 = vunpack.c.h.b16 %v1378
      %v1871 = vunpack.c.l.b16 %v1379
      %v1872 = vunpack.c.l.b16 %v1380
      %v1873 = vunpack.c.h.b16 %v1380
      %v1874 = vunpack.c.l.b16 %v1381
      %v1875 = vunpack.c.h.b16 %v1381
      %v1876 = vunpack.c.l.b16 %v1382
      %v1877 = vunpack.c.h.b16 %v1382
      %v1878 = vunpack.c.l.b16 %v1383
      %v1879 = vunpack.c.h.b16 %v1383
      %v1880 = vunpack.c.l.b16 %v1384
      %v1881 = vunpack.c.l.b16 %v1385
      %v1882 = vunpack.c.h.b16 %v1385
      %v1883 = vunpack.c.l.b16 %v1386
      %v1884 = vunpack.c.h.b16 %v1386
      %v1885 = vunpack.c.l.b16 %v1387
      %v1886 = vunpack.c.h.b16 %v1387
      %v1887 = vunpack.c.l.b16 %v1388
      %v1888 = vunpack.c.h.b16 %v1388
      %v1889 = vunpack.c.l.b16 %v1389
      %v1890 = vunpack.c.l.b16 %v1390
      %v1891 = vunpack.c.h.b16 %v1390
      %v1892 = vunpack.c.l.b16 %v1391
      %v1893 = vunpack.c.h.b16 %v1391
      %v1894 = vunpack.c.l.b16 %v1392
      %v1895 = vunpack.c.h.b16 %v1392
      %v1896 = vunpack.c.l.b16 %v1393
      %v1897 = vunpack.c.h.b16 %v1393
      %v1898 = vunpack.c.l.b16 %v1394
      %v1899 = vunpack.c.l.b16 %v1395
      %v1900 = vunpack.c.h.b16 %v1395
      %v1901 = vunpack.c.l.b16 %v1396
      %v1902 = vunpack.c.h.b16 %v1396
      %v1903 = vunpack.c.l.b16 %v1397
      %v1904 = vunpack.c.h.b16 %v1397
      %v1905 = vunpack.c.l.b16 %v1398
      %v1906 = vunpack.c.h.b16 %v1398
      %v1907 = vunpack.c.l.b16 %v1399
      %v1908 = vunpack.c.l.b16 %v1400
      %v1909 = vunpack.c.h.b16 %v1400
      %v1910 = vunpack.c.l.b16 %v1401
      %v1911 = vunpack.c.h.b16 %v1401
      %v1912 = vunpack.c.l.b16 %v1402
      %v1913 = vunpack.c.h.b16 %v1402
      %v1914 = vunpack.c.l.b16 %v1403
      %v1915 = vunpack.c.h.b16 %v1403
      %v1916 = vunpack.c.l.b16 %v1404
      %v1917 = vunpack.c.l.b16 %v1405
      %v1918 = vunpack.c.h.b16 %v1405
      %v1919 = vunpack.c.l.b16 %v1406
      %v1920 = vunpack.c.h.b16 %v1406
      %v1921 = vunpack.c.l.b16 %v1407
      %v1922 = vunpack.c.h.b16 %v1407
      %v1923 = vunpack.c.l.b16 %v1408
      %v1924 = vunpack.c.h.b16 %v1408
      %v1925 = vunpack.c.l.b16 %v1409
      %v1926 = vunpack.c.l.b16 %v1410
      %v1927 = vunpack.c.h.b16 %v1410
      %v1928 = vunpack.c.l.b16 %v1411
      %v1929 = vunpack.c.h.b16 %v1411
      %v1930 = vunpack.c.l.b16 %v1412
      %v1931 = vunpack.c.h.b16 %v1412
      %v1932 = vunpack.c.l.b16 %v1413
      %v1933 = vunpack.c.h.b16 %v1413
      %v1934 = vunpack.c.l.b16 %v1414
      %v1935 = vunpack.c.l.b16 %v1415
      %v1936 = vunpack.c.h.b16 %v1415
      %v1937 = vunpack.c.l.b16 %v1416
      %v1938 = vunpack.c.h.b16 %v1416
      %v1939 = vunpack.c.l.b16 %v1417
      %v1940 = vunpack.c.h.b16 %v1417
      %v1941 = vunpack.c.l.b16 %v1418
      %v1942 = vunpack.c.h.b16 %v1418
      %v1943 = vunpack.c.l.b16 %v1419
      %v1944 = vunpack.c.l.b16 %v1420
      %v1945 = vunpack.c.h.b16 %v1420
      %v1946 = vunpack.c.l.b16 %v1421
      %v1947 = vunpack.c.h.b16 %v1421
      %v1948 = vunpack.c.l.b16 %v1422
      %v1949 = vunpack.c.h.b16 %v1422
      %v1950 = vunpack.c.l.b16 %v1423
      %v1951 = vunpack.c.h.b16 %v1423
      %v1952 = vunpack.c.l.b16 %v1424
      %v1953 = vunpack.c.l.b16 %v1425
      %v1954 = vunpack.c.h.b16 %v1425
      %v1955 = vunpack.c.l.b16 %v1426
      %v1956 = vunpack.c.h.b16 %v1426
      %v1957 = vunpack.c.l.b16 %v1427
      %v1958 = vunpack.c.h.b16 %v1427
      %v1959 = vunpack.c.l.b16 %v1428
      %v1960 = vunpack.c.h.b16 %v1428
      %v1961 = vunpack.c.l.b16 %v1429
      %v1962 = vunpack.c.l.b16 %v1430
      %v1963 = vunpack.c.h.b16 %v1430
      %v1964 = vunpack.c.l.b16 %v1431
      %v1965 = vunpack.c.h.b16 %v1431
      %v1966 = vunpack.c.l.b16 %v1432
      %v1967 = vunpack.c.h.b16 %v1432
      %v1968 = vunpack.c.l.b16 %v1433
      %v1969 = vunpack.c.h.b16 %v1433
      %v1970 = vunpack.c.l.b16 %v1434
      %v1971 = vunpack.c.l.b16 %v1435
      %v1972 = vunpack.c.h.b16 %v1435
      %v1973 = vunpack.c.l.b16 %v1436
      %v1974 = vunpack.c.h.b16 %v1436
      %v1975 = vunpack.c.l.b16 %v1437
      %v1976 = vunpack.c.h.b16 %v1437
      %v1977 = vunpack.c.l.b16 %v1438
      %v1978 = vunpack.c.h.b16 %v1438
      %v1979 = vunpack.c.l.b16 %v1439
      %v1980 = vunpack.c.l.b16 %v1440
      %v1981 = vunpack.c.h.b16 %v1440
      %v1982 = vunpack.c.l.b16 %v1441
      %v1983 = vunpack.c.h.b16 %v1441
      %v1984 = vunpack.c.l.b16 %v1442
      %v1985 = vunpack.c.h.b16 %v1442
      %v1986 = vunpack.c.l.b16 %v1443
      %v1987 = vunpack.c.h.b16 %v1443
      %v1988 = vunpack.c.l.b16 %v1444
      %v1989 = vunpack.c.l.b16 %v1445
      %v1990 = vunpack.c.h.b16 %v1445
      %v1991 = vunpack.c.l.b16 %v1446
      %v1992 = vunpack.c.h.b16 %v1446
      %v1993 = vunpack.c.l.b16 %v1447
      %v1994 = vunpack.c.h.b16 %v1447
      %v1995 = vunpack.c.l.b16 %v1448
      %v1996 = vunpack.c.h.b16 %v1448
      %v1997 = vunpack.c.l.b16 %v1449
      %v1998 = vunpack.c.l.b16 %v1450
      %v1999 = vunpack.c.h.b16 %v1450
      %v2000 = vunpack.c.l.b16 %v1451
      %v2001 = vunpack.c.h.b16 %v1451
      %v2002 = vunpack.c.l.b16 %v1452
      %v2003 = vunpack.c.h.b16 %v1452
      %v2004 = vunpack.c.l.b16 %v1453
      %v2005 = vunpack.c.h.b16 %v1453
      %v2006 = vunpack.c.l.b16 %v1454
      %v2007 = vunpack.c.l.b16 %v1455
      %v2008 = vunpack.c.h.b16 %v1455
      %v2009 = vunpack.c.l.b16 %v1456
      %v2010 = vunpack.c.h.b16 %v1456
      %v2011 = vunpack.c.l.b16 %v1457
      %v2012 = vunpack.c.h.b16 %v1457
      %v2013 = vunpack.c.l.b16 %v1458
      %v2014 = vunpack.c.h.b16 %v1458
      %v2015 = vunpack.c.l.b16 %v1459
      %v2016 = vunpack.c.l.b16 %v1460
      %v2017 = vunpack.c.h.b16 %v1460
      %v2018 = vunpack.c.l.b16 %v1461
      %v2019 = vunpack.c.h.b16 %v1461
      %v2020 = vunpack.c.l.b16 %v1462
      %v2021 = vunpack.c.h.b16 %v1462
      %v2022 = vunpack.c.l.b16 %v1463
      %v2023 = vunpack.c.h.b16 %v1463
      %v2024 = vunpack.c.l.b16 %v1464
      %v2025 = vunpack.c.l.b16 %v1465
      %v2026 = vunpack.c.h.b16 %v1465
      %v2027 = vunpack.c.l.b16 %v1466
      %v2028 = vunpack.c.h.b16 %v1466
      %v2029 = vunpack.c.l.b16 %v1467
      %v2030 = vunpack.c.h.b16 %v1467
      %v2031 = vunpack.c.l.b16 %v1468
      %v2032 = vunpack.c.h.b16 %v1468
      %v2033 = vunpack.c.l.b16 %v1469
      %v2034 = vunpack.c.l.b16 %v1470
      %v2035 = vunpack.c.h.b16 %v1470
      %v2036 = vunpack.c.l.b16 %v1471
      %v2037 = vunpack.c.h.b16 %v1471
      %v2038 = vunpack.c.l.b16 %v1472
      %v2039 = vunpack.c.h.b16 %v1472
      %v2040 = vunpack.c.l.b16 %v1473
      %v2041 = vunpack.c.h.b16 %v1473
      %v2042 = vunpack.c.l.b16 %v1474
      %v2043 = vunpack.c.l.b16 %v1475
      %v2044 = vunpack.c.h.b16 %v1475
      %v2045 = vunpack.c.l.b16 %v1476
      %v2046 = vunpack.c.h.b16 %v1476
      %v2047 = vunpack.c.l.b16 %v1477
      %v2048 = vunpack.c.h.b16 %v1477
      %v2049 = vunpack.c.l.b16 %v1478
      %v2050 = vunpack.c.h.b16 %v1478
      %v2051 = vunpack.c.l.b16 %v1479
      %v2052 = vunpack.c.l.b16 %v1480
      %v2053 = vunpack.c.h.b16 %v1480
      %v2054 = vunpack.c.l.b16 %v1481
      %v2055 = vunpack.c.h.b16 %v1481
      %v2056 = vunpack.c.l.b16 %v1482
      %v2057 = vunpack.c.h.b16 %v1482
      %v2058 = vunpack.c.l.b16 %v1483
      %v2059 = vunpack.c.h.b16 %v1483
      %v2060 = vunpack.c.l.b16 %v1484
      %v2061 = vunpack.c.l.b16 %v1485
      %v2062 = vunpack.c.h.b16 %v1485
      %v2063 = vunpack.c.l.b16 %v1486
      %v2064 = vunpack.c.h.b16 %v1486
      %v2065 = vunpack.c.l.b16 %v1487
      %v2066 = vunpack.c.h.b16 %v1487
      %v2067 = vunpack.c.l.b16 %v1488
      %v2068 = vunpack.c.h.b16 %v1488
      %v2069 = vunpack.c.l.b16 %v1489
      %v2070 = vunpack.c.l.b16 %v1490
      %v2071 = vunpack.c.h.b16 %v1490
      %v2072 = vunpack.c.l.b16 %v1491
      %v2073 = vunpack.c.h.b16 %v1491
      %v2074 = vunpack.c.l.b16 %v1492
      %v2075 = vunpack.c.h.b16 %v1492
      %v2076 = vunpack.c.l.b16 %v1493
      %v2077 = vunpack.c.h.b16 %v1493
      %v2078 = vunpack.c.l.b16 %v1494
      %v2079 = vunpack.c.l.b16 %v1495
      %v2080 = vunpack.c.h.b16 %v1495
      %v2081 = vunpack.c.l.b16 %v1496
      %v2082 = vunpack.c.h.b16 %v1496
      %v2083 = vunpack.c.l.b16 %v1497
      %v2084 = vunpack.c.h.b16 %v1497
      %v2085 = vunpack.c.l.b16 %v1498
      %v2086 = vunpack.c.h.b16 %v1498
      %v2087 = vunpack.c.l.b16 %v1499
      %v2088 = vunpack.c.l.b16 %v1500
      %v2089 = vunpack.c.h.b16 %v1500
      %v2090 = vunpack.c.l.b16 %v1501
      %v2091 = vunpack.c.h.b16 %v1501
      %v2092 = vunpack.c.l.b16 %v1502
      %v2093 = vunpack.c.h.b16 %v1502
      %v2094 = vunpack.c.l.b16 %v1503
      %v2095 = vunpack.c.h.b16 %v1503
      %v2096 = vunpack.c.l.b16 %v1504
      %v2097 = vpack.c.b16 %v1818, %v1809
      %v2098 = vpack.c.b16 %v1819, %v1810
      %v2099 = vpack.c.b16 %v1820, %v1811
      %v2100 = vpack.c.b16 %v1821, %v1812
      %v2101 = vpack.c.b16 %v1822, %v1813
      %v2102 = vpack.c.b16 %v1823, %v1814
      %v2103 = vpack.c.b16 %v1824, %v1815
      %v2104 = vpack.c.b16 %v1825, %v1816
      %v2105 = vpack.c.b16 %v1826, %v1817
      %v2106 = vpack.c.b16 %v1836, %v1827
      %v2107 = vpack.c.b16 %v1837, %v1828
      %v2108 = vpack.c.b16 %v1838, %v1829
      %v2109 = vpack.c.b16 %v1839, %v1830
      %v2110 = vpack.c.b16 %v1840, %v1831
      %v2111 = vpack.c.b16 %v1841, %v1832
      %v2112 = vpack.c.b16 %v1842, %v1833
      %v2113 = vpack.c.b16 %v1843, %v1834
      %v2114 = vpack.c.b16 %v1844, %v1835
      %v2115 = vpack.c.b16 %v1854, %v1845
      %v2116 = vpack.c.b16 %v1855, %v1846
      %v2117 = vpack.c.b16 %v1856, %v1847
      %v2118 = vpack.c.b16 %v1857, %v1848
      %v2119 = vpack.c.b16 %v1858, %v1849
      %v2120 = vpack.c.b16 %v1859, %v1850
      %v2121 = vpack.c.b16 %v1860, %v1851
      %v2122 = vpack.c.b16 %v1861, %v1852
      %v2123 = vpack.c.b16 %v1862, %v1853
      %v2124 = vpack.c.b16 %v1872, %v1863
      %v2125 = vpack.c.b16 %v1873, %v1864
      %v2126 = vpack.c.b16 %v1874, %v1865
      %v2127 = vpack.c.b16 %v1875, %v1866
      %v2128 = vpack.c.b16 %v1876, %v1867
      %v2129 = vpack.c.b16 %v1877, %v1868
      %v2130 = vpack.c.b16 %v1878, %v1869
      %v2131 = vpack.c.b16 %v1879, %v1870
      %v2132 = vpack.c.b16 %v1880, %v1871
      %v2133 = vpack.c.b16 %v1890, %v1881
      %v2134 = vpack.c.b16 %v1891, %v1882
      %v2135 = vpack.c.b16 %v1892, %v1883
      %v2136 = vpack.c.b16 %v1893, %v1884
      %v2137 = vpack.c.b16 %v1894, %v1885
      %v2138 = vpack.c.b16 %v1895, %v1886
      %v2139 = vpack.c.b16 %v1896, %v1887
      %v2140 = vpack.c.b16 %v1897, %v1888
      %v2141 = vpack.c.b16 %v1898, %v1889
      %v2142 = vpack.c.b16 %v1908, %v1899
      %v2143 = vpack.c.b16 %v1909, %v1900
      %v2144 = vpack.c.b16 %v1910, %v1901
      %v2145 = vpack.c.b16 %v1911, %v1902
      %v2146 = vpack.c.b16 %v1912, %v1903
      %v2147 = vpack.c.b16 %v1913, %v1904
      %v2148 = vpack.c.b16 %v1914, %v1905
      %v2149 = vpack.c.b16 %v1915, %v1906
      %v2150 = vpack.c.b16 %v1916, %v1907
      %v2151 = vpack.c.b16 %v1926, %v1917
      %v2152 = vpack.c.b16 %v1927, %v1918
      %v2153 = vpack.c.b16 %v1928, %v1919
      %v2154 = vpack.c.b16 %v1929, %v1920
      %v2155 = vpack.c.b16 %v1930, %v1921
      %v2156 = vpack.c.b16 %v1931, %v1922
      %v2157 = vpack.c.b16 %v1932, %v1923
      %v2158 = vpack.c.b16 %v1933, %v1924
      %v2159 = vpack.c.b16 %v1934, %v1925
      %v2160 = vpack.c.b16 %v1944, %v1935
      %v2161 = vpack.c.b16 %v1945, %v1936
      %v2162 = vpack.c.b16 %v1946, %v1937
      %v2163 = vpack.c.b16 %v1947, %v1938
      %v2164 = vpack.c.b16 %v1948, %v1939
      %v2165 = vpack.c.b16 %v1949, %v1940
      %v2166 = vpack.c.b16 %v1950, %v1941
      %v2167 = vpack.c.b16 %v1951, %v1942
      %v2168 = vpack.c.b16 %v1952, %v1943
      %v2169 = vpack.c.b16 %v1962, %v1953
      %v2170 = vpack.c.b16 %v1963, %v1954
      %v2171 = vpack.c.b16 %v1964, %v1955
      %v2172 = vpack.c.b16 %v1965, %v1956
      %v2173 = vpack.c.b16 %v1966, %v1957
      %v2174 = vpack.c.b16 %v1967, %v1958
      %v2175 = vpack.c.b16 %v1968, %v1959
      %v2176 = vpack.c.b16 %v1969, %v1960
      %v2177 = vpack.c.b16 %v1970, %v1961
      %v2178 = vpack.c.b16 %v1980, %v1971
      %v2179 = vpack.c.b16 %v1981, %v1972
      %v2180 = vpack.c.b16 %v1982, %v1973
      %v2181 = vpack.c.b16 %v1983, %v1974
      %v2182 = vpack.c.b16 %v1984, %v1975
      %v2183 = vpack.c.b16 %v1985, %v1976
      %v2184 = vpack.c.b16 %v1986, %v1977
      %v2185 = vpack.c.b16 %v1987, %v1978
      %v2186 = vpack.c.b16 %v1988, %v1979
      %v2187 = vpack.c.b16 %v1998, %v1989
      %v2188 = vpack.c.b16 %v1999, %v1990
      %v2189 = vpack.c.b16 %v2000, %v1991
      %v2190 = vpack.c.b16 %v2001, %v1992
      %v2191 = vpack.c.b16 %v2002, %v1993
      %v2192 = vpack.c.b16 %v2003, %v1994
      %v2193 = vpack.c.b16 %v2004, %v1995
      %v2194 = vpack.c.b16 %v2005, %v1996
      %v2195 = vpack.c.b16 %v2006, %v1997
      %v2196 = vpack.c.b16 %v2016, %v2007
      %v2197 = vpack.c.b16 %v2017, %v2008
      %v2198 = vpack.c.b16 %v2018, %v2009
      %v2199 = vpack.c.b16 %v2019, %v2010
      %v2200 = vpack.c.b16 %v2020, %v2011
      %v2201 = vpack.c.b16 %v2021, %v2012
      %v2202 = vpack.c.b16 %v2022, %v2013
      %v2203 = vpack.c.b16 %v2023, %v2014
      %v2204 = vpack.c.b16 %v2024, %v2015
      %v2205 = vpack.c.b16 %v2034, %v2025
      %v2206 = vpack.c.b16 %v2035, %v2026
      %v2207 = vpack.c.b16 %v2036, %v2027
      %v2208 = vpack.c.b16 %v2037, %v2028
      %v2209 = vpack.c.b16 %v2038, %v2029
      %v2210 = vpack.c.b16 %v2039, %v2030
      %v2211 = vpack.c.b16 %v2040, %v2031
      %v2212 = vpack.c.b16 %v2041, %v2032
      %v2213 = vpack.c.b16 %v2042, %v2033
      %v2214 = vpack.c.b16 %v2052, %v2043
      %v2215 = vpack.c.b16 %v2053, %v2044
      %v2216 = vpack.c.b16 %v2054, %v2045
      %v2217 = vpack.c.b16 %v2055, %v2046
      %v2218 = vpack.c.b16 %v2056, %v2047
      %v2219 = vpack.c.b16 %v2057, %v2048
      %v2220 = vpack.c.b16 %v2058, %v2049
      %v2221 = vpack.c.b16 %v2059, %v2050
      %v2222 = vpack.c.b16 %v2060, %v2051
      %v2223 = vpack.c.b16 %v2070, %v2061
      %v2224 = vpack.c.b16 %v2071, %v2062
      %v2225 = vpack.c.b16 %v2072, %v2063
      %v2226 = vpack.c.b16 %v2073, %v2064
      %v2227 = vpack.c.b16 %v2074, %v2065
      %v2228 = vpack.c.b16 %v2075, %v2066
      %v2229 = vpack.c.b16 %v2076, %v2067
      %v2230 = vpack.c.b16 %v2077, %v2068
      %v2231 = vpack.c.b16 %v2078, %v2069
      %v2232 = vpack.c.b16 %v2088, %v2079
      %v2233 = vpack.c.b16 %v2089, %v2080
      %v2234 = vpack.c.b16 %v2090, %v2081
      %v2235 = vpack.c.b16 %v2091, %v2082
      %v2236 = vpack.c.b16 %v2092, %v2083
      %v2237 = vpack.c.b16 %v2093, %v2084
      %v2238 = vpack.c.b16 %v2094, %v2085
      %v2239 = vpack.c.b16 %v2095, %v2086
      %v2240 = vpack.c.b16 %v2096, %v2087
      %v2529 = vunpack.c.l.b16 %v1505
      %v2530 = vunpack.c.l.b16 %v1506
      %v2531 = vunpack.c.l.b16 %v1507
      %v2532 = vunpack.c.l.b16 %v1508
      %v2533 = vunpack.c.l.b16 %v1509
      %v2534 = vunpack.c.l.b16 %v1510
      %v2535 = vunpack.c.l.b16 %v1511
      %v2536 = vunpack.c.l.b16 %v1512
      %v2537 = vunpack.c.l.b16 %v1513
      %v2538 = vunpack.c.l.b16 %v1514
      %v2539 = vunpack.c.l.b16 %v1515
      %v2540 = vunpack.c.l.b16 %v1516
      %v2541 = vunpack.c.l.b16 %v1517
      %v2542 = vunpack.c.l.b16 %v1518
      %v2543 = vunpack.c.l.b16 %v1519
      %v2544 = vunpack.c.l.b16 %v1520
      %v2545 = vunpack.c.l.b16 %v1521
      %v2546 = vunpack.c.l.b16 %v1522
      %v2547 = vunpack.c.l.b16 %v1523
      %v2548 = vunpack.c.l.b16 %v1524
      %v2549 = vunpack.c.l.b16 %v1525
      %v2550 = vunpack.c.l.b16 %v1526
      %v2551 = vunpack.c.l.b16 %v1527
      %v2552 = vunpack.c.l.b16 %v1528
      %v2553 = vunpack.c.l.b16 %v1529
      %v2554 = vunpack.c.l.b16 %v1530
      %v2555 = vunpack.c.l.b16 %v1531
      %v2556 = vunpack.c.l.b16 %v1532
      %v2557 = vunpack.c.l.b16 %v1533
      %v2558 = vunpack.c.l.b16 %v1534
      %v2559 = vunpack.c.l.b16 %v1535
      %v2560 = vunpack.c.l.b16 %v1536
      %v2561 = vunpack.c.l.b16 %v1537
      %v2562 = vunpack.c.l.b16 %v1538
      %v2563 = vunpack.c.l.b16 %v1539
      %v2564 = vunpack.c.l.b16 %v1540
      %v2565 = vunpack.c.l.b16 %v1541
      %v2566 = vunpack.c.l.b16 %v1542
      %v2567 = vunpack.c.l.b16 %v1543
      %v2568 = vunpack.c.l.b16 %v1544
      %v2569 = vunpack.c.l.b16 %v1545
      %v2570 = vunpack.c.l.b16 %v1546
      %v2571 = vunpack.c.l.b16 %v1547
      %v2572 = vunpack.c.l.b16 %v1548
      %v2573 = vunpack.c.l.b16 %v1549
      %v2574 = vunpack.c.l.b16 %v1550
      %v2575 = vunpack.c.l.b16 %v1551
      %v2576 = vunpack.c.l.b16 %v1552
      %v2577 = vunpack.c.l.b16 %v1553
      %v2578 = vunpack.c.l.b16 %v1554
      %v2579 = vunpack.c.l.b16 %v1555
      %v2580 = vunpack.c.l.b16 %v1556
      %v2581 = vunpack.c.l.b16 %v1557
      %v2582 = vunpack.c.l.b16 %v1558
      %v2583 = vunpack.c.l.b16 %v1559
      %v2584 = vunpack.c.l.b16 %v1560
      %v2585 = vunpack.c.l.b16 %v1561
      %v2586 = vunpack.c.l.b16 %v1562
      %v2587 = vunpack.c.l.b16 %v1563
      %v2588 = vunpack.c.l.b16 %v1564
      %v2589 = vunpack.c.l.b16 %v1565
      %v2590 = vunpack.c.l.b16 %v1566
      %v2591 = vunpack.c.l.b16 %v1567
      %v2592 = vunpack.c.l.b16 %v1568
      %v2593 = vunpack.c.l.b16 %v1569
      %v2594 = vunpack.c.l.b16 %v1570
      %v2595 = vunpack.c.l.b16 %v1571
      %v2596 = vunpack.c.l.b16 %v1572
      %v2597 = vunpack.c.l.b16 %v1573
      %v2598 = vunpack.c.l.b16 %v1574
      %v2599 = vunpack.c.l.b16 %v1575
      %v2600 = vunpack.c.l.b16 %v1576
      %v2601 = vunpack.c.l.b16 %v1577
      %v2602 = vunpack.c.l.b16 %v1578
      %v2603 = vunpack.c.l.b16 %v1579
      %v2604 = vunpack.c.l.b16 %v1580
      %v2605 = vunpack.c.l.b16 %v1581
      %v2606 = vunpack.c.l.b16 %v1582
      %v2607 = vunpack.c.l.b16 %v1583
      %v2608 = vunpack.c.l.b16 %v1584
      %v2609 = vunpack.c.l.b16 %v1585
      %v2610 = vunpack.c.l.b16 %v1586
      %v2611 = vunpack.c.l.b16 %v1587
      %v2612 = vunpack.c.l.b16 %v1588
      %v2613 = vunpack.c.l.b16 %v1589
      %v2614 = vunpack.c.l.b16 %v1590
      %v2615 = vunpack.c.l.b16 %v1591
      %v2616 = vunpack.c.l.b16 %v1592
      %v2617 = vunpack.c.l.b16 %v1593
      %v2618 = vunpack.c.l.b16 %v1594
      %v2619 = vunpack.c.l.b16 %v1595
      %v2620 = vunpack.c.l.b16 %v1596
      %v2621 = vunpack.c.l.b16 %v1597
      %v2622 = vunpack.c.l.b16 %v1598
      %v2623 = vunpack.c.l.b16 %v1599
      %v2624 = vunpack.c.l.b16 %v1600
      %v2625 = vunpack.c.l.b16 %v1601
      %v2626 = vunpack.c.l.b16 %v1602
      %v2627 = vunpack.c.l.b16 %v1603
      %v2628 = vunpack.c.l.b16 %v1604
      %v2629 = vunpack.c.l.b16 %v1605
      %v2630 = vunpack.c.l.b16 %v1606
      %v2631 = vunpack.c.l.b16 %v1607
      %v2632 = vunpack.c.l.b16 %v1608
      %v2633 = vunpack.c.l.b16 %v1609
      %v2634 = vunpack.c.l.b16 %v1610
      %v2635 = vunpack.c.l.b16 %v1611
      %v2636 = vunpack.c.l.b16 %v1612
      %v2637 = vunpack.c.l.b16 %v1613
      %v2638 = vunpack.c.l.b16 %v1614
      %v2639 = vunpack.c.l.b16 %v1615
      %v2640 = vunpack.c.l.b16 %v1616
      %v2641 = vunpack.c.l.b16 %v1617
      %v2642 = vunpack.c.l.b16 %v1618
      %v2643 = vunpack.c.l.b16 %v1619
      %v2644 = vunpack.c.l.b16 %v1620
      %v2645 = vunpack.c.l.b16 %v1621
      %v2646 = vunpack.c.l.b16 %v1622
      %v2647 = vunpack.c.l.b16 %v1623
      %v2648 = vunpack.c.l.b16 %v1624
      %v2649 = vunpack.c.l.b16 %v1625
      %v2650 = vunpack.c.l.b16 %v1626
      %v2651 = vunpack.c.l.b16 %v1627
      %v2652 = vunpack.c.l.b16 %v1628
      %v2653 = vunpack.c.l.b16 %v1629
      %v2654 = vunpack.c.l.b16 %v1630
      %v2655 = vunpack.c.l.b16 %v1631
      %v2656 = vunpack.c.l.b16 %v1632
      %v2657 = vunpack.c.l.b16 %v1633
      %v2658 = vunpack.c.l.b16 %v1634
      %v2659 = vunpack.c.l.b16 %v1635
      %v2660 = vunpack.c.l.b16 %v1636
      %v2661 = vunpack.c.l.b16 %v1637
      %v2662 = vunpack.c.l.b16 %v1638
      %v2663 = vunpack.c.l.b16 %v1639
      %v2664 = vunpack.c.l.b16 %v1640
      %v2665 = vunpack.c.l.b16 %v1641
      %v2666 = vunpack.c.l.b16 %v1642
      %v2667 = vunpack.c.l.b16 %v1643
      %v2668 = vunpack.c.l.b16 %v1644
      %v2669 = vunpack.c.l.b16 %v1645
      %v2670 = vunpack.c.l.b16 %v1646
      %v2671 = vunpack.c.l.b16 %v1647
      %v2672 = vunpack.c.l.b16 %v1648
      %v2673 = vpack.c.b16 %v2530, %v2529
      %v2674 = vpack.c.b16 %v2532, %v2531
      %v2675 = vpack.c.b16 %v2534, %v2533
      %v2676 = vpack.c.b16 %v2536, %v2535
      %v2677 = vpack.c.b16 %v2538, %v2537
      %v2678 = vpack.c.b16 %v2540, %v2539
      %v2679 = vpack.c.b16 %v2542, %v2541
      %v2680 = vpack.c.b16 %v2544, %v2543
      %v2681 = vpack.c.b16 %v2546, %v2545
      %v2682 = vpack.c.b16 %v2548, %v2547
      %v2683 = vpack.c.b16 %v2550, %v2549
      %v2684 = vpack.c.b16 %v2552, %v2551
      %v2685 = vpack.c.b16 %v2554, %v2553
      %v2686 = vpack.c.b16 %v2556, %v2555
      %v2687 = vpack.c.b16 %v2558, %v2557
      %v2688 = vpack.c.b16 %v2560, %v2559
      %v2689 = vpack.c.b16 %v2562, %v2561
      %v2690 = vpack.c.b16 %v2564, %v2563
      %v2691 = vpack.c.b16 %v2566, %v2565
      %v2692 = vpack.c.b16 %v2568, %v2567
      %v2693 = vpack.c.b16 %v2570, %v2569
      %v2694 = vpack.c.b16 %v2572, %v2571
      %v2695 = vpack.c.b16 %v2574, %v2573
      %v2696 = vpack.c.b16 %v2576, %v2575
      %v2697 = vpack.c.b16 %v2578, %v2577
      %v2698 = vpack.c.b16 %v2580, %v2579
      %v2699 = vpack.c.b16 %v2582, %v2581
      %v2700 = vpack.c.b16 %v2584, %v2583
      %v2701 = vpack.c.b16 %v2586, %v2585
      %v2702 = vpack.c.b16 %v2588, %v2587
      %v2703 = vpack.c.b16 %v2590, %v2589
      %v2704 = vpack.c.b16 %v2592, %v2591
      %v2705 = vpack.c.b16 %v2594, %v2593
      %v2706 = vpack.c.b16 %v2596, %v2595
      %v2707 = vpack.c.b16 %v2598, %v2597
      %v2708 = vpack.c.b16 %v2600, %v2599
      %v2709 = vpack.c.b16 %v2602, %v2601
      %v2710 = vpack.c.b16 %v2604, %v2603
      %v2711 = vpack.c.b16 %v2606, %v2605
      %v2712 = vpack.c.b16 %v2608, %v2607
      %v2713 = vpack.c.b16 %v2610, %v2609
      %v2714 = vpack.c.b16 %v2612, %v2611
      %v2715 = vpack.c.b16 %v2614, %v2613
      %v2716 = vpack.c.b16 %v2616, %v2615
      %v2717 = vpack.c.b16 %v2618, %v2617
      %v2718 = vpack.c.b16 %v2620, %v2619
      %v2719 = vpack.c.b16 %v2622, %v2621
      %v2720 = vpack.c.b16 %v2624, %v2623
      %v2721 = vpack.c.b16 %v2626, %v2625
      %v2722 = vpack.c.b16 %v2628, %v2627
      %v2723 = vpack.c.b16 %v2630, %v2629
      %v2724 = vpack.c.b16 %v2632, %v2631
      %v2725 = vpack.c.b16 %v2634, %v2633
      %v2726 = vpack.c.b16 %v2636, %v2635
      %v2727 = vpack.c.b16 %v2638, %v2637
      %v2728 = vpack.c.b16 %v2640, %v2639
      %v2729 = vpack.c.b16 %v2642, %v2641
      %v2730 = vpack.c.b16 %v2644, %v2643
      %v2731 = vpack.c.b16 %v2646, %v2645
      %v2732 = vpack.c.b16 %v2648, %v2647
      %v2733 = vpack.c.b16 %v2650, %v2649
      %v2734 = vpack.c.b16 %v2652, %v2651
      %v2735 = vpack.c.b16 %v2654, %v2653
      %v2736 = vpack.c.b16 %v2656, %v2655
      %v2737 = vpack.c.b16 %v2658, %v2657
      %v2738 = vpack.c.b16 %v2660, %v2659
      %v2739 = vpack.c.b16 %v2662, %v2661
      %v2740 = vpack.c.b16 %v2664, %v2663
      %v2741 = vpack.c.b16 %v2666, %v2665
      %v2742 = vpack.c.b16 %v2668, %v2667
      %v2743 = vpack.c.b16 %v2670, %v2669
      %v2744 = vpack.c.b16 %v2672, %v2671
      %2817 = vmatpush.bf16.msra.mxu0 %v2680
      %2818 = vmatpush.bf16.msra.mxu0 %v2679
      %2819 = vmatpush.bf16.msra.mxu0 %v2678
      %2820 = vmatpush.bf16.msra.mxu0 %v2677
      %2821 = vmatpush.bf16.msra.mxu0 %v2676
      %2822 = vmatpush.bf16.msra.mxu0 %v2675
      %2823 = vmatpush.bf16.msra.mxu0 %v2674
      %2824 = vmatpush.bf16.msra.mxu0 %v2673
      %2825 = vmatmul.bf16.gmra.mxu0 %v2097
      %v2826 = vpop.f32.mrf.mxu0
      %v2827 = vadd.f32 0.0, %v2826
      %v2828 = vpop.f32.mrf.mxu0
      %v2829 = vadd.f32 0.0, %v2828
      %2830 = vmatmul.bf16.gmra.mxu0 %v2106
      %v2831 = vpop.f32.mrf.mxu0
      %v2832 = vadd.f32 0.0, %v2831
      %v2833 = vpop.f32.mrf.mxu0
      %v2834 = vadd.f32 0.0, %v2833
      %2835 = vmatmul.bf16.gmra.mxu0 %v2115
      %v2836 = vpop.f32.mrf.mxu0
      %v2837 = vadd.f32 0.0, %v2836
      %v2838 = vpop.f32.mrf.mxu0
      %v2839 = vadd.f32 0.0, %v2838
      %2840 = vmatmul.bf16.gmra.mxu0 %v2124
      %v2841 = vpop.f32.mrf.mxu0
      %v2842 = vadd.f32 0.0, %v2841
      %v2843 = vpop.f32.mrf.mxu0
      %v2844 = vadd.f32 0.0, %v2843
      %2845 = vmatmul.bf16.gmra.mxu0 %v2133
      %v2846 = vpop.f32.mrf.mxu0
      %v2847 = vadd.f32 0.0, %v2846
      %v2848 = vpop.f32.mrf.mxu0
      %v2849 = vadd.f32 0.0, %v2848
      %2850 = vmatmul.bf16.gmra.mxu0 %v2142
      %v2851 = vpop.f32.mrf.mxu0
      %v2852 = vadd.f32 0.0, %v2851
      %v2853 = vpop.f32.mrf.mxu0
      %v2854 = vadd.f32 0.0, %v2853
      %2855 = vmatmul.bf16.gmra.mxu0 %v2151
      %v2856 = vpop.f32.mrf.mxu0
      %v2857 = vadd.f32 0.0, %v2856
      %v2858 = vpop.f32.mrf.mxu0
      %v2859 = vadd.f32 0.0, %v2858
      %2860 = vmatmul.bf16.gmra.mxu0 %v2160
      %v2861 = vpop.f32.mrf.mxu0
      %v2862 = vadd.f32 0.0, %v2861
      %v2863 = vpop.f32.mrf.mxu0
      %v2864 = vadd.f32 0.0, %v2863
      %2865 = vmatmul.bf16.gmra.mxu0 %v2169
      %v2866 = vpop.f32.mrf.mxu0
      %v2867 = vadd.f32 0.0, %v2866
      %v2868 = vpop.f32.mrf.mxu0
      %v2869 = vadd.f32 0.0, %v2868
      %2870 = vmatmul.bf16.gmra.mxu0 %v2178
      %v2871 = vpop.f32.mrf.mxu0
      %v2872 = vadd.f32 0.0, %v2871
      %v2873 = vpop.f32.mrf.mxu0
      %v2874 = vadd.f32 0.0, %v2873
      %2875 = vmatmul.bf16.gmra.mxu0 %v2187
      %v2876 = vpop.f32.mrf.mxu0
      %v2877 = vadd.f32 0.0, %v2876
      %v2878 = vpop.f32.mrf.mxu0
      %v2879 = vadd.f32 0.0, %v2878
      %2880 = vmatmul.bf16.gmra.mxu0 %v2196
      %v2881 = vpop.f32.mrf.mxu0
      %v2882 = vadd.f32 0.0, %v2881
      %v2883 = vpop.f32.mrf.mxu0
      %v2884 = vadd.f32 0.0, %v2883
      %2885 = vmatmul.bf16.gmra.mxu0 %v2205
      %v2886 = vpop.f32.mrf.mxu0
      %v2887 = vadd.f32 0.0, %v2886
      %v2888 = vpop.f32.mrf.mxu0
      %v2889 = vadd.f32 0.0, %v2888
      %2890 = vmatmul.bf16.gmra.mxu0 %v2214
      %v2891 = vpop.f32.mrf.mxu0
      %v2892 = vadd.f32 0.0, %v2891
      %v2893 = vpop.f32.mrf.mxu0
      %v2894 = vadd.f32 0.0, %v2893
      %2895 = vmatmul.bf16.gmra.mxu0 %v2223
      %v2896 = vpop.f32.mrf.mxu0
      %v2897 = vadd.f32 0.0, %v2896
      %v2898 = vpop.f32.mrf.mxu0
      %v2899 = vadd.f32 0.0, %v2898
      %2900 = vmatmul.bf16.gmra.mxu0 %v2232
      %v2901 = vpop.f32.mrf.mxu0
      %v2902 = vadd.f32 0.0, %v2901
      %v2903 = vpop.f32.mrf.mxu0
      %v2904 = vadd.f32 0.0, %v2903
      %2905 = vdwg.mxu0
      %2906 = vmatpush.bf16.msra.mxu0 %v2688
      %2907 = vmatpush.bf16.msra.mxu0 %v2687
      %2908 = vmatpush.bf16.msra.mxu0 %v2686
      %2909 = vmatpush.bf16.msra.mxu0 %v2685
      %2910 = vmatpush.bf16.msra.mxu0 %v2684
      %2911 = vmatpush.bf16.msra.mxu0 %v2683
      %2912 = vmatpush.bf16.msra.mxu0 %v2682
      %2913 = vmatpush.bf16.msra.mxu0 %v2681
      %2914 = vmatmul.bf16.gmra.mxu0 %v2098
      %v2915 = vpop.f32.mrf.mxu0
      %v2916 = vadd.f32 %v2827, %v2915
      %v2917 = vpop.f32.mrf.mxu0
      %v2918 = vadd.f32 %v2829, %v2917
      %2919 = vmatmul.bf16.gmra.mxu0 %v2107
      %v2920 = vpop.f32.mrf.mxu0
      %v2921 = vadd.f32 %v2832, %v2920
      %v2922 = vpop.f32.mrf.mxu0
      %v2923 = vadd.f32 %v2834, %v2922
      %2924 = vmatmul.bf16.gmra.mxu0 %v2116
      %v2925 = vpop.f32.mrf.mxu0
      %v2926 = vadd.f32 %v2837, %v2925
      %v2927 = vpop.f32.mrf.mxu0
      %v2928 = vadd.f32 %v2839, %v2927
      %2929 = vmatmul.bf16.gmra.mxu0 %v2125
      %v2930 = vpop.f32.mrf.mxu0
      %v2931 = vadd.f32 %v2842, %v2930
      %v2932 = vpop.f32.mrf.mxu0
      %v2933 = vadd.f32 %v2844, %v2932
      %2934 = vmatmul.bf16.gmra.mxu0 %v2134
      %v2935 = vpop.f32.mrf.mxu0
      %v2936 = vadd.f32 %v2847, %v2935
      %v2937 = vpop.f32.mrf.mxu0
      %v2938 = vadd.f32 %v2849, %v2937
      %2939 = vmatmul.bf16.gmra.mxu0 %v2143
      %v2940 = vpop.f32.mrf.mxu0
      %v2941 = vadd.f32 %v2852, %v2940
      %v2942 = vpop.f32.mrf.mxu0
      %v2943 = vadd.f32 %v2854, %v2942
      %2944 = vmatmul.bf16.gmra.mxu0 %v2152
      %v2945 = vpop.f32.mrf.mxu0
      %v2946 = vadd.f32 %v2857, %v2945
      %v2947 = vpop.f32.mrf.mxu0
      %v2948 = vadd.f32 %v2859, %v2947
      %2949 = vmatmul.bf16.gmra.mxu0 %v2161
      %v2950 = vpop.f32.mrf.mxu0
      %v2951 = vadd.f32 %v2862, %v2950
      %v2952 = vpop.f32.mrf.mxu0
      %v2953 = vadd.f32 %v2864, %v2952
      %2954 = vmatmul.bf16.gmra.mxu0 %v2170
      %v2955 = vpop.f32.mrf.mxu0
      %v2956 = vadd.f32 %v2867, %v2955
      %v2957 = vpop.f32.mrf.mxu0
      %v2958 = vadd.f32 %v2869, %v2957
      %2959 = vmatmul.bf16.gmra.mxu0 %v2179
      %v2960 = vpop.f32.mrf.mxu0
      %v2961 = vadd.f32 %v2872, %v2960
      %v2962 = vpop.f32.mrf.mxu0
      %v2963 = vadd.f32 %v2874, %v2962
      %2964 = vmatmul.bf16.gmra.mxu0 %v2188
      %v2965 = vpop.f32.mrf.mxu0
      %v2966 = vadd.f32 %v2877, %v2965
      %v2967 = vpop.f32.mrf.mxu0
      %v2968 = vadd.f32 %v2879, %v2967
      %2969 = vmatmul.bf16.gmra.mxu0 %v2197
      %v2970 = vpop.f32.mrf.mxu0
      %v2971 = vadd.f32 %v2882, %v2970
      %v2972 = vpop.f32.mrf.mxu0
      %v2973 = vadd.f32 %v2884, %v2972
      %2974 = vmatmul.bf16.gmra.mxu0 %v2206
      %v2975 = vpop.f32.mrf.mxu0
      %v2976 = vadd.f32 %v2887, %v2975
      %v2977 = vpop.f32.mrf.mxu0
      %v2978 = vadd.f32 %v2889, %v2977
      %2979 = vmatmul.bf16.gmra.mxu0 %v2215
      %v2980 = vpop.f32.mrf.mxu0
      %v2981 = vadd.f32 %v2892, %v2980
      %v2982 = vpop.f32.mrf.mxu0
      %v2983 = vadd.f32 %v2894, %v2982
      %2984 = vmatmul.bf16.gmra.mxu0 %v2224
      %v2985 = vpop.f32.mrf.mxu0
      %v2986 = vadd.f32 %v2897, %v2985
      %v2987 = vpop.f32.mrf.mxu0
      %v2988 = vadd.f32 %v2899, %v2987
      %2989 = vmatmul.bf16.gmra.mxu0 %v2233
      %v2990 = vpop.f32.mrf.mxu0
      %v2991 = vadd.f32 %v2902, %v2990
      %v2992 = vpop.f32.mrf.mxu0
      %v2993 = vadd.f32 %v2904, %v2992
      %2994 = vdwg.mxu0
      %2995 = vmatpush.bf16.msra.mxu0 %v2696
      %2996 = vmatpush.bf16.msra.mxu0 %v2695
      %2997 = vmatpush.bf16.msra.mxu0 %v2694
      %2998 = vmatpush.bf16.msra.mxu0 %v2693
      %2999 = vmatpush.bf16.msra.mxu0 %v2692
      %3000 = vmatpush.bf16.msra.mxu0 %v2691
      %3001 = vmatpush.bf16.msra.mxu0 %v2690
      %3002 = vmatpush.bf16.msra.mxu0 %v2689
      %3003 = vmatmul.bf16.gmra.mxu0 %v2099
      %v3004 = vpop.f32.mrf.mxu0
      %v3005 = vadd.f32 %v2916, %v3004
      %v3006 = vpop.f32.mrf.mxu0
      %v3007 = vadd.f32 %v2918, %v3006
      %3008 = vmatmul.bf16.gmra.mxu0 %v2108
      %v3009 = vpop.f32.mrf.mxu0
      %v3010 = vadd.f32 %v2921, %v3009
      %v3011 = vpop.f32.mrf.mxu0
      %v3012 = vadd.f32 %v2923, %v3011
      %3013 = vmatmul.bf16.gmra.mxu0 %v2117
      %v3014 = vpop.f32.mrf.mxu0
      %v3015 = vadd.f32 %v2926, %v3014
      %v3016 = vpop.f32.mrf.mxu0
      %v3017 = vadd.f32 %v2928, %v3016
      %3018 = vmatmul.bf16.gmra.mxu0 %v2126
      %v3019 = vpop.f32.mrf.mxu0
      %v3020 = vadd.f32 %v2931, %v3019
      %v3021 = vpop.f32.mrf.mxu0
      %v3022 = vadd.f32 %v2933, %v3021
      %3023 = vmatmul.bf16.gmra.mxu0 %v2135
      %v3024 = vpop.f32.mrf.mxu0
      %v3025 = vadd.f32 %v2936, %v3024
      %v3026 = vpop.f32.mrf.mxu0
      %v3027 = vadd.f32 %v2938, %v3026
      %3028 = vmatmul.bf16.gmra.mxu0 %v2144
      %v3029 = vpop.f32.mrf.mxu0
      %v3030 = vadd.f32 %v2941, %v3029
      %v3031 = vpop.f32.mrf.mxu0
      %v3032 = vadd.f32 %v2943, %v3031
      %3033 = vmatmul.bf16.gmra.mxu0 %v2153
      %v3034 = vpop.f32.mrf.mxu0
      %v3035 = vadd.f32 %v2946, %v3034
      %v3036 = vpop.f32.mrf.mxu0
      %v3037 = vadd.f32 %v2948, %v3036
      %3038 = vmatmul.bf16.gmra.mxu0 %v2162
      %v3039 = vpop.f32.mrf.mxu0
      %v3040 = vadd.f32 %v2951, %v3039
      %v3041 = vpop.f32.mrf.mxu0
      %v3042 = vadd.f32 %v2953, %v3041
      %3043 = vmatmul.bf16.gmra.mxu0 %v2171
      %v3044 = vpop.f32.mrf.mxu0
      %v3045 = vadd.f32 %v2956, %v3044
      %v3046 = vpop.f32.mrf.mxu0
      %v3047 = vadd.f32 %v2958, %v3046
      %3048 = vmatmul.bf16.gmra.mxu0 %v2180
      %v3049 = vpop.f32.mrf.mxu0
      %v3050 = vadd.f32 %v2961, %v3049
      %v3051 = vpop.f32.mrf.mxu0
      %v3052 = vadd.f32 %v2963, %v3051
      %3053 = vmatmul.bf16.gmra.mxu0 %v2189
      %v3054 = vpop.f32.mrf.mxu0
      %v3055 = vadd.f32 %v2966, %v3054
      %v3056 = vpop.f32.mrf.mxu0
      %v3057 = vadd.f32 %v2968, %v3056
      %3058 = vmatmul.bf16.gmra.mxu0 %v2198
      %v3059 = vpop.f32.mrf.mxu0
      %v3060 = vadd.f32 %v2971, %v3059
      %v3061 = vpop.f32.mrf.mxu0
      %v3062 = vadd.f32 %v2973, %v3061
      %3063 = vmatmul.bf16.gmra.mxu0 %v2207
      %v3064 = vpop.f32.mrf.mxu0
      %v3065 = vadd.f32 %v2976, %v3064
      %v3066 = vpop.f32.mrf.mxu0
      %v3067 = vadd.f32 %v2978, %v3066
      %3068 = vmatmul.bf16.gmra.mxu0 %v2216
      %v3069 = vpop.f32.mrf.mxu0
      %v3070 = vadd.f32 %v2981, %v3069
      %v3071 = vpop.f32.mrf.mxu0
      %v3072 = vadd.f32 %v2983, %v3071
      %3073 = vmatmul.bf16.gmra.mxu0 %v2225
      %v3074 = vpop.f32.mrf.mxu0
      %v3075 = vadd.f32 %v2986, %v3074
      %v3076 = vpop.f32.mrf.mxu0
      %v3077 = vadd.f32 %v2988, %v3076
      %3078 = vmatmul.bf16.gmra.mxu0 %v2234
      %v3079 = vpop.f32.mrf.mxu0
      %v3080 = vadd.f32 %v2991, %v3079
      %v3081 = vpop.f32.mrf.mxu0
      %v3082 = vadd.f32 %v2993, %v3081
      %3083 = vdwg.mxu0
      %3084 = vmatpush.bf16.msra.mxu0 %v2704
      %3085 = vmatpush.bf16.msra.mxu0 %v2703
      %3086 = vmatpush.bf16.msra.mxu0 %v2702
      %3087 = vmatpush.bf16.msra.mxu0 %v2701
      %3088 = vmatpush.bf16.msra.mxu0 %v2700
      %3089 = vmatpush.bf16.msra.mxu0 %v2699
      %3090 = vmatpush.bf16.msra.mxu0 %v2698
      %3091 = vmatpush.bf16.msra.mxu0 %v2697
      %3092 = vmatmul.bf16.gmra.mxu0 %v2100
      %v3093 = vpop.f32.mrf.mxu0
      %v3094 = vadd.f32 %v3005, %v3093
      %v3095 = vpop.f32.mrf.mxu0
      %v3096 = vadd.f32 %v3007, %v3095
      %3097 = vmatmul.bf16.gmra.mxu0 %v2109
      %v3098 = vpop.f32.mrf.mxu0
      %v3099 = vadd.f32 %v3010, %v3098
      %v3100 = vpop.f32.mrf.mxu0
      %v3101 = vadd.f32 %v3012, %v3100
      %3102 = vmatmul.bf16.gmra.mxu0 %v2118
      %v3103 = vpop.f32.mrf.mxu0
      %v3104 = vadd.f32 %v3015, %v3103
      %v3105 = vpop.f32.mrf.mxu0
      %v3106 = vadd.f32 %v3017, %v3105
      %3107 = vmatmul.bf16.gmra.mxu0 %v2127
      %v3108 = vpop.f32.mrf.mxu0
      %v3109 = vadd.f32 %v3020, %v3108
      %v3110 = vpop.f32.mrf.mxu0
      %v3111 = vadd.f32 %v3022, %v3110
      %3112 = vmatmul.bf16.gmra.mxu0 %v2136
      %v3113 = vpop.f32.mrf.mxu0
      %v3114 = vadd.f32 %v3025, %v3113
      %v3115 = vpop.f32.mrf.mxu0
      %v3116 = vadd.f32 %v3027, %v3115
      %3117 = vmatmul.bf16.gmra.mxu0 %v2145
      %v3118 = vpop.f32.mrf.mxu0
      %v3119 = vadd.f32 %v3030, %v3118
      %v3120 = vpop.f32.mrf.mxu0
      %v3121 = vadd.f32 %v3032, %v3120
      %3122 = vmatmul.bf16.gmra.mxu0 %v2154
      %v3123 = vpop.f32.mrf.mxu0
      %v3124 = vadd.f32 %v3035, %v3123
      %v3125 = vpop.f32.mrf.mxu0
      %v3126 = vadd.f32 %v3037, %v3125
      %3127 = vmatmul.bf16.gmra.mxu0 %v2163
      %v3128 = vpop.f32.mrf.mxu0
      %v3129 = vadd.f32 %v3040, %v3128
      %v3130 = vpop.f32.mrf.mxu0
      %v3131 = vadd.f32 %v3042, %v3130
      %3132 = vmatmul.bf16.gmra.mxu0 %v2172
      %v3133 = vpop.f32.mrf.mxu0
      %v3134 = vadd.f32 %v3045, %v3133
      %v3135 = vpop.f32.mrf.mxu0
      %v3136 = vadd.f32 %v3047, %v3135
      %3137 = vmatmul.bf16.gmra.mxu0 %v2181
      %v3138 = vpop.f32.mrf.mxu0
      %v3139 = vadd.f32 %v3050, %v3138
      %v3140 = vpop.f32.mrf.mxu0
      %v3141 = vadd.f32 %v3052, %v3140
      %3142 = vmatmul.bf16.gmra.mxu0 %v2190
      %v3143 = vpop.f32.mrf.mxu0
      %v3144 = vadd.f32 %v3055, %v3143
      %v3145 = vpop.f32.mrf.mxu0
      %v3146 = vadd.f32 %v3057, %v3145
      %3147 = vmatmul.bf16.gmra.mxu0 %v2199
      %v3148 = vpop.f32.mrf.mxu0
      %v3149 = vadd.f32 %v3060, %v3148
      %v3150 = vpop.f32.mrf.mxu0
      %v3151 = vadd.f32 %v3062, %v3150
      %3152 = vmatmul.bf16.gmra.mxu0 %v2208
      %v3153 = vpop.f32.mrf.mxu0
      %v3154 = vadd.f32 %v3065, %v3153
      %v3155 = vpop.f32.mrf.mxu0
      %v3156 = vadd.f32 %v3067, %v3155
      %3157 = vmatmul.bf16.gmra.mxu0 %v2217
      %v3158 = vpop.f32.mrf.mxu0
      %v3159 = vadd.f32 %v3070, %v3158
      %v3160 = vpop.f32.mrf.mxu0
      %v3161 = vadd.f32 %v3072, %v3160
      %3162 = vmatmul.bf16.gmra.mxu0 %v2226
      %v3163 = vpop.f32.mrf.mxu0
      %v3164 = vadd.f32 %v3075, %v3163
      %v3165 = vpop.f32.mrf.mxu0
      %v3166 = vadd.f32 %v3077, %v3165
      %3167 = vmatmul.bf16.gmra.mxu0 %v2235
      %v3168 = vpop.f32.mrf.mxu0
      %v3169 = vadd.f32 %v3080, %v3168
      %v3170 = vpop.f32.mrf.mxu0
      %v3171 = vadd.f32 %v3082, %v3170
      %3172 = vdwg.mxu0
      %3173 = vmatpush.bf16.msra.mxu0 %v2712
      %3174 = vmatpush.bf16.msra.mxu0 %v2711
      %3175 = vmatpush.bf16.msra.mxu0 %v2710
      %3176 = vmatpush.bf16.msra.mxu0 %v2709
      %3177 = vmatpush.bf16.msra.mxu0 %v2708
      %3178 = vmatpush.bf16.msra.mxu0 %v2707
      %3179 = vmatpush.bf16.msra.mxu0 %v2706
      %3180 = vmatpush.bf16.msra.mxu0 %v2705
      %3181 = vmatmul.bf16.gmra.mxu0 %v2101
      %v3182 = vpop.f32.mrf.mxu0
      %v3183 = vadd.f32 %v3094, %v3182
      %v3184 = vpop.f32.mrf.mxu0
      %v3185 = vadd.f32 %v3096, %v3184
      %3186 = vmatmul.bf16.gmra.mxu0 %v2110
      %v3187 = vpop.f32.mrf.mxu0
      %v3188 = vadd.f32 %v3099, %v3187
      %v3189 = vpop.f32.mrf.mxu0
      %v3190 = vadd.f32 %v3101, %v3189
      %3191 = vmatmul.bf16.gmra.mxu0 %v2119
      %v3192 = vpop.f32.mrf.mxu0
      %v3193 = vadd.f32 %v3104, %v3192
      %v3194 = vpop.f32.mrf.mxu0
      %v3195 = vadd.f32 %v3106, %v3194
      %3196 = vmatmul.bf16.gmra.mxu0 %v2128
      %v3197 = vpop.f32.mrf.mxu0
      %v3198 = vadd.f32 %v3109, %v3197
      %v3199 = vpop.f32.mrf.mxu0
      %v3200 = vadd.f32 %v3111, %v3199
      %3201 = vmatmul.bf16.gmra.mxu0 %v2137
      %v3202 = vpop.f32.mrf.mxu0
      %v3203 = vadd.f32 %v3114, %v3202
      %v3204 = vpop.f32.mrf.mxu0
      %v3205 = vadd.f32 %v3116, %v3204
      %3206 = vmatmul.bf16.gmra.mxu0 %v2146
      %v3207 = vpop.f32.mrf.mxu0
      %v3208 = vadd.f32 %v3119, %v3207
      %v3209 = vpop.f32.mrf.mxu0
      %v3210 = vadd.f32 %v3121, %v3209
      %3211 = vmatmul.bf16.gmra.mxu0 %v2155
      %v3212 = vpop.f32.mrf.mxu0
      %v3213 = vadd.f32 %v3124, %v3212
      %v3214 = vpop.f32.mrf.mxu0
      %v3215 = vadd.f32 %v3126, %v3214
      %3216 = vmatmul.bf16.gmra.mxu0 %v2164
      %v3217 = vpop.f32.mrf.mxu0
      %v3218 = vadd.f32 %v3129, %v3217
      %v3219 = vpop.f32.mrf.mxu0
      %v3220 = vadd.f32 %v3131, %v3219
      %3221 = vmatmul.bf16.gmra.mxu0 %v2173
      %v3222 = vpop.f32.mrf.mxu0
      %v3223 = vadd.f32 %v3134, %v3222
      %v3224 = vpop.f32.mrf.mxu0
      %v3225 = vadd.f32 %v3136, %v3224
      %3226 = vmatmul.bf16.gmra.mxu0 %v2182
      %v3227 = vpop.f32.mrf.mxu0
      %v3228 = vadd.f32 %v3139, %v3227
      %v3229 = vpop.f32.mrf.mxu0
      %v3230 = vadd.f32 %v3141, %v3229
      %3231 = vmatmul.bf16.gmra.mxu0 %v2191
      %v3232 = vpop.f32.mrf.mxu0
      %v3233 = vadd.f32 %v3144, %v3232
      %v3234 = vpop.f32.mrf.mxu0
      %v3235 = vadd.f32 %v3146, %v3234
      %3236 = vmatmul.bf16.gmra.mxu0 %v2200
      %v3237 = vpop.f32.mrf.mxu0
      %v3238 = vadd.f32 %v3149, %v3237
      %v3239 = vpop.f32.mrf.mxu0
      %v3240 = vadd.f32 %v3151, %v3239
      %3241 = vmatmul.bf16.gmra.mxu0 %v2209
      %v3242 = vpop.f32.mrf.mxu0
      %v3243 = vadd.f32 %v3154, %v3242
      %v3244 = vpop.f32.mrf.mxu0
      %v3245 = vadd.f32 %v3156, %v3244
      %3246 = vmatmul.bf16.gmra.mxu0 %v2218
      %v3247 = vpop.f32.mrf.mxu0
      %v3248 = vadd.f32 %v3159, %v3247
      %v3249 = vpop.f32.mrf.mxu0
      %v3250 = vadd.f32 %v3161, %v3249
      %3251 = vmatmul.bf16.gmra.mxu0 %v2227
      %v3252 = vpop.f32.mrf.mxu0
      %v3253 = vadd.f32 %v3164, %v3252
      %v3254 = vpop.f32.mrf.mxu0
      %v3255 = vadd.f32 %v3166, %v3254
      %3256 = vmatmul.bf16.gmra.mxu0 %v2236
      %v3257 = vpop.f32.mrf.mxu0
      %v3258 = vadd.f32 %v3169, %v3257
      %v3259 = vpop.f32.mrf.mxu0
      %v3260 = vadd.f32 %v3171, %v3259
      %3261 = vdwg.mxu0
      %3262 = vmatpush.bf16.msra.mxu0 %v2720
      %3263 = vmatpush.bf16.msra.mxu0 %v2719
      %3264 = vmatpush.bf16.msra.mxu0 %v2718
      %3265 = vmatpush.bf16.msra.mxu0 %v2717
      %3266 = vmatpush.bf16.msra.mxu0 %v2716
      %3267 = vmatpush.bf16.msra.mxu0 %v2715
      %3268 = vmatpush.bf16.msra.mxu0 %v2714
      %3269 = vmatpush.bf16.msra.mxu0 %v2713
      %3270 = vmatmul.bf16.gmra.mxu0 %v2102
      %v3271 = vpop.f32.mrf.mxu0
      %v3272 = vadd.f32 %v3183, %v3271
      %v3273 = vpop.f32.mrf.mxu0
      %v3274 = vadd.f32 %v3185, %v3273
      %3275 = vmatmul.bf16.gmra.mxu0 %v2111
      %v3276 = vpop.f32.mrf.mxu0
      %v3277 = vadd.f32 %v3188, %v3276
      %v3278 = vpop.f32.mrf.mxu0
      %v3279 = vadd.f32 %v3190, %v3278
      %3280 = vmatmul.bf16.gmra.mxu0 %v2120
      %v3281 = vpop.f32.mrf.mxu0
      %v3282 = vadd.f32 %v3193, %v3281
      %v3283 = vpop.f32.mrf.mxu0
      %v3284 = vadd.f32 %v3195, %v3283
      %3285 = vmatmul.bf16.gmra.mxu0 %v2129
      %v3286 = vpop.f32.mrf.mxu0
      %v3287 = vadd.f32 %v3198, %v3286
      %v3288 = vpop.f32.mrf.mxu0
      %v3289 = vadd.f32 %v3200, %v3288
      %3290 = vmatmul.bf16.gmra.mxu0 %v2138
      %v3291 = vpop.f32.mrf.mxu0
      %v3292 = vadd.f32 %v3203, %v3291
      %v3293 = vpop.f32.mrf.mxu0
      %v3294 = vadd.f32 %v3205, %v3293
      %3295 = vmatmul.bf16.gmra.mxu0 %v2147
      %v3296 = vpop.f32.mrf.mxu0
      %v3297 = vadd.f32 %v3208, %v3296
      %v3298 = vpop.f32.mrf.mxu0
      %v3299 = vadd.f32 %v3210, %v3298
      %3300 = vmatmul.bf16.gmra.mxu0 %v2156
      %v3301 = vpop.f32.mrf.mxu0
      %v3302 = vadd.f32 %v3213, %v3301
      %v3303 = vpop.f32.mrf.mxu0
      %v3304 = vadd.f32 %v3215, %v3303
      %3305 = vmatmul.bf16.gmra.mxu0 %v2165
      %v3306 = vpop.f32.mrf.mxu0
      %v3307 = vadd.f32 %v3218, %v3306
      %v3308 = vpop.f32.mrf.mxu0
      %v3309 = vadd.f32 %v3220, %v3308
      %3310 = vmatmul.bf16.gmra.mxu0 %v2174
      %v3311 = vpop.f32.mrf.mxu0
      %v3312 = vadd.f32 %v3223, %v3311
      %v3313 = vpop.f32.mrf.mxu0
      %v3314 = vadd.f32 %v3225, %v3313
      %3315 = vmatmul.bf16.gmra.mxu0 %v2183
      %v3316 = vpop.f32.mrf.mxu0
      %v3317 = vadd.f32 %v3228, %v3316
      %v3318 = vpop.f32.mrf.mxu0
      %v3319 = vadd.f32 %v3230, %v3318
      %3320 = vmatmul.bf16.gmra.mxu0 %v2192
      %v3321 = vpop.f32.mrf.mxu0
      %v3322 = vadd.f32 %v3233, %v3321
      %v3323 = vpop.f32.mrf.mxu0
      %v3324 = vadd.f32 %v3235, %v3323
      %3325 = vmatmul.bf16.gmra.mxu0 %v2201
      %v3326 = vpop.f32.mrf.mxu0
      %v3327 = vadd.f32 %v3238, %v3326
      %v3328 = vpop.f32.mrf.mxu0
      %v3329 = vadd.f32 %v3240, %v3328
      %3330 = vmatmul.bf16.gmra.mxu0 %v2210
      %v3331 = vpop.f32.mrf.mxu0
      %v3332 = vadd.f32 %v3243, %v3331
      %v3333 = vpop.f32.mrf.mxu0
      %v3334 = vadd.f32 %v3245, %v3333
      %3335 = vmatmul.bf16.gmra.mxu0 %v2219
      %v3336 = vpop.f32.mrf.mxu0
      %v3337 = vadd.f32 %v3248, %v3336
      %v3338 = vpop.f32.mrf.mxu0
      %v3339 = vadd.f32 %v3250, %v3338
      %3340 = vmatmul.bf16.gmra.mxu0 %v2228
      %v3341 = vpop.f32.mrf.mxu0
      %v3342 = vadd.f32 %v3253, %v3341
      %v3343 = vpop.f32.mrf.mxu0
      %v3344 = vadd.f32 %v3255, %v3343
      %3345 = vmatmul.bf16.gmra.mxu0 %v2237
      %v3346 = vpop.f32.mrf.mxu0
      %v3347 = vadd.f32 %v3258, %v3346
      %v3348 = vpop.f32.mrf.mxu0
      %v3349 = vadd.f32 %v3260, %v3348
      %3350 = vdwg.mxu0
      %3351 = vmatpush.bf16.msra.mxu0 %v2728
      %3352 = vmatpush.bf16.msra.mxu0 %v2727
      %3353 = vmatpush.bf16.msra.mxu0 %v2726
      %3354 = vmatpush.bf16.msra.mxu0 %v2725
      %3355 = vmatpush.bf16.msra.mxu0 %v2724
      %3356 = vmatpush.bf16.msra.mxu0 %v2723
      %3357 = vmatpush.bf16.msra.mxu0 %v2722
      %3358 = vmatpush.bf16.msra.mxu0 %v2721
      %3359 = vmatmul.bf16.gmra.mxu0 %v2103
      %v3360 = vpop.f32.mrf.mxu0
      %v3361 = vadd.f32 %v3272, %v3360
      %v3362 = vpop.f32.mrf.mxu0
      %v3363 = vadd.f32 %v3274, %v3362
      %3364 = vmatmul.bf16.gmra.mxu0 %v2112
      %v3365 = vpop.f32.mrf.mxu0
      %v3366 = vadd.f32 %v3277, %v3365
      %v3367 = vpop.f32.mrf.mxu0
      %v3368 = vadd.f32 %v3279, %v3367
      %3369 = vmatmul.bf16.gmra.mxu0 %v2121
      %v3370 = vpop.f32.mrf.mxu0
      %v3371 = vadd.f32 %v3282, %v3370
      %v3372 = vpop.f32.mrf.mxu0
      %v3373 = vadd.f32 %v3284, %v3372
      %3374 = vmatmul.bf16.gmra.mxu0 %v2130
      %v3375 = vpop.f32.mrf.mxu0
      %v3376 = vadd.f32 %v3287, %v3375
      %v3377 = vpop.f32.mrf.mxu0
      %v3378 = vadd.f32 %v3289, %v3377
      %3379 = vmatmul.bf16.gmra.mxu0 %v2139
      %v3380 = vpop.f32.mrf.mxu0
      %v3381 = vadd.f32 %v3292, %v3380
      %v3382 = vpop.f32.mrf.mxu0
      %v3383 = vadd.f32 %v3294, %v3382
      %3384 = vmatmul.bf16.gmra.mxu0 %v2148
      %v3385 = vpop.f32.mrf.mxu0
      %v3386 = vadd.f32 %v3297, %v3385
      %v3387 = vpop.f32.mrf.mxu0
      %v3388 = vadd.f32 %v3299, %v3387
      %3389 = vmatmul.bf16.gmra.mxu0 %v2157
      %v3390 = vpop.f32.mrf.mxu0
      %v3391 = vadd.f32 %v3302, %v3390
      %v3392 = vpop.f32.mrf.mxu0
      %v3393 = vadd.f32 %v3304, %v3392
      %3394 = vmatmul.bf16.gmra.mxu0 %v2166
      %v3395 = vpop.f32.mrf.mxu0
      %v3396 = vadd.f32 %v3307, %v3395
      %v3397 = vpop.f32.mrf.mxu0
      %v3398 = vadd.f32 %v3309, %v3397
      %3399 = vmatmul.bf16.gmra.mxu0 %v2175
      %v3400 = vpop.f32.mrf.mxu0
      %v3401 = vadd.f32 %v3312, %v3400
      %v3402 = vpop.f32.mrf.mxu0
      %v3403 = vadd.f32 %v3314, %v3402
      %3404 = vmatmul.bf16.gmra.mxu0 %v2184
      %v3405 = vpop.f32.mrf.mxu0
      %v3406 = vadd.f32 %v3317, %v3405
      %v3407 = vpop.f32.mrf.mxu0
      %v3408 = vadd.f32 %v3319, %v3407
      %3409 = vmatmul.bf16.gmra.mxu0 %v2193
      %v3410 = vpop.f32.mrf.mxu0
      %v3411 = vadd.f32 %v3322, %v3410
      %v3412 = vpop.f32.mrf.mxu0
      %v3413 = vadd.f32 %v3324, %v3412
      %3414 = vmatmul.bf16.gmra.mxu0 %v2202
      %v3415 = vpop.f32.mrf.mxu0
      %v3416 = vadd.f32 %v3327, %v3415
      %v3417 = vpop.f32.mrf.mxu0
      %v3418 = vadd.f32 %v3329, %v3417
      %3419 = vmatmul.bf16.gmra.mxu0 %v2211
      %v3420 = vpop.f32.mrf.mxu0
      %v3421 = vadd.f32 %v3332, %v3420
      %v3422 = vpop.f32.mrf.mxu0
      %v3423 = vadd.f32 %v3334, %v3422
      %3424 = vmatmul.bf16.gmra.mxu0 %v2220
      %v3425 = vpop.f32.mrf.mxu0
      %v3426 = vadd.f32 %v3337, %v3425
      %v3427 = vpop.f32.mrf.mxu0
      %v3428 = vadd.f32 %v3339, %v3427
      %3429 = vmatmul.bf16.gmra.mxu0 %v2229
      %v3430 = vpop.f32.mrf.mxu0
      %v3431 = vadd.f32 %v3342, %v3430
      %v3432 = vpop.f32.mrf.mxu0
      %v3433 = vadd.f32 %v3344, %v3432
      %3434 = vmatmul.bf16.gmra.mxu0 %v2238
      %v3435 = vpop.f32.mrf.mxu0
      %v3436 = vadd.f32 %v3347, %v3435
      %v3437 = vpop.f32.mrf.mxu0
      %v3438 = vadd.f32 %v3349, %v3437
      %3439 = vdwg.mxu0
      %3440 = vmatpush.bf16.msra.mxu0 %v2736
      %3441 = vmatpush.bf16.msra.mxu0 %v2735
      %3442 = vmatpush.bf16.msra.mxu0 %v2734
      %3443 = vmatpush.bf16.msra.mxu0 %v2733
      %3444 = vmatpush.bf16.msra.mxu0 %v2732
      %3445 = vmatpush.bf16.msra.mxu0 %v2731
      %3446 = vmatpush.bf16.msra.mxu0 %v2730
      %3447 = vmatpush.bf16.msra.mxu0 %v2729
      %3448 = vmatmul.bf16.gmra.mxu0 %v2104
      %v3449 = vpop.f32.mrf.mxu0
      %v3450 = vadd.f32 %v3361, %v3449
      %v3451 = vpop.f32.mrf.mxu0
      %v3452 = vadd.f32 %v3363, %v3451
      %3453 = vmatmul.bf16.gmra.mxu0 %v2113
      %v3454 = vpop.f32.mrf.mxu0
      %v3455 = vadd.f32 %v3366, %v3454
      %v3456 = vpop.f32.mrf.mxu0
      %v3457 = vadd.f32 %v3368, %v3456
      %3458 = vmatmul.bf16.gmra.mxu0 %v2122
      %v3459 = vpop.f32.mrf.mxu0
      %v3460 = vadd.f32 %v3371, %v3459
      %v3461 = vpop.f32.mrf.mxu0
      %v3462 = vadd.f32 %v3373, %v3461
      %3463 = vmatmul.bf16.gmra.mxu0 %v2131
      %v3464 = vpop.f32.mrf.mxu0
      %v3465 = vadd.f32 %v3376, %v3464
      %v3466 = vpop.f32.mrf.mxu0
      %v3467 = vadd.f32 %v3378, %v3466
      %3468 = vmatmul.bf16.gmra.mxu0 %v2140
      %v3469 = vpop.f32.mrf.mxu0
      %v3470 = vadd.f32 %v3381, %v3469
      %v3471 = vpop.f32.mrf.mxu0
      %v3472 = vadd.f32 %v3383, %v3471
      %3473 = vmatmul.bf16.gmra.mxu0 %v2149
      %v3474 = vpop.f32.mrf.mxu0
      %v3475 = vadd.f32 %v3386, %v3474
      %v3476 = vpop.f32.mrf.mxu0
      %v3477 = vadd.f32 %v3388, %v3476
      %3478 = vmatmul.bf16.gmra.mxu0 %v2158
      %v3479 = vpop.f32.mrf.mxu0
      %v3480 = vadd.f32 %v3391, %v3479
      %v3481 = vpop.f32.mrf.mxu0
      %v3482 = vadd.f32 %v3393, %v3481
      %3483 = vmatmul.bf16.gmra.mxu0 %v2167
      %v3484 = vpop.f32.mrf.mxu0
      %v3485 = vadd.f32 %v3396, %v3484
      %v3486 = vpop.f32.mrf.mxu0
      %v3487 = vadd.f32 %v3398, %v3486
      %3488 = vmatmul.bf16.gmra.mxu0 %v2176
      %v3489 = vpop.f32.mrf.mxu0
      %v3490 = vadd.f32 %v3401, %v3489
      %v3491 = vpop.f32.mrf.mxu0
      %v3492 = vadd.f32 %v3403, %v3491
      %3493 = vmatmul.bf16.gmra.mxu0 %v2185
      %v3494 = vpop.f32.mrf.mxu0
      %v3495 = vadd.f32 %v3406, %v3494
      %v3496 = vpop.f32.mrf.mxu0
      %v3497 = vadd.f32 %v3408, %v3496
      %3498 = vmatmul.bf16.gmra.mxu0 %v2194
      %v3499 = vpop.f32.mrf.mxu0
      %v3500 = vadd.f32 %v3411, %v3499
      %v3501 = vpop.f32.mrf.mxu0
      %v3502 = vadd.f32 %v3413, %v3501
      %3503 = vmatmul.bf16.gmra.mxu0 %v2203
      %v3504 = vpop.f32.mrf.mxu0
      %v3505 = vadd.f32 %v3416, %v3504
      %v3506 = vpop.f32.mrf.mxu0
      %v3507 = vadd.f32 %v3418, %v3506
      %3508 = vmatmul.bf16.gmra.mxu0 %v2212
      %v3509 = vpop.f32.mrf.mxu0
      %v3510 = vadd.f32 %v3421, %v3509
      %v3511 = vpop.f32.mrf.mxu0
      %v3512 = vadd.f32 %v3423, %v3511
      %3513 = vmatmul.bf16.gmra.mxu0 %v2221
      %v3514 = vpop.f32.mrf.mxu0
      %v3515 = vadd.f32 %v3426, %v3514
      %v3516 = vpop.f32.mrf.mxu0
      %v3517 = vadd.f32 %v3428, %v3516
      %3518 = vmatmul.bf16.gmra.mxu0 %v2230
      %v3519 = vpop.f32.mrf.mxu0
      %v3520 = vadd.f32 %v3431, %v3519
      %v3521 = vpop.f32.mrf.mxu0
      %v3522 = vadd.f32 %v3433, %v3521
      %3523 = vmatmul.bf16.gmra.mxu0 %v2239
      %v3524 = vpop.f32.mrf.mxu0
      %v3525 = vadd.f32 %v3436, %v3524
      %v3526 = vpop.f32.mrf.mxu0
      %v3527 = vadd.f32 %v3438, %v3526
      %3528 = vdwg.mxu0
      %3529 = vmatpush.bf16.msra.mxu0 %v2744
      %3530 = vmatpush.bf16.msra.mxu0 %v2743
      %3531 = vmatpush.bf16.msra.mxu0 %v2742
      %3532 = vmatpush.bf16.msra.mxu0 %v2741
      %3533 = vmatpush.bf16.msra.mxu0 %v2740
      %3534 = vmatpush.bf16.msra.mxu0 %v2739
      %3535 = vmatpush.bf16.msra.mxu0 %v2738
      %3536 = vmatpush.bf16.msra.mxu0 %v2737
      %3537 = vmatmul.bf16.gmra.mxu0 %v2105
      %v3538 = vpop.f32.mrf.mxu0
      %v3539 = vadd.f32 %v3450, %v3538
      %v3540 = vpop.f32.mrf.mxu0
      %v3541 = vadd.f32 %v3452, %v3540
      %3542 = vmatmul.bf16.gmra.mxu0 %v2114
      %v3543 = vpop.f32.mrf.mxu0
      %v3544 = vadd.f32 %v3455, %v3543
      %v3545 = vpop.f32.mrf.mxu0
      %v3546 = vadd.f32 %v3457, %v3545
      %3547 = vmatmul.bf16.gmra.mxu0 %v2123
      %v3548 = vpop.f32.mrf.mxu0
      %v3549 = vadd.f32 %v3460, %v3548
      %v3550 = vpop.f32.mrf.mxu0
      %v3551 = vadd.f32 %v3462, %v3550
      %3552 = vmatmul.bf16.gmra.mxu0 %v2132
      %v3553 = vpop.f32.mrf.mxu0
      %v3554 = vadd.f32 %v3465, %v3553
      %v3555 = vpop.f32.mrf.mxu0
      %v3556 = vadd.f32 %v3467, %v3555
      %3557 = vmatmul.bf16.gmra.mxu0 %v2141
      %v3558 = vpop.f32.mrf.mxu0
      %v3559 = vadd.f32 %v3470, %v3558
      %v3560 = vpop.f32.mrf.mxu0
      %v3561 = vadd.f32 %v3472, %v3560
      %3562 = vmatmul.bf16.gmra.mxu0 %v2150
      %v3563 = vpop.f32.mrf.mxu0
      %v3564 = vadd.f32 %v3475, %v3563
      %v3565 = vpop.f32.mrf.mxu0
      %v3566 = vadd.f32 %v3477, %v3565
      %3567 = vmatmul.bf16.gmra.mxu0 %v2159
      %v3568 = vpop.f32.mrf.mxu0
      %v3569 = vadd.f32 %v3480, %v3568
      %v3570 = vpop.f32.mrf.mxu0
      %v3571 = vadd.f32 %v3482, %v3570
      %3572 = vmatmul.bf16.gmra.mxu0 %v2168
      %v3573 = vpop.f32.mrf.mxu0
      %v3574 = vadd.f32 %v3485, %v3573
      %v3575 = vpop.f32.mrf.mxu0
      %v3576 = vadd.f32 %v3487, %v3575
      %3577 = vmatmul.bf16.gmra.mxu0 %v2177
      %v3578 = vpop.f32.mrf.mxu0
      %v3579 = vadd.f32 %v3490, %v3578
      %v3580 = vpop.f32.mrf.mxu0
      %v3581 = vadd.f32 %v3492, %v3580
      %3582 = vmatmul.bf16.gmra.mxu0 %v2186
      %v3583 = vpop.f32.mrf.mxu0
      %v3584 = vadd.f32 %v3495, %v3583
      %v3585 = vpop.f32.mrf.mxu0
      %v3586 = vadd.f32 %v3497, %v3585
      %3587 = vmatmul.bf16.gmra.mxu0 %v2195
      %v3588 = vpop.f32.mrf.mxu0
      %v3589 = vadd.f32 %v3500, %v3588
      %v3590 = vpop.f32.mrf.mxu0
      %v3591 = vadd.f32 %v3502, %v3590
      %3592 = vmatmul.bf16.gmra.mxu0 %v2204
      %v3593 = vpop.f32.mrf.mxu0
      %v3594 = vadd.f32 %v3505, %v3593
      %v3595 = vpop.f32.mrf.mxu0
      %v3596 = vadd.f32 %v3507, %v3595
      %3597 = vmatmul.bf16.gmra.mxu0 %v2213
      %v3598 = vpop.f32.mrf.mxu0
      %v3599 = vadd.f32 %v3510, %v3598
      %v3600 = vpop.f32.mrf.mxu0
      %v3601 = vadd.f32 %v3512, %v3600
      %3602 = vmatmul.bf16.gmra.mxu0 %v2222
      %v3603 = vpop.f32.mrf.mxu0
      %v3604 = vadd.f32 %v3515, %v3603
      %v3605 = vpop.f32.mrf.mxu0
      %v3606 = vadd.f32 %v3517, %v3605
      %3607 = vmatmul.bf16.gmra.mxu0 %v2231
      %v3608 = vpop.f32.mrf.mxu0
      %v3609 = vadd.f32 %v3520, %v3608
      %v3610 = vpop.f32.mrf.mxu0
      %v3611 = vadd.f32 %v3522, %v3610
      %3612 = vmatmul.bf16.gmra.mxu0 %v2240
      %v3613 = vpop.f32.mrf.mxu0
      %v3614 = vadd.f32 %v3525, %v3613
      %v3615 = vpop.f32.mrf.mxu0
      %v3616 = vadd.f32 %v3527, %v3615
      %3617 = vdwg.mxu0
      %v3618 = vpack.c.bf16 %v3539, %v3539
      %v3619 = vpack.c.bf16 %v3541, %v3541
      %v3620 = vpack.c.bf16 %v3544, %v3544
      %v3621 = vpack.c.bf16 %v3546, %v3546
      %v3622 = vpack.c.bf16 %v3549, %v3549
      %v3623 = vpack.c.bf16 %v3551, %v3551
      %v3624 = vpack.c.bf16 %v3554, %v3554
      %v3625 = vpack.c.bf16 %v3556, %v3556
      %v3626 = vpack.c.bf16 %v3559, %v3559
      %v3627 = vpack.c.bf16 %v3561, %v3561
      %v3628 = vpack.c.bf16 %v3564, %v3564
      %v3629 = vpack.c.bf16 %v3566, %v3566
      %v3630 = vpack.c.bf16 %v3569, %v3569
      %v3631 = vpack.c.bf16 %v3571, %v3571
      %v3632 = vpack.c.bf16 %v3574, %v3574
      %v3633 = vpack.c.bf16 %v3576, %v3576
      %v3634 = vpack.c.bf16 %v3579, %v3579
      %v3635 = vpack.c.bf16 %v3581, %v3581
      %v3636 = vpack.c.bf16 %v3584, %v3584
      %v3637 = vpack.c.bf16 %v3586, %v3586
      %v3638 = vpack.c.bf16 %v3589, %v3589
      %v3639 = vpack.c.bf16 %v3591, %v3591
      %v3640 = vpack.c.bf16 %v3594, %v3594
      %v3641 = vpack.c.bf16 %v3596, %v3596
      %v3642 = vpack.c.bf16 %v3599, %v3599
      %v3643 = vpack.c.bf16 %v3601, %v3601
      %v3644 = vpack.c.bf16 %v3604, %v3604
      %v3645 = vpack.c.bf16 %v3606, %v3606
      %v3646 = vpack.c.bf16 %v3609, %v3609
      %v3647 = vpack.c.bf16 %v3611, %v3611
      %v3648 = vpack.c.bf16 %v3614, %v3614
      %v3649 = vpack.c.bf16 %v3616, %v3616
      %3650 = vst [vmem:[%s231] sm:$0xf] %v3618
      %3651 = vst [vmem:[%s231 + $0x4] sm:$0xf] %v3619
      %3652 = vst [vmem:[%s231 + $0x8] sm:$0xf] %v3620
      %3653 = vst [vmem:[%s231 + $0xc] sm:$0xf] %v3621
      %3654 = vst [vmem:[%s231 + $0x10] sm:$0xf] %v3622
      %3655 = vst [vmem:[%s231 + $0x14] sm:$0xf] %v3623
      %3656 = vst [vmem:[%s231 + $0x18] sm:$0xf] %v3624
      %3657 = vst [vmem:[%s231 + $0x1c] sm:$0xf] %v3625
      %3658 = vst [vmem:[%s231 + $0x20] sm:$0xf] %v3626
      %3659 = vst [vmem:[%s231 + $0x24] sm:$0xf] %v3627
      %3660 = vst [vmem:[%s231 + $0x28] sm:$0xf] %v3628
      %3661 = vst [vmem:[%s231 + $0x2c] sm:$0xf] %v3629
      %3662 = vst [vmem:[%s231 + $0x30] sm:$0xf] %v3630
      %3663 = vst [vmem:[%s231 + $0x34] sm:$0xf] %v3631
      %3664 = vst [vmem:[%s231 + $0x38] sm:$0xf] %v3632
      %3665 = vst [vmem:[%s231 + $0x3c] sm:$0xf] %v3633
      %3666 = vst [vmem:[%s231 + $0x40] sm:$0xf] %v3634
      %3667 = vst [vmem:[%s231 + $0x44] sm:$0xf] %v3635
      %3668 = vst [vmem:[%s231 + $0x48] sm:$0xf] %v3636
      %3669 = vst [vmem:[%s231 + $0x4c] sm:$0xf] %v3637
      %3670 = vst [vmem:[%s231 + $0x50] sm:$0xf] %v3638
      %3671 = vst [vmem:[%s231 + $0x54] sm:$0xf] %v3639
      %3672 = vst [vmem:[%s231 + $0x58] sm:$0xf] %v3640
      %3673 = vst [vmem:[%s231 + $0x5c] sm:$0xf] %v3641
      %3674 = vst [vmem:[%s231 + $0x60] sm:$0xf] %v3642
      %3675 = vst [vmem:[%s231 + $0x64] sm:$0xf] %v3643
      %3676 = vst [vmem:[%s231 + $0x68] sm:$0xf] %v3644
      %3677 = vst [vmem:[%s231 + $0x6c] sm:$0xf] %v3645
      %3678 = vst [vmem:[%s231 + $0x70] sm:$0xf] %v3646
      %3679 = vst [vmem:[%s231 + $0x74] sm:$0xf] %v3647
      %3680 = vst [vmem:[%s231 + $0x78] sm:$0xf] %v3648
      %3681 = vst [vmem:[%s231 + $0x7c] sm:$0xf] %v3649
      %v3682 = vadd.f32 %v3539, %v3541
      %v3683 = vadd.f32 %v3682, %v3544
      %v3684 = vadd.f32 %v3683, %v3546
      %v3685 = vadd.f32 %v3684, %v3549
      %v3686 = vadd.f32 %v3685, %v3551
      %v3687 = vadd.f32 %v3686, %v3554
      %v3688 = vadd.f32 %v3687, %v3556
      %v3689 = vadd.f32 %v3688, %v3559
      %v3690 = vadd.f32 %v3689, %v3561
      %v3691 = vadd.f32 %v3690, %v3564
      %v3692 = vadd.f32 %v3691, %v3566
      %v3693 = vadd.f32 %v3692, %v3569
      %v3694 = vadd.f32 %v3693, %v3571
      %v3695 = vadd.f32 %v3694, %v3574
      %v3696 = vadd.f32 %v3695, %v3576
      %v3697 = vadd.f32 %v3696, %v3579
      %v3698 = vadd.f32 %v3697, %v3581
      %v3699 = vadd.f32 %v3698, %v3584
      %v3700 = vadd.f32 %v3699, %v3586
      %v3701 = vadd.f32 %v3700, %v3589
      %v3702 = vadd.f32 %v3701, %v3591
      %v3703 = vadd.f32 %v3702, %v3594
      %v3704 = vadd.f32 %v3703, %v3596
      %v3705 = vadd.f32 %v3704, %v3599
      %v3706 = vadd.f32 %v3705, %v3601
      %v3707 = vadd.f32 %v3706, %v3604
      %v3708 = vadd.f32 %v3707, %v3606
      %v3709 = vadd.f32 %v3708, %v3609
      %v3710 = vadd.f32 %v3709, %v3611
      %v3711 = vadd.f32 %v3710, %v3614
      %v3712 = vadd.f32 %v3711, %v3616
      %v3713 = vrot.slane %v3712, 4
      %v3714 = vadd.f32 %v3712, %v3713
      %v3715 = vrot.slane %v3714, 2
      %v3716 = vadd.f32 %v3714, %v3715
      %v3717 = vrot.slane %v3716, 1
      %v3718 = vadd.f32 %v3716, %v3717
      %v3719 = vmul.f32 %v3539, %v3539
      %v3720 = vmul.f32 %v3541, %v3541
      %v3721 = vmul.f32 %v3544, %v3544
      %v3722 = vmul.f32 %v3546, %v3546
      %v3723 = vmul.f32 %v3549, %v3549
      %v3724 = vmul.f32 %v3551, %v3551
      %v3725 = vmul.f32 %v3554, %v3554
      %v3726 = vmul.f32 %v3556, %v3556
      %v3727 = vmul.f32 %v3559, %v3559
      %v3728 = vmul.f32 %v3561, %v3561
      %v3729 = vmul.f32 %v3564, %v3564
      %v3730 = vmul.f32 %v3566, %v3566
      %v3731 = vmul.f32 %v3569, %v3569
      %v3732 = vmul.f32 %v3571, %v3571
      %v3733 = vmul.f32 %v3574, %v3574
      %v3734 = vmul.f32 %v3576, %v3576
      %v3735 = vmul.f32 %v3579, %v3579
      %v3736 = vmul.f32 %v3581, %v3581
      %v3737 = vmul.f32 %v3584, %v3584
      %v3738 = vmul.f32 %v3586, %v3586
      %v3739 = vmul.f32 %v3589, %v3589
      %v3740 = vmul.f32 %v3591, %v3591
      %v3741 = vmul.f32 %v3594, %v3594
      %v3742 = vmul.f32 %v3596, %v3596
      %v3743 = vmul.f32 %v3599, %v3599
      %v3744 = vmul.f32 %v3601, %v3601
      %v3745 = vmul.f32 %v3604, %v3604
      %v3746 = vmul.f32 %v3606, %v3606
      %v3747 = vmul.f32 %v3609, %v3609
      %v3748 = vmul.f32 %v3611, %v3611
      %v3749 = vmul.f32 %v3614, %v3614
      %v3750 = vmul.f32 %v3616, %v3616
      %v3751 = vadd.f32 %v3719, %v3720
      %v3752 = vadd.f32 %v3751, %v3721
      %v3753 = vadd.f32 %v3752, %v3722
      %v3754 = vadd.f32 %v3753, %v3723
      %v3755 = vadd.f32 %v3754, %v3724
      %v3756 = vadd.f32 %v3755, %v3725
      %v3757 = vadd.f32 %v3756, %v3726
      %v3758 = vadd.f32 %v3757, %v3727
      %v3759 = vadd.f32 %v3758, %v3728
      %v3760 = vadd.f32 %v3759, %v3729
      %v3761 = vadd.f32 %v3760, %v3730
      %v3762 = vadd.f32 %v3761, %v3731
      %v3763 = vadd.f32 %v3762, %v3732
      %v3764 = vadd.f32 %v3763, %v3733
      %v3765 = vadd.f32 %v3764, %v3734
      %v3766 = vadd.f32 %v3765, %v3735
      %v3767 = vadd.f32 %v3766, %v3736
      %v3768 = vadd.f32 %v3767, %v3737
      %v3769 = vadd.f32 %v3768, %v3738
      %v3770 = vadd.f32 %v3769, %v3739
      %v3771 = vadd.f32 %v3770, %v3740
      %v3772 = vadd.f32 %v3771, %v3741
      %v3773 = vadd.f32 %v3772, %v3742
      %v3774 = vadd.f32 %v3773, %v3743
      %v3775 = vadd.f32 %v3774, %v3744
      %v3776 = vadd.f32 %v3775, %v3745
      %v3777 = vadd.f32 %v3776, %v3746
      %v3778 = vadd.f32 %v3777, %v3747
      %v3779 = vadd.f32 %v3778, %v3748
      %v3780 = vadd.f32 %v3779, %v3749
      %v3781 = vadd.f32 %v3780, %v3750
      %v3782 = vrot.slane %v3781, 4
      %v3783 = vadd.f32 %v3781, %v3782
      %v3784 = vrot.slane %v3783, 2
      %v3785 = vadd.f32 %v3783, %v3784
      %v3786 = vrot.slane %v3785, 1
      %v3787 = vadd.f32 %v3785, %v3786
      %vm3788 = vcmask 1040384
      %v3789 = vsel %vm3788, %v3718, %v3787
      %3790 = vst [vmem:[%s235] sm:$0x3] %v3789
      %p3791 = scmp.lt.s32.totalorder %s17, 1
      %s3792 = scalar_select %p3791, %s17, 1
      %s3793 = smul.addr %s3792, 32
      %s3794 = smul.addr %s3793, 4
      %s3795 = scalar_lea.vmem %s4, %s3794
      %p3796 = scmp.lt.s32.totalorder %s17, 1
      %s3797 = scalar_select %p3796, %s17, 1
      %s3798 = smul.addr %s3797, 2
      %s3799 = scalar_lea.vmem %s5, %s3798
      // Predicated region
      $region37: #{resnet_block50_forward.5} parent=35 // pred_check
        %p3800 = pneg %p124
      $region38: #{resnet_block50_forward.5} parent=35 // pred_check_branch
        %3802 = sbr.rel (%p3800) target = $region40
      $region39: #{resnet_block50_forward.5} parent=35 // pred_region
        _
      $region40: #{resnet_block50_forward.5} parent=35 // pred_fallthru
        _
      // Predicated region
      $region41: #{resnet_block50_forward.5} parent=35 // pred_check
        %p3803 = pneg %p150
      $region42: #{resnet_block50_forward.5} parent=35 // pred_check_branch
        %3805 = sbr.rel (%p3803) target = $region44
      $region43: #{resnet_block50_forward.5} parent=35 // pred_region
        _
      $region44: #{resnet_block50_forward.5} parent=35 // pred_fallthru
        _
    $region36: #{resnet_block50_forward.5} parent=5 // pred_fallthru
      _
    %p3806 = scmp.le.s32.totalorder 2, %s12
    // Predicated region
    $region45: #{resnet_block50_forward.5} parent=5 // pred_check
      %p3807 = pneg %p3806
    $region46: #{resnet_block50_forward.5} parent=5 // pred_check_branch
      %3809 = sbr.rel (%p3807) target = $region48
    $region47: #{resnet_block50_forward.5} parent=5 // pred_region
      %s3810 = ssub.s32 %s12, 2
      // Predicated region
      $region49: #{resnet_block50_forward.5} parent=47 // pred_check
        %p3811 = pneg %p130
      $region50: #{resnet_block50_forward.5} parent=47 // pred_check_branch
        %3813 = sbr.rel (%p3811) target = $region52
      $region51: #{resnet_block50_forward.5} parent=47 // pred_region
        %p3814 = scmp.lt.s32.totalorder %s18, 1
        %s3815 = scalar_select %p3814, %s18, 1
        %s3816 = smul.addr %s3815, 32
        %s3817 = smul.addr %s3816, 4
        %s3818 = scalar_lea.vmem %s4, %s3817
      $region52: #{resnet_block50_forward.5} parent=47 // pred_fallthru
        _
      // Predicated region
      $region53: #{resnet_block50_forward.5} parent=47 // pred_check
        %p3819 = pneg %p156
      $region54: #{resnet_block50_forward.5} parent=47 // pred_check_branch
        %3821 = sbr.rel (%p3819) target = $region56
      $region55: #{resnet_block50_forward.5} parent=47 // pred_region
        %p3822 = scmp.lt.s32.totalorder %s18, 1
        %s3823 = scalar_select %p3822, %s18, 1
        %s3824 = smul.addr %s3823, 2
        %s3825 = scalar_lea.vmem %s5, %s3824
      $region56: #{resnet_block50_forward.5} parent=47 // pred_fallthru
        _
    $region48: #{resnet_block50_forward.5} parent=5 // pred_fallthru
      _
  $region6: #{resnet_block50_forward.5} parent=0 // loop_footer
    %s16 = sadd.s32 1, %s12
  $region7: #{resnet_block50_forward.5} parent=0 // loop_footer_branch
    %11 = sbr.rel target = $region3
  $region8: #{resnet_block50_forward.5} parent=0 // loop_exit
    _

</llo_original>
